<compile_context>
chip_gen: v6e
topology: v6e:2x2x1
jax: 0.10.0
libtpu: 0.0.40
codegen_flags: <defaults>
</compile_context>

<pallas_src>
import math

import jax
import jax.numpy as jnp
from jax.experimental import pallas as pl
from jax.experimental.pallas import tpu as pltpu

INPUT_SIZE = 784
PADDED_INPUT = 896            # 7 * 128, zero-padded contraction dim for layer 1
HIDDEN_SIZES = [512, 1024, 256, 128]
BN_EPS = 1e-5
NEG_SLOPE = 0.01


def _round_up(x, m):
    return ((x + m - 1) // m) * m


def dnn_mnist28_kernel(
    x_ref,
    w1_ref, b1_ref,
    w2_ref, b2_ref,
    w3_ref, b3_ref,
    w4_ref, b4_ref,
    s4_ref,
    o_ref,
):
    """Fused 4x (Linear -> LeakyReLU) with BN scales pre-folded into weights.

    w*_ref : (in, out)  bfloat16 weight (BN scale of previous layer folded in)
    b*_ref : (1, out)   float32 bias
    s4_ref : (1, 128)   float32 BN eval scale of the last layer (not foldable)
    """

    def layer(h, w_ref, b_ref):
        z = jnp.dot(h.astype(jnp.bfloat16), w_ref[...],
                    preferred_element_type=jnp.float32)
        z = z + b_ref[...]
        return jnp.where(z >= 0, z, NEG_SLOPE * z)   # LeakyReLU(0.01)

    h = x_ref[...]
    h = layer(h, w1_ref, b1_ref)
    h = layer(h, w2_ref, b2_ref)
    h = layer(h, w3_ref, b3_ref)
    h = layer(h, w4_ref, b4_ref)
    o_ref[...] = (h * s4_ref[...]).astype(o_ref.dtype)


def init_params(key):
    """kaiming_normal_(mode='fan_in', nonlinearity='leaky_relu'), bias=0,
    BatchNorm at PyTorch defaults (gamma=1, beta=0, mean=0, var=1)."""
    sizes = [INPUT_SIZE] + HIDDEN_SIZES
    gain = math.sqrt(2.0)     # PyTorch leaky_relu gain with default a=0
    ws, bs = [], []
    for i in range(4):
        fan_in, fan_out = sizes[i], sizes[i + 1]
        key, sub = jax.random.split(key)
        std = gain / math.sqrt(fan_in)
        # PyTorch weight is (out, in); transpose to (in, out) for x @ W layout.
        w = (jax.random.normal(sub, (fan_out, fan_in), jnp.float32) * std).T
        b = jnp.zeros((1, fan_out), jnp.float32)
        ws.append(w)
        bs.append(b)
    # BN eval scale = gamma / sqrt(running_var + eps) = 1 / sqrt(1 + eps)
    scales = [jnp.full((1, h), 1.0 / math.sqrt(1.0 + BN_EPS), jnp.float32)
              for h in HIDDEN_SIZES]
    return ws, bs, scales


def prepare_kernel_params(ws, bs, scales):
    """Fold BN scales 1..3 into the next layer's weight rows, zero-pad the
    first-layer K dim to 896, and cast weights to bf16."""
    fw = list(ws)
    for i in range(3):
        # leaky(z) * s  feeds the next matmul  =>  scale rows of W_{i+1}
        fw[i + 1] = scales[i].reshape(-1, 1) * fw[i + 1]
    fw[0] = jnp.pad(fw[0], ((0, PADDED_INPUT - INPUT_SIZE), (0, 0)))
    kernel_ws = [w.astype(jnp.bfloat16) for w in fw]
    kernel_bs = [b.astype(jnp.float32) for b in bs]
    s4 = scales[3].astype(jnp.float32)
    return kernel_ws, kernel_bs, s4


def dnn_mnist28_forward(x, kernel_ws, kernel_bs, s4):
    batch = x.shape[0]
    out_dim = HIDDEN_SIZES[-1]

    # Zero-pad features 784 -> 896 and batch up to a multiple of the tile.
    xp = jnp.pad(x.astype(jnp.float32),
                 ((0, 0), (0, PADDED_INPUT - INPUT_SIZE)))
    tb = min(256, _round_up(batch, 8))
    padded_batch = _round_up(batch, tb)
    if padded_batch != batch:
        xp = jnp.pad(xp, ((0, padded_batch - batch), (0, 0)))
    grid = (padded_batch // tb,)

    const_map = lambda i: (0, 0)   # weights/biases stay VMEM-resident
    in_specs = [pl.BlockSpec((tb, PADDED_INPUT), lambda i: (i, 0))]
    args = [xp]
    for w, b in zip(kernel_ws, kernel_bs):
        in_specs.append(pl.BlockSpec(w.shape, const_map))
        in_specs.append(pl.BlockSpec(b.shape, const_map))
        args += [w, b]
    in_specs.append(pl.BlockSpec(s4.shape, const_map))
    args.append(s4)
    out_specs = pl.BlockSpec((tb, out_dim), lambda i: (i, 0))

    dims = [PADDED_INPUT] + HIDDEN_SIZES
    flops = 2 * padded_batch * sum(dims[i] * dims[i + 1] for i in range(4))
    bytes_accessed = (
        sum(int(w.size) * 2 for w in kernel_ws)
        + sum(int(b.size) * 4 for b in kernel_bs) + int(s4.size) * 4
        + int(xp.size) * 4 + padded_batch * out_dim * 4
    )

    out = pl.pallas_call(
        dnn_mnist28_kernel,
        out_shape=jax.ShapeDtypeStruct((padded_batch, out_dim), jnp.float32),
        grid=grid,
        in_specs=in_specs,
        out_specs=out_specs,
        compiler_params=pltpu.CompilerParams(
            dimension_semantics=("parallel",)),
        cost_estimate=pl.CostEstimate(
            flops=flops, transcendentals=0, bytes_accessed=bytes_accessed),
    )(*args)
    return out[:batch]


def reference_forward_module(x, ws, bs, scales):
    """Pure-JAX f32 reference of the module's eval-mode forward (unfused)."""
    h = x
    for i in range(4):
        z = h @ ws[i] + bs[i]
        z = jnp.where(z >= 0, z, NEG_SLOPE * z)
        h = z * scales[i]
    return h


def reference_forward_matched(x, kernel_ws, kernel_bs, s4):
    """Pure-JAX reference matching the kernel's bf16/folded numeric path."""
    h = jnp.pad(x.astype(jnp.float32), ((0, 0), (0, PADDED_INPUT - INPUT_SIZE)))
    for w, b in zip(kernel_ws, kernel_bs):
        z = jnp.dot(h.astype(jnp.bfloat16), w,
                    preferred_element_type=jnp.float32) + b
        h = jnp.where(z >= 0, z, NEG_SLOPE * z)
    return h * s4


if __name__ == "__main__":
    key = jax.random.PRNGKey(0)
    key_x, key_p = jax.random.split(key)

    batch = 8
    x = jax.random.normal(key_x, (batch, INPUT_SIZE), jnp.float32)

    ws, bs, scales = init_params(key_p)
    kernel_ws, kernel_bs, s4 = prepare_kernel_params(ws, bs, scales)

    out = dnn_mnist28_forward(x, kernel_ws, kernel_bs, s4)
    out = jax.block_until_ready(out)
    assert out.shape == (batch, HIDDEN_SIZES[-1]), out.shape

    # Tight check against a reference that follows the kernel's exact numeric
    # path (bf16 weights/activations at the MXU, folded BN scales).
    ref_matched = reference_forward_matched(x, kernel_ws, kernel_bs, s4)
    assert jnp.allclose(out, ref_matched, atol=2e-3, rtol=2e-3), \
        "mismatch vs bf16-matched reference"

    # Loose sanity check against the full-precision module semantics
    # (difference is the intentional bf16 weight/activation quantization).
    ref_f32 = reference_forward_module(x, ws, bs, scales)
    assert jnp.allclose(out, ref_f32, atol=2e-1, rtol=1e-1), \
        "mismatch vs f32 module reference"

    print("KERNEL_OK")
</pallas_src>

<mosaic_0001>
module attributes {stable_mosaic.version = 11 : i64} {
  func.func @dnn_mnist28_kernel(%arg0: i32, %arg1: memref<8x896xf32, #tpu.memory_space<vmem>>, %arg2: memref<896x512xbf16, #tpu.memory_space<vmem>>, %arg3: memref<1x512xf32, #tpu.memory_space<vmem>>, %arg4: memref<512x1024xbf16, #tpu.memory_space<vmem>>, %arg5: memref<1x1024xf32, #tpu.memory_space<vmem>>, %arg6: memref<1024x256xbf16, #tpu.memory_space<vmem>>, %arg7: memref<1x256xf32, #tpu.memory_space<vmem>>, %arg8: memref<256x128xbf16, #tpu.memory_space<vmem>>, %arg9: memref<1x128xf32, #tpu.memory_space<vmem>>, %arg10: memref<1x128xf32, #tpu.memory_space<vmem>>, %arg11: memref<8x128xf32, #tpu.memory_space<vmem>>) attributes {dimension_semantics = [#tpu.dimension_semantics<parallel>], iteration_bounds = array<i64: 1>, scalar_prefetch = 0 : i64, scratch_operands = 0 : i64, tpu.core_type = #tpu.core_type<tc>, window_params = [{transform_indices = @transform_0, window_bounds = array<i64: 8, 896>}, {pipeline_mode = #tpu.pipeline_mode<synchronous>, transform_indices = @transform_1, window_bounds = array<i64: 896, 512>}, {pipeline_mode = #tpu.pipeline_mode<synchronous>, transform_indices = @transform_2, window_bounds = array<i64: 1, 512>}, {pipeline_mode = #tpu.pipeline_mode<synchronous>, transform_indices = @transform_3, window_bounds = array<i64: 512, 1024>}, {pipeline_mode = #tpu.pipeline_mode<synchronous>, transform_indices = @transform_4, window_bounds = array<i64: 1, 1024>}, {pipeline_mode = #tpu.pipeline_mode<synchronous>, transform_indices = @transform_5, window_bounds = array<i64: 1024, 256>}, {pipeline_mode = #tpu.pipeline_mode<synchronous>, transform_indices = @transform_6, window_bounds = array<i64: 1, 256>}, {pipeline_mode = #tpu.pipeline_mode<synchronous>, transform_indices = @transform_7, window_bounds = array<i64: 256, 128>}, {pipeline_mode = #tpu.pipeline_mode<synchronous>, transform_indices = @transform_8, window_bounds = array<i64: 1, 128>}, {pipeline_mode = #tpu.pipeline_mode<synchronous>, transform_indices = @transform_9, window_bounds = array<i64: 1, 128>}, {transform_indices = @transform_10, window_bounds = array<i64: 8, 128>}]} {
    %c0 = arith.constant 0 : index
    %c0_0 = arith.constant 0 : index
    %0 = vector.load %arg1[%c0, %c0_0] : memref<8x896xf32, #tpu.memory_space<vmem>>, vector<8x896xf32>
    %1 = arith.truncf %0 : vector<8x896xf32> to vector<8x896xbf16>
    %c0_1 = arith.constant 0 : index
    %c0_2 = arith.constant 0 : index
    %2 = vector.load %arg2[%c0_1, %c0_2] : memref<896x512xbf16, #tpu.memory_space<vmem>>, vector<896x512xbf16>
    %cst = arith.constant dense<0.000000e+00> : vector<8x512xf32>
    %3 = tpu.matmul %1, %2, %cst {dimension_numbers = #tpu.dot_dimension_numbers<[1], [0], [0], [1], [0, 0, 1, 1], [], []>} : vector<8x896xbf16>, vector<896x512xbf16>, vector<8x512xf32> -> vector<8x512xf32>
    %c0_3 = arith.constant 0 : index
    %c0_4 = arith.constant 0 : index
    %4 = vector.load %arg3[%c0_3, %c0_4] : memref<1x512xf32, #tpu.memory_space<vmem>>, vector<1x512xf32>
    %5 = vector.broadcast %4 : vector<1x512xf32> to vector<8x512xf32>
    %6 = arith.addf %3, %5 : vector<8x512xf32>
    %cst_5 = arith.constant 0.000000e+00 : f32
    %7 = vector.broadcast %cst_5 : f32 to vector<8x512xf32>
    %8 = arith.cmpf oge, %6, %7 : vector<8x512xf32>
    %cst_6 = arith.constant 0.00999999977 : f32
    %9 = vector.broadcast %cst_6 : f32 to vector<8x512xf32>
    %10 = arith.mulf %9, %6 : vector<8x512xf32>
    %11 = arith.select %8, %6, %10 : vector<8x512xi1>, vector<8x512xf32>
    %12 = arith.truncf %11 : vector<8x512xf32> to vector<8x512xbf16>
    %c0_7 = arith.constant 0 : index
    %c0_8 = arith.constant 0 : index
    %13 = vector.load %arg4[%c0_7, %c0_8] : memref<512x1024xbf16, #tpu.memory_space<vmem>>, vector<512x1024xbf16>
    %cst_9 = arith.constant dense<0.000000e+00> : vector<8x1024xf32>
    %14 = tpu.matmul %12, %13, %cst_9 {dimension_numbers = #tpu.dot_dimension_numbers<[1], [0], [0], [1], [0, 0, 1, 1], [], []>} : vector<8x512xbf16>, vector<512x1024xbf16>, vector<8x1024xf32> -> vector<8x1024xf32>
    %c0_10 = arith.constant 0 : index
    %c0_11 = arith.constant 0 : index
    %15 = vector.load %arg5[%c0_10, %c0_11] : memref<1x1024xf32, #tpu.memory_space<vmem>>, vector<1x1024xf32>
    %16 = vector.broadcast %15 : vector<1x1024xf32> to vector<8x1024xf32>
    %17 = arith.addf %14, %16 : vector<8x1024xf32>
    %cst_12 = arith.constant 0.000000e+00 : f32
    %18 = vector.broadcast %cst_12 : f32 to vector<8x1024xf32>
    %19 = arith.cmpf oge, %17, %18 : vector<8x1024xf32>
    %cst_13 = arith.constant 0.00999999977 : f32
    %20 = vector.broadcast %cst_13 : f32 to vector<8x1024xf32>
    %21 = arith.mulf %20, %17 : vector<8x1024xf32>
    %22 = arith.select %19, %17, %21 : vector<8x1024xi1>, vector<8x1024xf32>
    %23 = arith.truncf %22 : vector<8x1024xf32> to vector<8x1024xbf16>
    %c0_14 = arith.constant 0 : index
    %c0_15 = arith.constant 0 : index
    %24 = vector.load %arg6[%c0_14, %c0_15] : memref<1024x256xbf16, #tpu.memory_space<vmem>>, vector<1024x256xbf16>
    %cst_16 = arith.constant dense<0.000000e+00> : vector<8x256xf32>
    %25 = tpu.matmul %23, %24, %cst_16 {dimension_numbers = #tpu.dot_dimension_numbers<[1], [0], [0], [1], [0, 0, 1, 1], [], []>} : vector<8x1024xbf16>, vector<1024x256xbf16>, vector<8x256xf32> -> vector<8x256xf32>
    %c0_17 = arith.constant 0 : index
    %c0_18 = arith.constant 0 : index
    %26 = vector.load %arg7[%c0_17, %c0_18] : memref<1x256xf32, #tpu.memory_space<vmem>>, vector<1x256xf32>
    %27 = vector.broadcast %26 : vector<1x256xf32> to vector<8x256xf32>
    %28 = arith.addf %25, %27 : vector<8x256xf32>
    %cst_19 = arith.constant 0.000000e+00 : f32
    %29 = vector.broadcast %cst_19 : f32 to vector<8x256xf32>
    %30 = arith.cmpf oge, %28, %29 : vector<8x256xf32>
    %cst_20 = arith.constant 0.00999999977 : f32
    %31 = vector.broadcast %cst_20 : f32 to vector<8x256xf32>
    %32 = arith.mulf %31, %28 : vector<8x256xf32>
    %33 = arith.select %30, %28, %32 : vector<8x256xi1>, vector<8x256xf32>
    %34 = arith.truncf %33 : vector<8x256xf32> to vector<8x256xbf16>
    %c0_21 = arith.constant 0 : index
    %c0_22 = arith.constant 0 : index
    %35 = vector.load %arg8[%c0_21, %c0_22] : memref<256x128xbf16, #tpu.memory_space<vmem>>, vector<256x128xbf16>
    %cst_23 = arith.constant dense<0.000000e+00> : vector<8x128xf32>
    %36 = tpu.matmul %34, %35, %cst_23 {dimension_numbers = #tpu.dot_dimension_numbers<[1], [0], [0], [1], [0, 0, 1, 1], [], []>} : vector<8x256xbf16>, vector<256x128xbf16>, vector<8x128xf32> -> vector<8x128xf32>
    %c0_24 = arith.constant 0 : index
    %c0_25 = arith.constant 0 : index
    %37 = vector.load %arg9[%c0_24, %c0_25] : memref<1x128xf32, #tpu.memory_space<vmem>>, vector<1x128xf32>
    %38 = vector.broadcast %37 : vector<1x128xf32> to vector<8x128xf32>
    %39 = arith.addf %36, %38 : vector<8x128xf32>
    %cst_26 = arith.constant 0.000000e+00 : f32
    %40 = vector.broadcast %cst_26 : f32 to vector<8x128xf32>
    %41 = arith.cmpf oge, %39, %40 : vector<8x128xf32>
    %cst_27 = arith.constant 0.00999999977 : f32
    %42 = vector.broadcast %cst_27 : f32 to vector<8x128xf32>
    %43 = arith.mulf %42, %39 : vector<8x128xf32>
    %44 = arith.select %41, %39, %43 : vector<8x128xi1>, vector<8x128xf32>
    %c0_28 = arith.constant 0 : index
    %c0_29 = arith.constant 0 : index
    %45 = vector.load %arg10[%c0_28, %c0_29] : memref<1x128xf32, #tpu.memory_space<vmem>>, vector<1x128xf32>
    %46 = vector.broadcast %45 : vector<1x128xf32> to vector<8x128xf32>
    %47 = arith.mulf %44, %46 : vector<8x128xf32>
    %c0_30 = arith.constant 0 : index
    %c0_31 = arith.constant 0 : index
    %48 = vector.load %arg11[%c0_30, %c0_31] : memref<8x128xf32, #tpu.memory_space<vmem>>, vector<8x128xf32>
    tpu.vector_store %arg11[%c0_30, %c0_31], %47 {strides = array<i32>} : memref<8x128xf32, #tpu.memory_space<vmem>>, vector<8x128xf32>,
    return
  }
  func.func @transform_0(%arg0: i32) -> (i32, i32) {
    %c0_i32 = arith.constant 0 : i32
    %c0_i32_0 = arith.constant 0 : i32
    return %arg0, %c0_i32 : i32, i32
  }
  func.func @transform_1(%arg0: i32) -> (i32, i32) {
    %c0_i32 = arith.constant 0 : i32
    %c0_i32_0 = arith.constant 0 : i32
    %c0_i32_1 = arith.constant 0 : i32
    return %c0_i32, %c0_i32_0 : i32, i32
  }
  func.func @transform_2(%arg0: i32) -> (i32, i32) {
    %c0_i32 = arith.constant 0 : i32
    %c0_i32_0 = arith.constant 0 : i32
    %c0_i32_1 = arith.constant 0 : i32
    return %c0_i32, %c0_i32_0 : i32, i32
  }
  func.func @transform_3(%arg0: i32) -> (i32, i32) {
    %c0_i32 = arith.constant 0 : i32
    %c0_i32_0 = arith.constant 0 : i32
    %c0_i32_1 = arith.constant 0 : i32
    return %c0_i32, %c0_i32_0 : i32, i32
  }
  func.func @transform_4(%arg0: i32) -> (i32, i32) {
    %c0_i32 = arith.constant 0 : i32
    %c0_i32_0 = arith.constant 0 : i32
    %c0_i32_1 = arith.constant 0 : i32
    return %c0_i32, %c0_i32_0 : i32, i32
  }
  func.func @transform_5(%arg0: i32) -> (i32, i32) {
    %c0_i32 = arith.constant 0 : i32
    %c0_i32_0 = arith.constant 0 : i32
    %c0_i32_1 = arith.constant 0 : i32
    return %c0_i32, %c0_i32_0 : i32, i32
  }
  func.func @transform_6(%arg0: i32) -> (i32, i32) {
    %c0_i32 = arith.constant 0 : i32
    %c0_i32_0 = arith.constant 0 : i32
    %c0_i32_1 = arith.constant 0 : i32
    return %c0_i32, %c0_i32_0 : i32, i32
  }
  func.func @transform_7(%arg0: i32) -> (i32, i32) {
    %c0_i32 = arith.constant 0 : i32
    %c0_i32_0 = arith.constant 0 : i32
    %c0_i32_1 = arith.constant 0 : i32
    return %c0_i32, %c0_i32_0 : i32, i32
  }
  func.func @transform_8(%arg0: i32) -> (i32, i32) {
    %c0_i32 = arith.constant 0 : i32
    %c0_i32_0 = arith.constant 0 : i32
    %c0_i32_1 = arith.constant 0 : i32
    return %c0_i32, %c0_i32_0 : i32, i32
  }
  func.func @transform_9(%arg0: i32) -> (i32, i32) {
    %c0_i32 = arith.constant 0 : i32
    %c0_i32_0 = arith.constant 0 : i32
    %c0_i32_1 = arith.constant 0 : i32
    return %c0_i32, %c0_i32_0 : i32, i32
  }
  func.func @transform_10(%arg0: i32) -> (i32, i32) {
    %c0_i32 = arith.constant 0 : i32
    %c0_i32_0 = arith.constant 0 : i32
    return %arg0, %c0_i32 : i32, i32
  }
}

</mosaic_0001>

<llo_original>
// kernel: tpu_custom_call.1
$region0: #{tpu_custom_call.1}
  #allocation0 [shape = 'u32[]', space=smem, size = 0x4, offset = 0x4, fixed_abs, tag = 'smem constant byte address 0x4 - core index']
  #allocation1 [shape = 'u32[144,128]{1,0:T(1,128)}', space=vmem, size = 0x12000, scoped, tag = 'internal scratch']
  %s0 = inlined_call_operand.hbm [shape: f32[8,896], index: 0, kind: input, shape index: {}]
  %s1 = inlined_call_operand.hbm [shape: bf16[896,512], index: 1, kind: input, shape index: {}]
  %s2 = inlined_call_operand.hbm [shape: f32[1,512], index: 2, kind: input, shape index: {}]
  %s3 = inlined_call_operand.hbm [shape: bf16[512,1024], index: 3, kind: input, shape index: {}]
  %s4 = inlined_call_operand.hbm [shape: f32[1,1024], index: 4, kind: input, shape index: {}]
  %s5 = inlined_call_operand.hbm [shape: bf16[1024,256], index: 5, kind: input, shape index: {}]
  %s6 = inlined_call_operand.vmem [shape: f32[1,256], index: 6, kind: input, shape index: {}]
  %s7 = inlined_call_operand.hbm [shape: bf16[256,128], index: 7, kind: input, shape index: {}]
  %s8 = inlined_call_operand.vmem [shape: f32[1,128], index: 8, kind: input, shape index: {}]
  %s9 = inlined_call_operand.vmem [shape: f32[1,128], index: 9, kind: input, shape index: {}]
  %s10 = inlined_call_operand.hbm [shape: f32[8,128], index: 10, kind: output, shape index: {}]
  %s11 = sld [smem:[#allocation0]]
  $region78: #{tpu_custom_call.1} parent=0
    _
  %s13 = ssub.s32 1, %s11
  %s14 = scalar_select 0, %s13, %s11
  $region1: #{tpu_custom_call.1} parent=0
    #allocation2 [shape = 'u8[28672]{0}', space=vmem, size = 0x7000, scoped, tag = 'input window, operand 0, single buffered']
    #allocation3 [shape = 's32[1]{0}', space=sflag, size = 0x4, scoped, tag = 'scoped memory for tpu_custom_call.1']
    #allocation4 [shape = 's32[1]{0}', space=sflag, size = 0x4, scoped, tag = 'scoped memory for tpu_custom_call.1']
    #allocation5 [shape = 'u8[917504]{0}', space=vmem, size = 0xe0000, scoped, tag = 'input window, operand 1, single buffered']
    #allocation6 [shape = 's32[1]{0}', space=sflag, size = 0x4, scoped, tag = 'scoped memory for tpu_custom_call.1']
    #allocation7 [shape = 'u8[2048]{0}', space=vmem, size = 0x800, scoped, tag = 'input window, operand 2, single buffered']
    #allocation8 [shape = 'u8[1048576]{0}', space=vmem, size = 0x100000, scoped, tag = 'input window, operand 3, single buffered']
    #allocation9 [shape = 's32[1]{0}', space=sflag, size = 0x4, scoped, tag = 'scoped memory for tpu_custom_call.1']
    #allocation10 [shape = 'u8[4096]{0}', space=vmem, size = 0x1000, scoped, tag = 'input window, operand 4, single buffered']
    #allocation11 [shape = 'u8[524288]{0}', space=vmem, size = 0x80000, scoped, tag = 'input window, operand 5, single buffered']
    #allocation12 [shape = 's32[1]{0}', space=sflag, size = 0x4, scoped, tag = 'scoped memory for tpu_custom_call.1']
    #allocation13 [shape = 'u8[65536]{0}', space=vmem, size = 0x10000, scoped, tag = 'input window, operand 7, single buffered']
    #allocation14 [shape = 'u8[4096]{0}', space=vmem, size = 0x1000, scoped, tag = 'output window, operand 0, single buffered']
    %15 = vsyncpa [#allocation3], 0
    %16 = vsyncpa [#allocation6], 0
    %17 = vsyncpa [#allocation9], 0
    %18 = vsyncpa [#allocation12], 0
    %19 = vsyncpa [#allocation4], 0
    // Predicated region
    $region2: #{tpu_custom_call.1} parent=1 // pred_check
      _
    $region3: #{tpu_custom_call.1} parent=1 // pred_check_branch
      %21 = sbr.rel (0) target = $region5
    $region4: #{tpu_custom_call.1} parent=1 // pred_region
      %s23 = ssub.s32 896, 896
      %24 = vsyncadd [#allocation3], %s23
      %s26 = sshll.u32 [#allocation2], 4
      %s27 = int_to_ptr.vmem [resolvable:$true] %s26
      %29 = dma.hbm_to_vmem [thread:$0]  %s0, 896, %s27, [#allocation3]
    $region5: #{tpu_custom_call.1} parent=1 // pred_fallthru
      _
    // Predicated region
    $region6: #{tpu_custom_call.1} parent=1 // pred_check
      _
    $region7: #{tpu_custom_call.1} parent=1 // pred_check_branch
      %31 = sbr.rel (0) target = $region9
    $region8: #{tpu_custom_call.1} parent=1 // pred_region
      %s33 = ssub.s32 28672, 28672
      %34 = vsyncadd [#allocation6], %s33
      %s35 = sshll.u32 [#allocation5], 4
      %s36 = int_to_ptr.vmem [resolvable:$true] %s35
      %41 = dma.hbm_to_vmem [thread:$0]  %s1, 28672, %s36, [#allocation6], 256, 256, 16
    $region9: #{tpu_custom_call.1} parent=1 // pred_fallthru
      _
    // Predicated region
    $region10: #{tpu_custom_call.1} parent=1 // pred_check
      _
    $region11: #{tpu_custom_call.1} parent=1 // pred_check_branch
      %43 = sbr.rel (0) target = $region13
    $region12: #{tpu_custom_call.1} parent=1 // pred_region
      %s45 = ssub.s32 64, 64
      %46 = vsyncadd [#allocation6], %s45
      %s48 = sshll.u32 [#allocation7], 4
      %s49 = int_to_ptr.vmem [resolvable:$true] %s48
      %51 = dma.hbm_to_vmem [thread:$0]  %s2, 64, %s49, [#allocation6]
    $region13: #{tpu_custom_call.1} parent=1 // pred_fallthru
      _
    // Predicated region
    $region14: #{tpu_custom_call.1} parent=1 // pred_check
      _
    $region15: #{tpu_custom_call.1} parent=1 // pred_check_branch
      %53 = sbr.rel (0) target = $region17
    $region16: #{tpu_custom_call.1} parent=1 // pred_region
      %s55 = ssub.s32 32768, 32768
      %56 = vsyncadd [#allocation9], %s55
      %s57 = sshll.u32 [#allocation8], 4
      %s58 = int_to_ptr.vmem [resolvable:$true] %s57
      %63 = dma.hbm_to_vmem [thread:$0]  %s3, 32768, %s58, [#allocation9], 512, 512, 32
    $region17: #{tpu_custom_call.1} parent=1 // pred_fallthru
      _
    // Predicated region
    $region18: #{tpu_custom_call.1} parent=1 // pred_check
      _
    $region19: #{tpu_custom_call.1} parent=1 // pred_check_branch
      %65 = sbr.rel (0) target = $region21
    $region20: #{tpu_custom_call.1} parent=1 // pred_region
      %s67 = ssub.s32 128, 128
      %68 = vsyncadd [#allocation9], %s67
      %s70 = sshll.u32 [#allocation10], 4
      %s71 = int_to_ptr.vmem [resolvable:$true] %s70
      %73 = dma.hbm_to_vmem [thread:$0]  %s4, 128, %s71, [#allocation9]
    $region21: #{tpu_custom_call.1} parent=1 // pred_fallthru
      _
    // Predicated region
    $region22: #{tpu_custom_call.1} parent=1 // pred_check
      _
    $region23: #{tpu_custom_call.1} parent=1 // pred_check_branch
      %75 = sbr.rel (0) target = $region25
    $region24: #{tpu_custom_call.1} parent=1 // pred_region
      %s77 = ssub.s32 16384, 16384
      %78 = vsyncadd [#allocation12], %s77
      %s79 = sshll.u32 [#allocation11], 4
      %s80 = int_to_ptr.vmem [resolvable:$true] %s79
      %85 = dma.hbm_to_vmem [thread:$0]  %s5, 16384, %s80, [#allocation12], 128, 128, 8
    $region25: #{tpu_custom_call.1} parent=1 // pred_fallthru
      _
    // Predicated region
    $region26: #{tpu_custom_call.1} parent=1 // pred_check
      _
    $region27: #{tpu_custom_call.1} parent=1 // pred_check_branch
      %87 = sbr.rel (0) target = $region29
    $region28: #{tpu_custom_call.1} parent=1 // pred_region
      _
    $region29: #{tpu_custom_call.1} parent=1 // pred_fallthru
      _
    // Predicated region
    $region30: #{tpu_custom_call.1} parent=1 // pred_check
      _
    $region31: #{tpu_custom_call.1} parent=1 // pred_check_branch
      %89 = sbr.rel (0) target = $region33
    $region32: #{tpu_custom_call.1} parent=1 // pred_region
      %s91 = ssub.s32 2048, 2048
      %92 = vsyncadd [#allocation12], %s91
      %s93 = sshll.u32 [#allocation13], 4
      %s94 = int_to_ptr.vmem [resolvable:$true] %s93
      %99 = dma.hbm_to_vmem [thread:$0]  %s7, 2048, %s94, [#allocation12], 64, 64, 4
    $region33: #{tpu_custom_call.1} parent=1 // pred_fallthru
      _
    // Predicated region
    $region34: #{tpu_custom_call.1} parent=1 // pred_check
      _
    $region35: #{tpu_custom_call.1} parent=1 // pred_check_branch
      %101 = sbr.rel (0) target = $region37
    $region36: #{tpu_custom_call.1} parent=1 // pred_region
      _
    $region37: #{tpu_custom_call.1} parent=1 // pred_fallthru
      _
    // Predicated region
    $region38: #{tpu_custom_call.1} parent=1 // pred_check
      _
    $region39: #{tpu_custom_call.1} parent=1 // pred_check_branch
      %103 = sbr.rel (0) target = $region41
    $region40: #{tpu_custom_call.1} parent=1 // pred_region
      _
    $region41: #{tpu_custom_call.1} parent=1 // pred_fallthru
      _
    // Predicated region
    $region42: #{tpu_custom_call.1} parent=1 // pred_check
      _
    $region43: #{tpu_custom_call.1} parent=1 // pred_check_branch
      %105 = sbr.rel (0) target = $region45
    $region44: #{tpu_custom_call.1} parent=1 // pred_region
      %106 = dma.done [#allocation3], 896
    $region45: #{tpu_custom_call.1} parent=1 // pred_fallthru
      _
    // Predicated region
    $region46: #{tpu_custom_call.1} parent=1 // pred_check
      _
    $region47: #{tpu_custom_call.1} parent=1 // pred_check_branch
      %108 = sbr.rel (0) target = $region49
    $region48: #{tpu_custom_call.1} parent=1 // pred_region
      %109 = dma.done [#allocation6], 28672
    $region49: #{tpu_custom_call.1} parent=1 // pred_fallthru
      _
    // Predicated region
    $region50: #{tpu_custom_call.1} parent=1 // pred_check
      _
    $region51: #{tpu_custom_call.1} parent=1 // pred_check_branch
      %111 = sbr.rel (0) target = $region53
    $region52: #{tpu_custom_call.1} parent=1 // pred_region
      %112 = dma.done [#allocation6], 64
    $region53: #{tpu_custom_call.1} parent=1 // pred_fallthru
      _
    // Predicated region
    $region54: #{tpu_custom_call.1} parent=1 // pred_check
      _
    $region55: #{tpu_custom_call.1} parent=1 // pred_check_branch
      %114 = sbr.rel (0) target = $region57
    $region56: #{tpu_custom_call.1} parent=1 // pred_region
      %115 = dma.done [#allocation9], 32768
    $region57: #{tpu_custom_call.1} parent=1 // pred_fallthru
      _
    // Predicated region
    $region58: #{tpu_custom_call.1} parent=1 // pred_check
      _
    $region59: #{tpu_custom_call.1} parent=1 // pred_check_branch
      %117 = sbr.rel (0) target = $region61
    $region60: #{tpu_custom_call.1} parent=1 // pred_region
      %118 = dma.done [#allocation9], 128
    $region61: #{tpu_custom_call.1} parent=1 // pred_fallthru
      _
    // Predicated region
    $region62: #{tpu_custom_call.1} parent=1 // pred_check
      _
    $region63: #{tpu_custom_call.1} parent=1 // pred_check_branch
      %120 = sbr.rel (0) target = $region65
    $region64: #{tpu_custom_call.1} parent=1 // pred_region
      %121 = dma.done [#allocation12], 16384
    $region65: #{tpu_custom_call.1} parent=1 // pred_fallthru
      _
    // Predicated region
    $region66: #{tpu_custom_call.1} parent=1 // pred_check
      _
    $region67: #{tpu_custom_call.1} parent=1 // pred_check_branch
      %123 = sbr.rel (0) target = $region69
    $region68: #{tpu_custom_call.1} parent=1 // pred_region
      %124 = dma.done [#allocation12], 2048
    $region69: #{tpu_custom_call.1} parent=1 // pred_fallthru
      _
    %v126 = vld [vmem:[#allocation2] sm:$0xff]
    %v127 = vld [vmem:[#allocation2 + $0x8] sm:$0xff]
    %v128 = vld [vmem:[#allocation2 + $0x10] sm:$0xff]
    %v129 = vld [vmem:[#allocation2 + $0x18] sm:$0xff]
    %v130 = vld [vmem:[#allocation2 + $0x20] sm:$0xff]
    %v131 = vld [vmem:[#allocation2 + $0x28] sm:$0xff]
    %v132 = vld [vmem:[#allocation2 + $0x30] sm:$0xff]
    %v133 = vpack.c.bf16 %v126, %v126
    %v134 = vpack.c.bf16 %v127, %v127
    %v135 = vpack.c.bf16 %v128, %v128
    %v136 = vpack.c.bf16 %v129, %v129
    %v137 = vpack.c.bf16 %v130, %v130
    %v138 = vpack.c.bf16 %v131, %v131
    %v139 = vpack.c.bf16 %v132, %v132
    %v140 = vld [vmem:[#allocation5] sm:$0xff]
    %v141 = vld [vmem:[#allocation5 + $0x8] sm:$0xff]
    %v142 = vld [vmem:[#allocation5 + $0x10] sm:$0xff]
    %v143 = vld [vmem:[#allocation5 + $0x18] sm:$0xff]
    %v144 = vld [vmem:[#allocation5 + $0x20] sm:$0xff]
    %v145 = vld [vmem:[#allocation5 + $0x28] sm:$0xff]
    %v146 = vld [vmem:[#allocation5 + $0x30] sm:$0xff]
    %v147 = vld [vmem:[#allocation5 + $0x38] sm:$0xff]
    %v148 = vld [vmem:[#allocation5 + $0x40] sm:$0xff]
    %v149 = vld [vmem:[#allocation5 + $0x48] sm:$0xff]
    %v150 = vld [vmem:[#allocation5 + $0x50] sm:$0xff]
    %v151 = vld [vmem:[#allocation5 + $0x58] sm:$0xff]
    %v152 = vld [vmem:[#allocation5 + $0x60] sm:$0xff]
    %v153 = vld [vmem:[#allocation5 + $0x68] sm:$0xff]
    %v154 = vld [vmem:[#allocation5 + $0x70] sm:$0xff]
    %v155 = vld [vmem:[#allocation5 + $0x78] sm:$0xff]
    %v156 = vld [vmem:[#allocation5 + $0x80] sm:$0xff]
    %v157 = vld [vmem:[#allocation5 + $0x88] sm:$0xff]
    %v158 = vld [vmem:[#allocation5 + $0x90] sm:$0xff]
    %v159 = vld [vmem:[#allocation5 + $0x98] sm:$0xff]
    %v160 = vld [vmem:[#allocation5 + $0xa0] sm:$0xff]
    %v161 = vld [vmem:[#allocation5 + $0xa8] sm:$0xff]
    %v162 = vld [vmem:[#allocation5 + $0xb0] sm:$0xff]
    %v163 = vld [vmem:[#allocation5 + $0xb8] sm:$0xff]
    %v164 = vld [vmem:[#allocation5 + $0xc0] sm:$0xff]
    %v165 = vld [vmem:[#allocation5 + $0xc8] sm:$0xff]
    %v166 = vld [vmem:[#allocation5 + $0xd0] sm:$0xff]
    %v167 = vld [vmem:[#allocation5 + $0xd8] sm:$0xff]
    %v168 = vld [vmem:[#allocation5 + $0xe0] sm:$0xff]
    %v169 = vld [vmem:[#allocation5 + $0xe8] sm:$0xff]
    %v170 = vld [vmem:[#allocation5 + $0xf0] sm:$0xff]
    %v171 = vld [vmem:[#allocation5 + $0xf8] sm:$0xff]
    %v172 = vld [vmem:[#allocation5 + $0x100] sm:$0xff]
    %v173 = vld [vmem:[#allocation5 + $0x108] sm:$0xff]
    %v174 = vld [vmem:[#allocation5 + $0x110] sm:$0xff]
    %v175 = vld [vmem:[#allocation5 + $0x118] sm:$0xff]
    %v176 = vld [vmem:[#allocation5 + $0x120] sm:$0xff]
    %v177 = vld [vmem:[#allocation5 + $0x128] sm:$0xff]
    %v178 = vld [vmem:[#allocation5 + $0x130] sm:$0xff]
    %v179 = vld [vmem:[#allocation5 + $0x138] sm:$0xff]
    %v180 = vld [vmem:[#allocation5 + $0x140] sm:$0xff]
    %v181 = vld [vmem:[#allocation5 + $0x148] sm:$0xff]
    %v182 = vld [vmem:[#allocation5 + $0x150] sm:$0xff]
    %v183 = vld [vmem:[#allocation5 + $0x158] sm:$0xff]
    %v184 = vld [vmem:[#allocation5 + $0x160] sm:$0xff]
    %v185 = vld [vmem:[#allocation5 + $0x168] sm:$0xff]
    %v186 = vld [vmem:[#allocation5 + $0x170] sm:$0xff]
    %v187 = vld [vmem:[#allocation5 + $0x178] sm:$0xff]
    %v188 = vld [vmem:[#allocation5 + $0x180] sm:$0xff]
    %v189 = vld [vmem:[#allocation5 + $0x188] sm:$0xff]
    %v190 = vld [vmem:[#allocation5 + $0x190] sm:$0xff]
    %v191 = vld [vmem:[#allocation5 + $0x198] sm:$0xff]
    %v192 = vld [vmem:[#allocation5 + $0x1a0] sm:$0xff]
    %v193 = vld [vmem:[#allocation5 + $0x1a8] sm:$0xff]
    %v194 = vld [vmem:[#allocation5 + $0x1b0] sm:$0xff]
    %v195 = vld [vmem:[#allocation5 + $0x1b8] sm:$0xff]
    %v196 = vld [vmem:[#allocation5 + $0x1c0] sm:$0xff]
    %v197 = vld [vmem:[#allocation5 + $0x1c8] sm:$0xff]
    %v198 = vld [vmem:[#allocation5 + $0x1d0] sm:$0xff]
    %v199 = vld [vmem:[#allocation5 + $0x1d8] sm:$0xff]
    %v200 = vld [vmem:[#allocation5 + $0x1e0] sm:$0xff]
    %v201 = vld [vmem:[#allocation5 + $0x1e8] sm:$0xff]
    %v202 = vld [vmem:[#allocation5 + $0x1f0] sm:$0xff]
    %v203 = vld [vmem:[#allocation5 + $0x1f8] sm:$0xff]
    %v204 = vld [vmem:[#allocation5 + $0x200] sm:$0xff]
    %v205 = vld [vmem:[#allocation5 + $0x208] sm:$0xff]
    %v206 = vld [vmem:[#allocation5 + $0x210] sm:$0xff]
    %v207 = vld [vmem:[#allocation5 + $0x218] sm:$0xff]
    %v208 = vld [vmem:[#allocation5 + $0x220] sm:$0xff]
    %v209 = vld [vmem:[#allocation5 + $0x228] sm:$0xff]
    %v210 = vld [vmem:[#allocation5 + $0x230] sm:$0xff]
    %v211 = vld [vmem:[#allocation5 + $0x238] sm:$0xff]
    %v212 = vld [vmem:[#allocation5 + $0x240] sm:$0xff]
    %v213 = vld [vmem:[#allocation5 + $0x248] sm:$0xff]
    %v214 = vld [vmem:[#allocation5 + $0x250] sm:$0xff]
    %v215 = vld [vmem:[#allocation5 + $0x258] sm:$0xff]
    %v216 = vld [vmem:[#allocation5 + $0x260] sm:$0xff]
    %v217 = vld [vmem:[#allocation5 + $0x268] sm:$0xff]
    %v218 = vld [vmem:[#allocation5 + $0x270] sm:$0xff]
    %v219 = vld [vmem:[#allocation5 + $0x278] sm:$0xff]
    %v220 = vld [vmem:[#allocation5 + $0x280] sm:$0xff]
    %v221 = vld [vmem:[#allocation5 + $0x288] sm:$0xff]
    %v222 = vld [vmem:[#allocation5 + $0x290] sm:$0xff]
    %v223 = vld [vmem:[#allocation5 + $0x298] sm:$0xff]
    %v224 = vld [vmem:[#allocation5 + $0x2a0] sm:$0xff]
    %v225 = vld [vmem:[#allocation5 + $0x2a8] sm:$0xff]
    %v226 = vld [vmem:[#allocation5 + $0x2b0] sm:$0xff]
    %v227 = vld [vmem:[#allocation5 + $0x2b8] sm:$0xff]
    %v228 = vld [vmem:[#allocation5 + $0x2c0] sm:$0xff]
    %v229 = vld [vmem:[#allocation5 + $0x2c8] sm:$0xff]
    %v230 = vld [vmem:[#allocation5 + $0x2d0] sm:$0xff]
    %v231 = vld [vmem:[#allocation5 + $0x2d8] sm:$0xff]
    %v232 = vld [vmem:[#allocation5 + $0x2e0] sm:$0xff]
    %v233 = vld [vmem:[#allocation5 + $0x2e8] sm:$0xff]
    %v234 = vld [vmem:[#allocation5 + $0x2f0] sm:$0xff]
    %v235 = vld [vmem:[#allocation5 + $0x2f8] sm:$0xff]
    %v236 = vld [vmem:[#allocation5 + $0x300] sm:$0xff]
    %v237 = vld [vmem:[#allocation5 + $0x308] sm:$0xff]
    %v238 = vld [vmem:[#allocation5 + $0x310] sm:$0xff]
    %v239 = vld [vmem:[#allocation5 + $0x318] sm:$0xff]
    %v240 = vld [vmem:[#allocation5 + $0x320] sm:$0xff]
    %v241 = vld [vmem:[#allocation5 + $0x328] sm:$0xff]
    %v242 = vld [vmem:[#allocation5 + $0x330] sm:$0xff]
    %v243 = vld [vmem:[#allocation5 + $0x338] sm:$0xff]
    %v244 = vld [vmem:[#allocation5 + $0x340] sm:$0xff]
    %v245 = vld [vmem:[#allocation5 + $0x348] sm:$0xff]
    %v246 = vld [vmem:[#allocation5 + $0x350] sm:$0xff]
    %v247 = vld [vmem:[#allocation5 + $0x358] sm:$0xff]
    %v248 = vld [vmem:[#allocation5 + $0x360] sm:$0xff]
    %v249 = vld [vmem:[#allocation5 + $0x368] sm:$0xff]
    %v250 = vld [vmem:[#allocation5 + $0x370] sm:$0xff]
    %v251 = vld [vmem:[#allocation5 + $0x378] sm:$0xff]
    %v252 = vld [vmem:[#allocation5 + $0x380] sm:$0xff]
    %v253 = vld [vmem:[#allocation5 + $0x388] sm:$0xff]
    %v254 = vld [vmem:[#allocation5 + $0x390] sm:$0xff]
    %v255 = vld [vmem:[#allocation5 + $0x398] sm:$0xff]
    %v256 = vld [vmem:[#allocation5 + $0x3a0] sm:$0xff]
    %v257 = vld [vmem:[#allocation5 + $0x3a8] sm:$0xff]
    %v258 = vld [vmem:[#allocation5 + $0x3b0] sm:$0xff]
    %v259 = vld [vmem:[#allocation5 + $0x3b8] sm:$0xff]
    %v260 = vld [vmem:[#allocation5 + $0x3c0] sm:$0xff]
    %v261 = vld [vmem:[#allocation5 + $0x3c8] sm:$0xff]
    %v262 = vld [vmem:[#allocation5 + $0x3d0] sm:$0xff]
    %v263 = vld [vmem:[#allocation5 + $0x3d8] sm:$0xff]
    %v264 = vld [vmem:[#allocation5 + $0x3e0] sm:$0xff]
    %v265 = vld [vmem:[#allocation5 + $0x3e8] sm:$0xff]
    %v266 = vld [vmem:[#allocation5 + $0x3f0] sm:$0xff]
    %v267 = vld [vmem:[#allocation5 + $0x3f8] sm:$0xff]
    %v268 = vld [vmem:[#allocation5 + $0x400] sm:$0xff]
    %v269 = vld [vmem:[#allocation5 + $0x408] sm:$0xff]
    %v270 = vld [vmem:[#allocation5 + $0x410] sm:$0xff]
    %v271 = vld [vmem:[#allocation5 + $0x418] sm:$0xff]
    %v272 = vld [vmem:[#allocation5 + $0x420] sm:$0xff]
    %v273 = vld [vmem:[#allocation5 + $0x428] sm:$0xff]
    %v274 = vld [vmem:[#allocation5 + $0x430] sm:$0xff]
    %v275 = vld [vmem:[#allocation5 + $0x438] sm:$0xff]
    %v276 = vld [vmem:[#allocation5 + $0x440] sm:$0xff]
    %v277 = vld [vmem:[#allocation5 + $0x448] sm:$0xff]
    %v278 = vld [vmem:[#allocation5 + $0x450] sm:$0xff]
    %v279 = vld [vmem:[#allocation5 + $0x458] sm:$0xff]
    %v280 = vld [vmem:[#allocation5 + $0x460] sm:$0xff]
    %v281 = vld [vmem:[#allocation5 + $0x468] sm:$0xff]
    %v282 = vld [vmem:[#allocation5 + $0x470] sm:$0xff]
    %v283 = vld [vmem:[#allocation5 + $0x478] sm:$0xff]
    %v284 = vld [vmem:[#allocation5 + $0x480] sm:$0xff]
    %v285 = vld [vmem:[#allocation5 + $0x488] sm:$0xff]
    %v286 = vld [vmem:[#allocation5 + $0x490] sm:$0xff]
    %v287 = vld [vmem:[#allocation5 + $0x498] sm:$0xff]
    %v288 = vld [vmem:[#allocation5 + $0x4a0] sm:$0xff]
    %v289 = vld [vmem:[#allocation5 + $0x4a8] sm:$0xff]
    %v290 = vld [vmem:[#allocation5 + $0x4b0] sm:$0xff]
    %v291 = vld [vmem:[#allocation5 + $0x4b8] sm:$0xff]
    %v292 = vld [vmem:[#allocation5 + $0x4c0] sm:$0xff]
    %v293 = vld [vmem:[#allocation5 + $0x4c8] sm:$0xff]
    %v294 = vld [vmem:[#allocation5 + $0x4d0] sm:$0xff]
    %v295 = vld [vmem:[#allocation5 + $0x4d8] sm:$0xff]
    %v296 = vld [vmem:[#allocation5 + $0x4e0] sm:$0xff]
    %v297 = vld [vmem:[#allocation5 + $0x4e8] sm:$0xff]
    %v298 = vld [vmem:[#allocation5 + $0x4f0] sm:$0xff]
    %v299 = vld [vmem:[#allocation5 + $0x4f8] sm:$0xff]
    %v300 = vld [vmem:[#allocation5 + $0x500] sm:$0xff]
    %v301 = vld [vmem:[#allocation5 + $0x508] sm:$0xff]
    %v302 = vld [vmem:[#allocation5 + $0x510] sm:$0xff]
    %v303 = vld [vmem:[#allocation5 + $0x518] sm:$0xff]
    %v304 = vld [vmem:[#allocation5 + $0x520] sm:$0xff]
    %v305 = vld [vmem:[#allocation5 + $0x528] sm:$0xff]
    %v306 = vld [vmem:[#allocation5 + $0x530] sm:$0xff]
    %v307 = vld [vmem:[#allocation5 + $0x538] sm:$0xff]
    %v308 = vld [vmem:[#allocation5 + $0x540] sm:$0xff]
    %v309 = vld [vmem:[#allocation5 + $0x548] sm:$0xff]
    %v310 = vld [vmem:[#allocation5 + $0x550] sm:$0xff]
    %v311 = vld [vmem:[#allocation5 + $0x558] sm:$0xff]
    %v312 = vld [vmem:[#allocation5 + $0x560] sm:$0xff]
    %v313 = vld [vmem:[#allocation5 + $0x568] sm:$0xff]
    %v314 = vld [vmem:[#allocation5 + $0x570] sm:$0xff]
    %v315 = vld [vmem:[#allocation5 + $0x578] sm:$0xff]
    %v316 = vld [vmem:[#allocation5 + $0x580] sm:$0xff]
    %v317 = vld [vmem:[#allocation5 + $0x588] sm:$0xff]
    %v318 = vld [vmem:[#allocation5 + $0x590] sm:$0xff]
    %v319 = vld [vmem:[#allocation5 + $0x598] sm:$0xff]
    %v320 = vld [vmem:[#allocation5 + $0x5a0] sm:$0xff]
    %v321 = vld [vmem:[#allocation5 + $0x5a8] sm:$0xff]
    %v322 = vld [vmem:[#allocation5 + $0x5b0] sm:$0xff]
    %v323 = vld [vmem:[#allocation5 + $0x5b8] sm:$0xff]
    %v324 = vld [vmem:[#allocation5 + $0x5c0] sm:$0xff]
    %v325 = vld [vmem:[#allocation5 + $0x5c8] sm:$0xff]
    %v326 = vld [vmem:[#allocation5 + $0x5d0] sm:$0xff]
    %v327 = vld [vmem:[#allocation5 + $0x5d8] sm:$0xff]
    %v328 = vld [vmem:[#allocation5 + $0x5e0] sm:$0xff]
    %v329 = vld [vmem:[#allocation5 + $0x5e8] sm:$0xff]
    %v330 = vld [vmem:[#allocation5 + $0x5f0] sm:$0xff]
    %v331 = vld [vmem:[#allocation5 + $0x5f8] sm:$0xff]
    %v332 = vld [vmem:[#allocation5 + $0x600] sm:$0xff]
    %v333 = vld [vmem:[#allocation5 + $0x608] sm:$0xff]
    %v334 = vld [vmem:[#allocation5 + $0x610] sm:$0xff]
    %v335 = vld [vmem:[#allocation5 + $0x618] sm:$0xff]
    %v336 = vld [vmem:[#allocation5 + $0x620] sm:$0xff]
    %v337 = vld [vmem:[#allocation5 + $0x628] sm:$0xff]
    %v338 = vld [vmem:[#allocation5 + $0x630] sm:$0xff]
    %v339 = vld [vmem:[#allocation5 + $0x638] sm:$0xff]
    %v340 = vld [vmem:[#allocation5 + $0x640] sm:$0xff]
    %v341 = vld [vmem:[#allocation5 + $0x648] sm:$0xff]
    %v342 = vld [vmem:[#allocation5 + $0x650] sm:$0xff]
    %v343 = vld [vmem:[#allocation5 + $0x658] sm:$0xff]
    %v344 = vld [vmem:[#allocation5 + $0x660] sm:$0xff]
    %v345 = vld [vmem:[#allocation5 + $0x668] sm:$0xff]
    %v346 = vld [vmem:[#allocation5 + $0x670] sm:$0xff]
    %v347 = vld [vmem:[#allocation5 + $0x678] sm:$0xff]
    %v348 = vld [vmem:[#allocation5 + $0x680] sm:$0xff]
    %v349 = vld [vmem:[#allocation5 + $0x688] sm:$0xff]
    %v350 = vld [vmem:[#allocation5 + $0x690] sm:$0xff]
    %v351 = vld [vmem:[#allocation5 + $0x698] sm:$0xff]
    %v352 = vld [vmem:[#allocation5 + $0x6a0] sm:$0xff]
    %v353 = vld [vmem:[#allocation5 + $0x6a8] sm:$0xff]
    %v354 = vld [vmem:[#allocation5 + $0x6b0] sm:$0xff]
    %v355 = vld [vmem:[#allocation5 + $0x6b8] sm:$0xff]
    %v356 = vld [vmem:[#allocation5 + $0x6c0] sm:$0xff]
    %v357 = vld [vmem:[#allocation5 + $0x6c8] sm:$0xff]
    %v358 = vld [vmem:[#allocation5 + $0x6d0] sm:$0xff]
    %v359 = vld [vmem:[#allocation5 + $0x6d8] sm:$0xff]
    %v360 = vld [vmem:[#allocation5 + $0x6e0] sm:$0xff]
    %v361 = vld [vmem:[#allocation5 + $0x6e8] sm:$0xff]
    %v362 = vld [vmem:[#allocation5 + $0x6f0] sm:$0xff]
    %v363 = vld [vmem:[#allocation5 + $0x6f8] sm:$0xff]
    %v364 = vld [vmem:[#allocation7] sm:$0xf]
    %v366 = vlaneseq
    %v367 = vshrl.u32 %v366, 7
    %v368 = vsub.s32 0, %v367
    %v369 = vrot.slane %v364, %v368
    %v370 = vlaneseq
    %v371 = vshrl.u32 %v370, 7
    %v372 = vsub.s32 1, %v371
    %v373 = vrot.slane %v364, %v372
    %v374 = vlaneseq
    %v375 = vshrl.u32 %v374, 7
    %v376 = vsub.s32 2, %v375
    %v377 = vrot.slane %v364, %v376
    %v378 = vlaneseq
    %v379 = vshrl.u32 %v378, 7
    %v380 = vsub.s32 3, %v379
    %v381 = vrot.slane %v364, %v380
    %v610 = vunpack.c.l.b16 %v140
    %v611 = vunpack.c.h.b16 %v140
    %v612 = vunpack.c.l.b16 %v141
    %v613 = vunpack.c.h.b16 %v141
    %v614 = vunpack.c.l.b16 %v142
    %v615 = vunpack.c.h.b16 %v142
    %v616 = vunpack.c.l.b16 %v143
    %v617 = vunpack.c.h.b16 %v143
    %v618 = vunpack.c.l.b16 %v144
    %v619 = vunpack.c.h.b16 %v144
    %v620 = vunpack.c.l.b16 %v145
    %v621 = vunpack.c.h.b16 %v145
    %v622 = vunpack.c.l.b16 %v146
    %v623 = vunpack.c.h.b16 %v146
    %v624 = vunpack.c.l.b16 %v147
    %v625 = vunpack.c.h.b16 %v147
    %v626 = vunpack.c.l.b16 %v148
    %v627 = vunpack.c.h.b16 %v148
    %v628 = vunpack.c.l.b16 %v149
    %v629 = vunpack.c.h.b16 %v149
    %v630 = vunpack.c.l.b16 %v150
    %v631 = vunpack.c.h.b16 %v150
    %v632 = vunpack.c.l.b16 %v151
    %v633 = vunpack.c.h.b16 %v151
    %v634 = vunpack.c.l.b16 %v152
    %v635 = vunpack.c.h.b16 %v152
    %v636 = vunpack.c.l.b16 %v153
    %v637 = vunpack.c.h.b16 %v153
    %v638 = vunpack.c.l.b16 %v154
    %v639 = vunpack.c.h.b16 %v154
    %v640 = vunpack.c.l.b16 %v155
    %v641 = vunpack.c.h.b16 %v155
    %v642 = vunpack.c.l.b16 %v156
    %v643 = vunpack.c.h.b16 %v156
    %v644 = vunpack.c.l.b16 %v157
    %v645 = vunpack.c.h.b16 %v157
    %v646 = vunpack.c.l.b16 %v158
    %v647 = vunpack.c.h.b16 %v158
    %v648 = vunpack.c.l.b16 %v159
    %v649 = vunpack.c.h.b16 %v159
    %v650 = vunpack.c.l.b16 %v160
    %v651 = vunpack.c.h.b16 %v160
    %v652 = vunpack.c.l.b16 %v161
    %v653 = vunpack.c.h.b16 %v161
    %v654 = vunpack.c.l.b16 %v162
    %v655 = vunpack.c.h.b16 %v162
    %v656 = vunpack.c.l.b16 %v163
    %v657 = vunpack.c.h.b16 %v163
    %v658 = vunpack.c.l.b16 %v164
    %v659 = vunpack.c.h.b16 %v164
    %v660 = vunpack.c.l.b16 %v165
    %v661 = vunpack.c.h.b16 %v165
    %v662 = vunpack.c.l.b16 %v166
    %v663 = vunpack.c.h.b16 %v166
    %v664 = vunpack.c.l.b16 %v167
    %v665 = vunpack.c.h.b16 %v167
    %v666 = vunpack.c.l.b16 %v168
    %v667 = vunpack.c.h.b16 %v168
    %v668 = vunpack.c.l.b16 %v169
    %v669 = vunpack.c.h.b16 %v169
    %v670 = vunpack.c.l.b16 %v170
    %v671 = vunpack.c.h.b16 %v170
    %v672 = vunpack.c.l.b16 %v171
    %v673 = vunpack.c.h.b16 %v171
    %v674 = vunpack.c.l.b16 %v172
    %v675 = vunpack.c.h.b16 %v172
    %v676 = vunpack.c.l.b16 %v173
    %v677 = vunpack.c.h.b16 %v173
    %v678 = vunpack.c.l.b16 %v174
    %v679 = vunpack.c.h.b16 %v174
    %v680 = vunpack.c.l.b16 %v175
    %v681 = vunpack.c.h.b16 %v175
    %v682 = vunpack.c.l.b16 %v176
    %v683 = vunpack.c.h.b16 %v176
    %v684 = vunpack.c.l.b16 %v177
    %v685 = vunpack.c.h.b16 %v177
    %v686 = vunpack.c.l.b16 %v178
    %v687 = vunpack.c.h.b16 %v178
    %v688 = vunpack.c.l.b16 %v179
    %v689 = vunpack.c.h.b16 %v179
    %v690 = vunpack.c.l.b16 %v180
    %v691 = vunpack.c.h.b16 %v180
    %v692 = vunpack.c.l.b16 %v181
    %v693 = vunpack.c.h.b16 %v181
    %v694 = vunpack.c.l.b16 %v182
    %v695 = vunpack.c.h.b16 %v182
    %v696 = vunpack.c.l.b16 %v183
    %v697 = vunpack.c.h.b16 %v183
    %v698 = vunpack.c.l.b16 %v184
    %v699 = vunpack.c.h.b16 %v184
    %v700 = vunpack.c.l.b16 %v185
    %v701 = vunpack.c.h.b16 %v185
    %v702 = vunpack.c.l.b16 %v186
    %v703 = vunpack.c.h.b16 %v186
    %v704 = vunpack.c.l.b16 %v187
    %v705 = vunpack.c.h.b16 %v187
    %v706 = vunpack.c.l.b16 %v188
    %v707 = vunpack.c.h.b16 %v188
    %v708 = vunpack.c.l.b16 %v189
    %v709 = vunpack.c.h.b16 %v189
    %v710 = vunpack.c.l.b16 %v190
    %v711 = vunpack.c.h.b16 %v190
    %v712 = vunpack.c.l.b16 %v191
    %v713 = vunpack.c.h.b16 %v191
    %v714 = vunpack.c.l.b16 %v192
    %v715 = vunpack.c.h.b16 %v192
    %v716 = vunpack.c.l.b16 %v193
    %v717 = vunpack.c.h.b16 %v193
    %v718 = vunpack.c.l.b16 %v194
    %v719 = vunpack.c.h.b16 %v194
    %v720 = vunpack.c.l.b16 %v195
    %v721 = vunpack.c.h.b16 %v195
    %v722 = vunpack.c.l.b16 %v196
    %v723 = vunpack.c.h.b16 %v196
    %v724 = vunpack.c.l.b16 %v197
    %v725 = vunpack.c.h.b16 %v197
    %v726 = vunpack.c.l.b16 %v198
    %v727 = vunpack.c.h.b16 %v198
    %v728 = vunpack.c.l.b16 %v199
    %v729 = vunpack.c.h.b16 %v199
    %v730 = vunpack.c.l.b16 %v200
    %v731 = vunpack.c.h.b16 %v200
    %v732 = vunpack.c.l.b16 %v201
    %v733 = vunpack.c.h.b16 %v201
    %v734 = vunpack.c.l.b16 %v202
    %v735 = vunpack.c.h.b16 %v202
    %v736 = vunpack.c.l.b16 %v203
    %v737 = vunpack.c.h.b16 %v203
    %v738 = vunpack.c.l.b16 %v204
    %v739 = vunpack.c.h.b16 %v204
    %v740 = vunpack.c.l.b16 %v205
    %v741 = vunpack.c.h.b16 %v205
    %v742 = vunpack.c.l.b16 %v206
    %v743 = vunpack.c.h.b16 %v206
    %v744 = vunpack.c.l.b16 %v207
    %v745 = vunpack.c.h.b16 %v207
    %v746 = vunpack.c.l.b16 %v208
    %v747 = vunpack.c.h.b16 %v208
    %v748 = vunpack.c.l.b16 %v209
    %v749 = vunpack.c.h.b16 %v209
    %v750 = vunpack.c.l.b16 %v210
    %v751 = vunpack.c.h.b16 %v210
    %v752 = vunpack.c.l.b16 %v211
    %v753 = vunpack.c.h.b16 %v211
    %v754 = vunpack.c.l.b16 %v212
    %v755 = vunpack.c.h.b16 %v212
    %v756 = vunpack.c.l.b16 %v213
    %v757 = vunpack.c.h.b16 %v213
    %v758 = vunpack.c.l.b16 %v214
    %v759 = vunpack.c.h.b16 %v214
    %v760 = vunpack.c.l.b16 %v215
    %v761 = vunpack.c.h.b16 %v215
    %v762 = vunpack.c.l.b16 %v216
    %v763 = vunpack.c.h.b16 %v216
    %v764 = vunpack.c.l.b16 %v217
    %v765 = vunpack.c.h.b16 %v217
    %v766 = vunpack.c.l.b16 %v218
    %v767 = vunpack.c.h.b16 %v218
    %v768 = vunpack.c.l.b16 %v219
    %v769 = vunpack.c.h.b16 %v219
    %v770 = vunpack.c.l.b16 %v220
    %v771 = vunpack.c.h.b16 %v220
    %v772 = vunpack.c.l.b16 %v221
    %v773 = vunpack.c.h.b16 %v221
    %v774 = vunpack.c.l.b16 %v222
    %v775 = vunpack.c.h.b16 %v222
    %v776 = vunpack.c.l.b16 %v223
    %v777 = vunpack.c.h.b16 %v223
    %v778 = vunpack.c.l.b16 %v224
    %v779 = vunpack.c.h.b16 %v224
    %v780 = vunpack.c.l.b16 %v225
    %v781 = vunpack.c.h.b16 %v225
    %v782 = vunpack.c.l.b16 %v226
    %v783 = vunpack.c.h.b16 %v226
    %v784 = vunpack.c.l.b16 %v227
    %v785 = vunpack.c.h.b16 %v227
    %v786 = vunpack.c.l.b16 %v228
    %v787 = vunpack.c.h.b16 %v228
    %v788 = vunpack.c.l.b16 %v229
    %v789 = vunpack.c.h.b16 %v229
    %v790 = vunpack.c.l.b16 %v230
    %v791 = vunpack.c.h.b16 %v230
    %v792 = vunpack.c.l.b16 %v231
    %v793 = vunpack.c.h.b16 %v231
    %v794 = vunpack.c.l.b16 %v232
    %v795 = vunpack.c.h.b16 %v232
    %v796 = vunpack.c.l.b16 %v233
    %v797 = vunpack.c.h.b16 %v233
    %v798 = vunpack.c.l.b16 %v234
    %v799 = vunpack.c.h.b16 %v234
    %v800 = vunpack.c.l.b16 %v235
    %v801 = vunpack.c.h.b16 %v235
    %v802 = vunpack.c.l.b16 %v236
    %v803 = vunpack.c.h.b16 %v236
    %v804 = vunpack.c.l.b16 %v237
    %v805 = vunpack.c.h.b16 %v237
    %v806 = vunpack.c.l.b16 %v238
    %v807 = vunpack.c.h.b16 %v238
    %v808 = vunpack.c.l.b16 %v239
    %v809 = vunpack.c.h.b16 %v239
    %v810 = vunpack.c.l.b16 %v240
    %v811 = vunpack.c.h.b16 %v240
    %v812 = vunpack.c.l.b16 %v241
    %v813 = vunpack.c.h.b16 %v241
    %v814 = vunpack.c.l.b16 %v242
    %v815 = vunpack.c.h.b16 %v242
    %v816 = vunpack.c.l.b16 %v243
    %v817 = vunpack.c.h.b16 %v243
    %v818 = vunpack.c.l.b16 %v244
    %v819 = vunpack.c.h.b16 %v244
    %v820 = vunpack.c.l.b16 %v245
    %v821 = vunpack.c.h.b16 %v245
    %v822 = vunpack.c.l.b16 %v246
    %v823 = vunpack.c.h.b16 %v246
    %v824 = vunpack.c.l.b16 %v247
    %v825 = vunpack.c.h.b16 %v247
    %v826 = vunpack.c.l.b16 %v248
    %v827 = vunpack.c.h.b16 %v248
    %v828 = vunpack.c.l.b16 %v249
    %v829 = vunpack.c.h.b16 %v249
    %v830 = vunpack.c.l.b16 %v250
    %v831 = vunpack.c.h.b16 %v250
    %v832 = vunpack.c.l.b16 %v251
    %v833 = vunpack.c.h.b16 %v251
    %v834 = vunpack.c.l.b16 %v252
    %v835 = vunpack.c.h.b16 %v252
    %v836 = vunpack.c.l.b16 %v253
    %v837 = vunpack.c.h.b16 %v253
    %v838 = vunpack.c.l.b16 %v254
    %v839 = vunpack.c.h.b16 %v254
    %v840 = vunpack.c.l.b16 %v255
    %v841 = vunpack.c.h.b16 %v255
    %v842 = vunpack.c.l.b16 %v256
    %v843 = vunpack.c.h.b16 %v256
    %v844 = vunpack.c.l.b16 %v257
    %v845 = vunpack.c.h.b16 %v257
    %v846 = vunpack.c.l.b16 %v258
    %v847 = vunpack.c.h.b16 %v258
    %v848 = vunpack.c.l.b16 %v259
    %v849 = vunpack.c.h.b16 %v259
    %v850 = vunpack.c.l.b16 %v260
    %v851 = vunpack.c.h.b16 %v260
    %v852 = vunpack.c.l.b16 %v261
    %v853 = vunpack.c.h.b16 %v261
    %v854 = vunpack.c.l.b16 %v262
    %v855 = vunpack.c.h.b16 %v262
    %v856 = vunpack.c.l.b16 %v263
    %v857 = vunpack.c.h.b16 %v263
    %v858 = vunpack.c.l.b16 %v264
    %v859 = vunpack.c.h.b16 %v264
    %v860 = vunpack.c.l.b16 %v265
    %v861 = vunpack.c.h.b16 %v265
    %v862 = vunpack.c.l.b16 %v266
    %v863 = vunpack.c.h.b16 %v266
    %v864 = vunpack.c.l.b16 %v267
    %v865 = vunpack.c.h.b16 %v267
    %v866 = vunpack.c.l.b16 %v268
    %v867 = vunpack.c.h.b16 %v268
    %v868 = vunpack.c.l.b16 %v269
    %v869 = vunpack.c.h.b16 %v269
    %v870 = vunpack.c.l.b16 %v270
    %v871 = vunpack.c.h.b16 %v270
    %v872 = vunpack.c.l.b16 %v271
    %v873 = vunpack.c.h.b16 %v271
    %v874 = vunpack.c.l.b16 %v272
    %v875 = vunpack.c.h.b16 %v272
    %v876 = vunpack.c.l.b16 %v273
    %v877 = vunpack.c.h.b16 %v273
    %v878 = vunpack.c.l.b16 %v274
    %v879 = vunpack.c.h.b16 %v274
    %v880 = vunpack.c.l.b16 %v275
    %v881 = vunpack.c.h.b16 %v275
    %v882 = vunpack.c.l.b16 %v276
    %v883 = vunpack.c.h.b16 %v276
    %v884 = vunpack.c.l.b16 %v277
    %v885 = vunpack.c.h.b16 %v277
    %v886 = vunpack.c.l.b16 %v278
    %v887 = vunpack.c.h.b16 %v278
    %v888 = vunpack.c.l.b16 %v279
    %v889 = vunpack.c.h.b16 %v279
    %v890 = vunpack.c.l.b16 %v280
    %v891 = vunpack.c.h.b16 %v280
    %v892 = vunpack.c.l.b16 %v281
    %v893 = vunpack.c.h.b16 %v281
    %v894 = vunpack.c.l.b16 %v282
    %v895 = vunpack.c.h.b16 %v282
    %v896 = vunpack.c.l.b16 %v283
    %v897 = vunpack.c.h.b16 %v283
    %v898 = vunpack.c.l.b16 %v284
    %v899 = vunpack.c.h.b16 %v284
    %v900 = vunpack.c.l.b16 %v285
    %v901 = vunpack.c.h.b16 %v285
    %v902 = vunpack.c.l.b16 %v286
    %v903 = vunpack.c.h.b16 %v286
    %v904 = vunpack.c.l.b16 %v287
    %v905 = vunpack.c.h.b16 %v287
    %v906 = vunpack.c.l.b16 %v288
    %v907 = vunpack.c.h.b16 %v288
    %v908 = vunpack.c.l.b16 %v289
    %v909 = vunpack.c.h.b16 %v289
    %v910 = vunpack.c.l.b16 %v290
    %v911 = vunpack.c.h.b16 %v290
    %v912 = vunpack.c.l.b16 %v291
    %v913 = vunpack.c.h.b16 %v291
    %v914 = vunpack.c.l.b16 %v292
    %v915 = vunpack.c.h.b16 %v292
    %v916 = vunpack.c.l.b16 %v293
    %v917 = vunpack.c.h.b16 %v293
    %v918 = vunpack.c.l.b16 %v294
    %v919 = vunpack.c.h.b16 %v294
    %v920 = vunpack.c.l.b16 %v295
    %v921 = vunpack.c.h.b16 %v295
    %v922 = vunpack.c.l.b16 %v296
    %v923 = vunpack.c.h.b16 %v296
    %v924 = vunpack.c.l.b16 %v297
    %v925 = vunpack.c.h.b16 %v297
    %v926 = vunpack.c.l.b16 %v298
    %v927 = vunpack.c.h.b16 %v298
    %v928 = vunpack.c.l.b16 %v299
    %v929 = vunpack.c.h.b16 %v299
    %v930 = vunpack.c.l.b16 %v300
    %v931 = vunpack.c.h.b16 %v300
    %v932 = vunpack.c.l.b16 %v301
    %v933 = vunpack.c.h.b16 %v301
    %v934 = vunpack.c.l.b16 %v302
    %v935 = vunpack.c.h.b16 %v302
    %v936 = vunpack.c.l.b16 %v303
    %v937 = vunpack.c.h.b16 %v303
    %v938 = vunpack.c.l.b16 %v304
    %v939 = vunpack.c.h.b16 %v304
    %v940 = vunpack.c.l.b16 %v305
    %v941 = vunpack.c.h.b16 %v305
    %v942 = vunpack.c.l.b16 %v306
    %v943 = vunpack.c.h.b16 %v306
    %v944 = vunpack.c.l.b16 %v307
    %v945 = vunpack.c.h.b16 %v307
    %v946 = vunpack.c.l.b16 %v308
    %v947 = vunpack.c.h.b16 %v308
    %v948 = vunpack.c.l.b16 %v309
    %v949 = vunpack.c.h.b16 %v309
    %v950 = vunpack.c.l.b16 %v310
    %v951 = vunpack.c.h.b16 %v310
    %v952 = vunpack.c.l.b16 %v311
    %v953 = vunpack.c.h.b16 %v311
    %v954 = vunpack.c.l.b16 %v312
    %v955 = vunpack.c.h.b16 %v312
    %v956 = vunpack.c.l.b16 %v313
    %v957 = vunpack.c.h.b16 %v313
    %v958 = vunpack.c.l.b16 %v314
    %v959 = vunpack.c.h.b16 %v314
    %v960 = vunpack.c.l.b16 %v315
    %v961 = vunpack.c.h.b16 %v315
    %v962 = vunpack.c.l.b16 %v316
    %v963 = vunpack.c.h.b16 %v316
    %v964 = vunpack.c.l.b16 %v317
    %v965 = vunpack.c.h.b16 %v317
    %v966 = vunpack.c.l.b16 %v318
    %v967 = vunpack.c.h.b16 %v318
    %v968 = vunpack.c.l.b16 %v319
    %v969 = vunpack.c.h.b16 %v319
    %v970 = vunpack.c.l.b16 %v320
    %v971 = vunpack.c.h.b16 %v320
    %v972 = vunpack.c.l.b16 %v321
    %v973 = vunpack.c.h.b16 %v321
    %v974 = vunpack.c.l.b16 %v322
    %v975 = vunpack.c.h.b16 %v322
    %v976 = vunpack.c.l.b16 %v323
    %v977 = vunpack.c.h.b16 %v323
    %v978 = vunpack.c.l.b16 %v324
    %v979 = vunpack.c.h.b16 %v324
    %v980 = vunpack.c.l.b16 %v325
    %v981 = vunpack.c.h.b16 %v325
    %v982 = vunpack.c.l.b16 %v326
    %v983 = vunpack.c.h.b16 %v326
    %v984 = vunpack.c.l.b16 %v327
    %v985 = vunpack.c.h.b16 %v327
    %v986 = vunpack.c.l.b16 %v328
    %v987 = vunpack.c.h.b16 %v328
    %v988 = vunpack.c.l.b16 %v329
    %v989 = vunpack.c.h.b16 %v329
    %v990 = vunpack.c.l.b16 %v330
    %v991 = vunpack.c.h.b16 %v330
    %v992 = vunpack.c.l.b16 %v331
    %v993 = vunpack.c.h.b16 %v331
    %v994 = vunpack.c.l.b16 %v332
    %v995 = vunpack.c.h.b16 %v332
    %v996 = vunpack.c.l.b16 %v333
    %v997 = vunpack.c.h.b16 %v333
    %v998 = vunpack.c.l.b16 %v334
    %v999 = vunpack.c.h.b16 %v334
    %v1000 = vunpack.c.l.b16 %v335
    %v1001 = vunpack.c.h.b16 %v335
    %v1002 = vunpack.c.l.b16 %v336
    %v1003 = vunpack.c.h.b16 %v336
    %v1004 = vunpack.c.l.b16 %v337
    %v1005 = vunpack.c.h.b16 %v337
    %v1006 = vunpack.c.l.b16 %v338
    %v1007 = vunpack.c.h.b16 %v338
    %v1008 = vunpack.c.l.b16 %v339
    %v1009 = vunpack.c.h.b16 %v339
    %v1010 = vunpack.c.l.b16 %v340
    %v1011 = vunpack.c.h.b16 %v340
    %v1012 = vunpack.c.l.b16 %v341
    %v1013 = vunpack.c.h.b16 %v341
    %v1014 = vunpack.c.l.b16 %v342
    %v1015 = vunpack.c.h.b16 %v342
    %v1016 = vunpack.c.l.b16 %v343
    %v1017 = vunpack.c.h.b16 %v343
    %v1018 = vunpack.c.l.b16 %v344
    %v1019 = vunpack.c.h.b16 %v344
    %v1020 = vunpack.c.l.b16 %v345
    %v1021 = vunpack.c.h.b16 %v345
    %v1022 = vunpack.c.l.b16 %v346
    %v1023 = vunpack.c.h.b16 %v346
    %v1024 = vunpack.c.l.b16 %v347
    %v1025 = vunpack.c.h.b16 %v347
    %v1026 = vunpack.c.l.b16 %v348
    %v1027 = vunpack.c.h.b16 %v348
    %v1028 = vunpack.c.l.b16 %v349
    %v1029 = vunpack.c.h.b16 %v349
    %v1030 = vunpack.c.l.b16 %v350
    %v1031 = vunpack.c.h.b16 %v350
    %v1032 = vunpack.c.l.b16 %v351
    %v1033 = vunpack.c.h.b16 %v351
    %v1034 = vunpack.c.l.b16 %v352
    %v1035 = vunpack.c.h.b16 %v352
    %v1036 = vunpack.c.l.b16 %v353
    %v1037 = vunpack.c.h.b16 %v353
    %v1038 = vunpack.c.l.b16 %v354
    %v1039 = vunpack.c.h.b16 %v354
    %v1040 = vunpack.c.l.b16 %v355
    %v1041 = vunpack.c.h.b16 %v355
    %v1042 = vunpack.c.l.b16 %v356
    %v1043 = vunpack.c.h.b16 %v356
    %v1044 = vunpack.c.l.b16 %v357
    %v1045 = vunpack.c.h.b16 %v357
    %v1046 = vunpack.c.l.b16 %v358
    %v1047 = vunpack.c.h.b16 %v358
    %v1048 = vunpack.c.l.b16 %v359
    %v1049 = vunpack.c.h.b16 %v359
    %v1050 = vunpack.c.l.b16 %v360
    %v1051 = vunpack.c.h.b16 %v360
    %v1052 = vunpack.c.l.b16 %v361
    %v1053 = vunpack.c.h.b16 %v361
    %v1054 = vunpack.c.l.b16 %v362
    %v1055 = vunpack.c.h.b16 %v362
    %v1056 = vunpack.c.l.b16 %v363
    %v1057 = vunpack.c.h.b16 %v363
    %v1058 = vpack.c.b16 %v614, %v610
    %v1059 = vpack.c.b16 %v615, %v611
    %v1060 = vpack.c.b16 %v616, %v612
    %v1061 = vpack.c.b16 %v617, %v613
    %v1062 = vpack.c.b16 %v622, %v618
    %v1063 = vpack.c.b16 %v623, %v619
    %v1064 = vpack.c.b16 %v624, %v620
    %v1065 = vpack.c.b16 %v625, %v621
    %v1066 = vpack.c.b16 %v630, %v626
    %v1067 = vpack.c.b16 %v631, %v627
    %v1068 = vpack.c.b16 %v632, %v628
    %v1069 = vpack.c.b16 %v633, %v629
    %v1070 = vpack.c.b16 %v638, %v634
    %v1071 = vpack.c.b16 %v639, %v635
    %v1072 = vpack.c.b16 %v640, %v636
    %v1073 = vpack.c.b16 %v641, %v637
    %v1074 = vpack.c.b16 %v646, %v642
    %v1075 = vpack.c.b16 %v647, %v643
    %v1076 = vpack.c.b16 %v648, %v644
    %v1077 = vpack.c.b16 %v649, %v645
    %v1078 = vpack.c.b16 %v654, %v650
    %v1079 = vpack.c.b16 %v655, %v651
    %v1080 = vpack.c.b16 %v656, %v652
    %v1081 = vpack.c.b16 %v657, %v653
    %v1082 = vpack.c.b16 %v662, %v658
    %v1083 = vpack.c.b16 %v663, %v659
    %v1084 = vpack.c.b16 %v664, %v660
    %v1085 = vpack.c.b16 %v665, %v661
    %v1086 = vpack.c.b16 %v670, %v666
    %v1087 = vpack.c.b16 %v671, %v667
    %v1088 = vpack.c.b16 %v672, %v668
    %v1089 = vpack.c.b16 %v673, %v669
    %v1090 = vpack.c.b16 %v678, %v674
    %v1091 = vpack.c.b16 %v679, %v675
    %v1092 = vpack.c.b16 %v680, %v676
    %v1093 = vpack.c.b16 %v681, %v677
    %v1094 = vpack.c.b16 %v686, %v682
    %v1095 = vpack.c.b16 %v687, %v683
    %v1096 = vpack.c.b16 %v688, %v684
    %v1097 = vpack.c.b16 %v689, %v685
    %v1098 = vpack.c.b16 %v694, %v690
    %v1099 = vpack.c.b16 %v695, %v691
    %v1100 = vpack.c.b16 %v696, %v692
    %v1101 = vpack.c.b16 %v697, %v693
    %v1102 = vpack.c.b16 %v702, %v698
    %v1103 = vpack.c.b16 %v703, %v699
    %v1104 = vpack.c.b16 %v704, %v700
    %v1105 = vpack.c.b16 %v705, %v701
    %v1106 = vpack.c.b16 %v710, %v706
    %v1107 = vpack.c.b16 %v711, %v707
    %v1108 = vpack.c.b16 %v712, %v708
    %v1109 = vpack.c.b16 %v713, %v709
    %v1110 = vpack.c.b16 %v718, %v714
    %v1111 = vpack.c.b16 %v719, %v715
    %v1112 = vpack.c.b16 %v720, %v716
    %v1113 = vpack.c.b16 %v721, %v717
    %v1114 = vpack.c.b16 %v726, %v722
    %v1115 = vpack.c.b16 %v727, %v723
    %v1116 = vpack.c.b16 %v728, %v724
    %v1117 = vpack.c.b16 %v729, %v725
    %v1118 = vpack.c.b16 %v734, %v730
    %v1119 = vpack.c.b16 %v735, %v731
    %v1120 = vpack.c.b16 %v736, %v732
    %v1121 = vpack.c.b16 %v737, %v733
    %v1122 = vpack.c.b16 %v742, %v738
    %v1123 = vpack.c.b16 %v743, %v739
    %v1124 = vpack.c.b16 %v744, %v740
    %v1125 = vpack.c.b16 %v745, %v741
    %v1126 = vpack.c.b16 %v750, %v746
    %v1127 = vpack.c.b16 %v751, %v747
    %v1128 = vpack.c.b16 %v752, %v748
    %v1129 = vpack.c.b16 %v753, %v749
    %v1130 = vpack.c.b16 %v758, %v754
    %v1131 = vpack.c.b16 %v759, %v755
    %v1132 = vpack.c.b16 %v760, %v756
    %v1133 = vpack.c.b16 %v761, %v757
    %v1134 = vpack.c.b16 %v766, %v762
    %v1135 = vpack.c.b16 %v767, %v763
    %v1136 = vpack.c.b16 %v768, %v764
    %v1137 = vpack.c.b16 %v769, %v765
    %v1138 = vpack.c.b16 %v774, %v770
    %v1139 = vpack.c.b16 %v775, %v771
    %v1140 = vpack.c.b16 %v776, %v772
    %v1141 = vpack.c.b16 %v777, %v773
    %v1142 = vpack.c.b16 %v782, %v778
    %v1143 = vpack.c.b16 %v783, %v779
    %v1144 = vpack.c.b16 %v784, %v780
    %v1145 = vpack.c.b16 %v785, %v781
    %v1146 = vpack.c.b16 %v790, %v786
    %v1147 = vpack.c.b16 %v791, %v787
    %v1148 = vpack.c.b16 %v792, %v788
    %v1149 = vpack.c.b16 %v793, %v789
    %v1150 = vpack.c.b16 %v798, %v794
    %v1151 = vpack.c.b16 %v799, %v795
    %v1152 = vpack.c.b16 %v800, %v796
    %v1153 = vpack.c.b16 %v801, %v797
    %v1154 = vpack.c.b16 %v806, %v802
    %v1155 = vpack.c.b16 %v807, %v803
    %v1156 = vpack.c.b16 %v808, %v804
    %v1157 = vpack.c.b16 %v809, %v805
    %v1158 = vpack.c.b16 %v814, %v810
    %v1159 = vpack.c.b16 %v815, %v811
    %v1160 = vpack.c.b16 %v816, %v812
    %v1161 = vpack.c.b16 %v817, %v813
    %v1162 = vpack.c.b16 %v822, %v818
    %v1163 = vpack.c.b16 %v823, %v819
    %v1164 = vpack.c.b16 %v824, %v820
    %v1165 = vpack.c.b16 %v825, %v821
    %v1166 = vpack.c.b16 %v830, %v826
    %v1167 = vpack.c.b16 %v831, %v827
    %v1168 = vpack.c.b16 %v832, %v828
    %v1169 = vpack.c.b16 %v833, %v829
    %v1170 = vpack.c.b16 %v838, %v834
    %v1171 = vpack.c.b16 %v839, %v835
    %v1172 = vpack.c.b16 %v840, %v836
    %v1173 = vpack.c.b16 %v841, %v837
    %v1174 = vpack.c.b16 %v846, %v842
    %v1175 = vpack.c.b16 %v847, %v843
    %v1176 = vpack.c.b16 %v848, %v844
    %v1177 = vpack.c.b16 %v849, %v845
    %v1178 = vpack.c.b16 %v854, %v850
    %v1179 = vpack.c.b16 %v855, %v851
    %v1180 = vpack.c.b16 %v856, %v852
    %v1181 = vpack.c.b16 %v857, %v853
    %v1182 = vpack.c.b16 %v862, %v858
    %v1183 = vpack.c.b16 %v863, %v859
    %v1184 = vpack.c.b16 %v864, %v860
    %v1185 = vpack.c.b16 %v865, %v861
    %v1186 = vpack.c.b16 %v870, %v866
    %v1187 = vpack.c.b16 %v871, %v867
    %v1188 = vpack.c.b16 %v872, %v868
    %v1189 = vpack.c.b16 %v873, %v869
    %v1190 = vpack.c.b16 %v878, %v874
    %v1191 = vpack.c.b16 %v879, %v875
    %v1192 = vpack.c.b16 %v880, %v876
    %v1193 = vpack.c.b16 %v881, %v877
    %v1194 = vpack.c.b16 %v886, %v882
    %v1195 = vpack.c.b16 %v887, %v883
    %v1196 = vpack.c.b16 %v888, %v884
    %v1197 = vpack.c.b16 %v889, %v885
    %v1198 = vpack.c.b16 %v894, %v890
    %v1199 = vpack.c.b16 %v895, %v891
    %v1200 = vpack.c.b16 %v896, %v892
    %v1201 = vpack.c.b16 %v897, %v893
    %v1202 = vpack.c.b16 %v902, %v898
    %v1203 = vpack.c.b16 %v903, %v899
    %v1204 = vpack.c.b16 %v904, %v900
    %v1205 = vpack.c.b16 %v905, %v901
    %v1206 = vpack.c.b16 %v910, %v906
    %v1207 = vpack.c.b16 %v911, %v907
    %v1208 = vpack.c.b16 %v912, %v908
    %v1209 = vpack.c.b16 %v913, %v909
    %v1210 = vpack.c.b16 %v918, %v914
    %v1211 = vpack.c.b16 %v919, %v915
    %v1212 = vpack.c.b16 %v920, %v916
    %v1213 = vpack.c.b16 %v921, %v917
    %v1214 = vpack.c.b16 %v926, %v922
    %v1215 = vpack.c.b16 %v927, %v923
    %v1216 = vpack.c.b16 %v928, %v924
    %v1217 = vpack.c.b16 %v929, %v925
    %v1218 = vpack.c.b16 %v934, %v930
    %v1219 = vpack.c.b16 %v935, %v931
    %v1220 = vpack.c.b16 %v936, %v932
    %v1221 = vpack.c.b16 %v937, %v933
    %v1222 = vpack.c.b16 %v942, %v938
    %v1223 = vpack.c.b16 %v943, %v939
    %v1224 = vpack.c.b16 %v944, %v940
    %v1225 = vpack.c.b16 %v945, %v941
    %v1226 = vpack.c.b16 %v950, %v946
    %v1227 = vpack.c.b16 %v951, %v947
    %v1228 = vpack.c.b16 %v952, %v948
    %v1229 = vpack.c.b16 %v953, %v949
    %v1230 = vpack.c.b16 %v958, %v954
    %v1231 = vpack.c.b16 %v959, %v955
    %v1232 = vpack.c.b16 %v960, %v956
    %v1233 = vpack.c.b16 %v961, %v957
    %v1234 = vpack.c.b16 %v966, %v962
    %v1235 = vpack.c.b16 %v967, %v963
    %v1236 = vpack.c.b16 %v968, %v964
    %v1237 = vpack.c.b16 %v969, %v965
    %v1238 = vpack.c.b16 %v974, %v970
    %v1239 = vpack.c.b16 %v975, %v971
    %v1240 = vpack.c.b16 %v976, %v972
    %v1241 = vpack.c.b16 %v977, %v973
    %v1242 = vpack.c.b16 %v982, %v978
    %v1243 = vpack.c.b16 %v983, %v979
    %v1244 = vpack.c.b16 %v984, %v980
    %v1245 = vpack.c.b16 %v985, %v981
    %v1246 = vpack.c.b16 %v990, %v986
    %v1247 = vpack.c.b16 %v991, %v987
    %v1248 = vpack.c.b16 %v992, %v988
    %v1249 = vpack.c.b16 %v993, %v989
    %v1250 = vpack.c.b16 %v998, %v994
    %v1251 = vpack.c.b16 %v999, %v995
    %v1252 = vpack.c.b16 %v1000, %v996
    %v1253 = vpack.c.b16 %v1001, %v997
    %v1254 = vpack.c.b16 %v1006, %v1002
    %v1255 = vpack.c.b16 %v1007, %v1003
    %v1256 = vpack.c.b16 %v1008, %v1004
    %v1257 = vpack.c.b16 %v1009, %v1005
    %v1258 = vpack.c.b16 %v1014, %v1010
    %v1259 = vpack.c.b16 %v1015, %v1011
    %v1260 = vpack.c.b16 %v1016, %v1012
    %v1261 = vpack.c.b16 %v1017, %v1013
    %v1262 = vpack.c.b16 %v1022, %v1018
    %v1263 = vpack.c.b16 %v1023, %v1019
    %v1264 = vpack.c.b16 %v1024, %v1020
    %v1265 = vpack.c.b16 %v1025, %v1021
    %v1266 = vpack.c.b16 %v1030, %v1026
    %v1267 = vpack.c.b16 %v1031, %v1027
    %v1268 = vpack.c.b16 %v1032, %v1028
    %v1269 = vpack.c.b16 %v1033, %v1029
    %v1270 = vpack.c.b16 %v1038, %v1034
    %v1271 = vpack.c.b16 %v1039, %v1035
    %v1272 = vpack.c.b16 %v1040, %v1036
    %v1273 = vpack.c.b16 %v1041, %v1037
    %v1274 = vpack.c.b16 %v1046, %v1042
    %v1275 = vpack.c.b16 %v1047, %v1043
    %v1276 = vpack.c.b16 %v1048, %v1044
    %v1277 = vpack.c.b16 %v1049, %v1045
    %v1278 = vpack.c.b16 %v1054, %v1050
    %v1279 = vpack.c.b16 %v1055, %v1051
    %v1280 = vpack.c.b16 %v1056, %v1052
    %v1281 = vpack.c.b16 %v1057, %v1053
    %1506 = vmatprep.subr.bf16.mxu0 %v1087
    %1507 = vmatpush1.bf16.msra.mxu0 %v1086
    %1508 = vmatprep.subr.bf16.mxu0 %v1083
    %1509 = vmatpush1.bf16.msra.mxu0 %v1082
    %1510 = vmatprep.subr.bf16.mxu0 %v1079
    %1511 = vmatpush1.bf16.msra.mxu0 %v1078
    %1512 = vmatprep.subr.bf16.mxu0 %v1075
    %1513 = vmatpush1.bf16.msra.mxu0 %v1074
    %1514 = vmatprep.subr.bf16.mxu0 %v1071
    %1515 = vmatpush1.bf16.msra.mxu0 %v1070
    %1516 = vmatprep.subr.bf16.mxu0 %v1067
    %1517 = vmatpush1.bf16.msra.mxu0 %v1066
    %1518 = vmatprep.subr.bf16.mxu0 %v1063
    %1519 = vmatpush1.bf16.msra.mxu0 %v1062
    %1520 = vmatprep.subr.bf16.mxu0 %v1059
    %1521 = vmatpush1.bf16.msra.mxu0 %v1058
    %1522 = vmatprep.subr.bf16.mxu0 %v1119
    %1523 = vmatpush2.bf16.msra.mxu0 %v1118
    %1524 = vmatprep.subr.bf16.mxu0 %v1115
    %1525 = vmatpush2.bf16.msra.mxu0 %v1114
    %1526 = vmatprep.subr.bf16.mxu0 %v1111
    %1527 = vmatpush2.bf16.msra.mxu0 %v1110
    %1528 = vmatprep.subr.bf16.mxu0 %v1107
    %1529 = vmatpush2.bf16.msra.mxu0 %v1106
    %1530 = vmatprep.subr.bf16.mxu0 %v1103
    %1531 = vmatpush2.bf16.msra.mxu0 %v1102
    %1532 = vmatprep.subr.bf16.mxu0 %v1099
    %1533 = vmatpush2.bf16.msra.mxu0 %v1098
    %1534 = vmatprep.subr.bf16.mxu0 %v1095
    %1535 = vmatpush2.bf16.msra.mxu0 %v1094
    %1536 = vmatprep.subr.bf16.mxu0 %v1091
    %1537 = vmatpush2.bf16.msra.mxu0 %v1090
    %1538 = vmatprep.mubr.bf16.mxu0 %v134
    %1539 = vmatmul.mubr.bf16.gmra.mxu0 %v133
    %v1540 = vpop.f32.mrf.mxu0
    %v1541 = vadd.f32 %v369, %v1540
    %v1542 = vpop.f32.mrf.mxu0
    %v1543 = vadd.f32 %v373, %v1542
    %v1544 = vpop.f32.mrf.mxu0
    %v1545 = vpop.f32.mrf.mxu0
    %1546 = vdwg.mxu0
    %1547 = vmatprep.subr.bf16.mxu0 %v1151
    %1548 = vmatpush1.bf16.msra.mxu0 %v1150
    %1549 = vmatprep.subr.bf16.mxu0 %v1147
    %1550 = vmatpush1.bf16.msra.mxu0 %v1146
    %1551 = vmatprep.subr.bf16.mxu0 %v1143
    %1552 = vmatpush1.bf16.msra.mxu0 %v1142
    %1553 = vmatprep.subr.bf16.mxu0 %v1139
    %1554 = vmatpush1.bf16.msra.mxu0 %v1138
    %1555 = vmatprep.subr.bf16.mxu0 %v1135
    %1556 = vmatpush1.bf16.msra.mxu0 %v1134
    %1557 = vmatprep.subr.bf16.mxu0 %v1131
    %1558 = vmatpush1.bf16.msra.mxu0 %v1130
    %1559 = vmatprep.subr.bf16.mxu0 %v1127
    %1560 = vmatpush1.bf16.msra.mxu0 %v1126
    %1561 = vmatprep.subr.bf16.mxu0 %v1123
    %1562 = vmatpush1.bf16.msra.mxu0 %v1122
    %1563 = vmatprep.subr.bf16.mxu0 %v1183
    %1564 = vmatpush2.bf16.msra.mxu0 %v1182
    %1565 = vmatprep.subr.bf16.mxu0 %v1179
    %1566 = vmatpush2.bf16.msra.mxu0 %v1178
    %1567 = vmatprep.subr.bf16.mxu0 %v1175
    %1568 = vmatpush2.bf16.msra.mxu0 %v1174
    %1569 = vmatprep.subr.bf16.mxu0 %v1171
    %1570 = vmatpush2.bf16.msra.mxu0 %v1170
    %1571 = vmatprep.subr.bf16.mxu0 %v1167
    %1572 = vmatpush2.bf16.msra.mxu0 %v1166
    %1573 = vmatprep.subr.bf16.mxu0 %v1163
    %1574 = vmatpush2.bf16.msra.mxu0 %v1162
    %1575 = vmatprep.subr.bf16.mxu0 %v1159
    %1576 = vmatpush2.bf16.msra.mxu0 %v1158
    %1577 = vmatprep.subr.bf16.mxu0 %v1155
    %1578 = vmatpush2.bf16.msra.mxu0 %v1154
    %1579 = vmatprep.mubr.bf16.mxu0 %v136
    %1580 = vmatmul.mubr.bf16.gmra.mxu0 %v135
    %v1581 = vpop.f32.mrf.mxu0
    %v1582 = vadd.f32 %v1541, %v1581
    %v1583 = vpop.f32.mrf.mxu0
    %v1584 = vadd.f32 %v1543, %v1583
    %v1585 = vpop.f32.mrf.mxu0
    %v1586 = vpop.f32.mrf.mxu0
    %1587 = vdwg.mxu0
    %1588 = vmatprep.subr.bf16.mxu0 %v1215
    %1589 = vmatpush1.bf16.msra.mxu0 %v1214
    %1590 = vmatprep.subr.bf16.mxu0 %v1211
    %1591 = vmatpush1.bf16.msra.mxu0 %v1210
    %1592 = vmatprep.subr.bf16.mxu0 %v1207
    %1593 = vmatpush1.bf16.msra.mxu0 %v1206
    %1594 = vmatprep.subr.bf16.mxu0 %v1203
    %1595 = vmatpush1.bf16.msra.mxu0 %v1202
    %1596 = vmatprep.subr.bf16.mxu0 %v1199
    %1597 = vmatpush1.bf16.msra.mxu0 %v1198
    %1598 = vmatprep.subr.bf16.mxu0 %v1195
    %1599 = vmatpush1.bf16.msra.mxu0 %v1194
    %1600 = vmatprep.subr.bf16.mxu0 %v1191
    %1601 = vmatpush1.bf16.msra.mxu0 %v1190
    %1602 = vmatprep.subr.bf16.mxu0 %v1187
    %1603 = vmatpush1.bf16.msra.mxu0 %v1186
    %1604 = vmatprep.subr.bf16.mxu0 %v1247
    %1605 = vmatpush2.bf16.msra.mxu0 %v1246
    %1606 = vmatprep.subr.bf16.mxu0 %v1243
    %1607 = vmatpush2.bf16.msra.mxu0 %v1242
    %1608 = vmatprep.subr.bf16.mxu0 %v1239
    %1609 = vmatpush2.bf16.msra.mxu0 %v1238
    %1610 = vmatprep.subr.bf16.mxu0 %v1235
    %1611 = vmatpush2.bf16.msra.mxu0 %v1234
    %1612 = vmatprep.subr.bf16.mxu0 %v1231
    %1613 = vmatpush2.bf16.msra.mxu0 %v1230
    %1614 = vmatprep.subr.bf16.mxu0 %v1227
    %1615 = vmatpush2.bf16.msra.mxu0 %v1226
    %1616 = vmatprep.subr.bf16.mxu0 %v1223
    %1617 = vmatpush2.bf16.msra.mxu0 %v1222
    %1618 = vmatprep.subr.bf16.mxu0 %v1219
    %1619 = vmatpush2.bf16.msra.mxu0 %v1218
    %1620 = vmatprep.mubr.bf16.mxu0 %v138
    %1621 = vmatmul.mubr.bf16.gmra.mxu0 %v137
    %v1622 = vpop.f32.mrf.mxu0
    %v1623 = vadd.f32 %v1582, %v1622
    %v1624 = vpop.f32.mrf.mxu0
    %v1625 = vadd.f32 %v1584, %v1624
    %v1626 = vpop.f32.mrf.mxu0
    %v1627 = vpop.f32.mrf.mxu0
    %1628 = vdwg.mxu0
    %1629 = vmatprep.subr.bf16.mxu0 %v1279
    %1630 = vmatpush1.bf16.msra.mxu0 %v1278
    %1631 = vmatprep.subr.bf16.mxu0 %v1275
    %1632 = vmatpush1.bf16.msra.mxu0 %v1274
    %1633 = vmatprep.subr.bf16.mxu0 %v1271
    %1634 = vmatpush1.bf16.msra.mxu0 %v1270
    %1635 = vmatprep.subr.bf16.mxu0 %v1267
    %1636 = vmatpush1.bf16.msra.mxu0 %v1266
    %1637 = vmatprep.subr.bf16.mxu0 %v1263
    %1638 = vmatpush1.bf16.msra.mxu0 %v1262
    %1639 = vmatprep.subr.bf16.mxu0 %v1259
    %1640 = vmatpush1.bf16.msra.mxu0 %v1258
    %1641 = vmatprep.subr.bf16.mxu0 %v1255
    %1642 = vmatpush1.bf16.msra.mxu0 %v1254
    %1643 = vmatprep.subr.bf16.mxu0 %v1251
    %1644 = vmatpush1.bf16.msra.mxu0 %v1250
    %1645 = vmatprep.subr.bf16.mxu0 0
    %1646 = vmatpush2.bf16.msra.mxu0 0
    %1647 = vmatprep.subr.bf16.mxu0 0
    %1648 = vmatpush2.bf16.msra.mxu0 0
    %1649 = vmatprep.subr.bf16.mxu0 0
    %1650 = vmatpush2.bf16.msra.mxu0 0
    %1651 = vmatprep.subr.bf16.mxu0 0
    %1652 = vmatpush2.bf16.msra.mxu0 0
    %1653 = vmatprep.subr.bf16.mxu0 0
    %1654 = vmatpush2.bf16.msra.mxu0 0
    %1655 = vmatprep.subr.bf16.mxu0 0
    %1656 = vmatpush2.bf16.msra.mxu0 0
    %1657 = vmatprep.subr.bf16.mxu0 0
    %1658 = vmatpush2.bf16.msra.mxu0 0
    %1659 = vmatprep.subr.bf16.mxu0 0
    %1660 = vmatpush2.bf16.msra.mxu0 0
    %1661 = vmatprep.mubr.bf16.mxu0 0
    %1662 = vmatmul.mubr.bf16.gmra.mxu0 %v139
    %v1663 = vpop.f32.mrf.mxu0
    %v1664 = vadd.f32 %v1623, %v1663
    %v1665 = vpop.f32.mrf.mxu0
    %v1666 = vadd.f32 %v1625, %v1665
    %v1667 = vpop.f32.mrf.mxu0
    %v1668 = vpop.f32.mrf.mxu0
    %1669 = vdwg.mxu0
    %1670 = vmatprep.subr.bf16.mxu0 %v1089
    %1671 = vmatpush1.bf16.msra.mxu0 %v1088
    %1672 = vmatprep.subr.bf16.mxu0 %v1085
    %1673 = vmatpush1.bf16.msra.mxu0 %v1084
    %1674 = vmatprep.subr.bf16.mxu0 %v1081
    %1675 = vmatpush1.bf16.msra.mxu0 %v1080
    %1676 = vmatprep.subr.bf16.mxu0 %v1077
    %1677 = vmatpush1.bf16.msra.mxu0 %v1076
    %1678 = vmatprep.subr.bf16.mxu0 %v1073
    %1679 = vmatpush1.bf16.msra.mxu0 %v1072
    %1680 = vmatprep.subr.bf16.mxu0 %v1069
    %1681 = vmatpush1.bf16.msra.mxu0 %v1068
    %1682 = vmatprep.subr.bf16.mxu0 %v1065
    %1683 = vmatpush1.bf16.msra.mxu0 %v1064
    %1684 = vmatprep.subr.bf16.mxu0 %v1061
    %1685 = vmatpush1.bf16.msra.mxu0 %v1060
    %1686 = vmatprep.subr.bf16.mxu0 %v1121
    %1687 = vmatpush2.bf16.msra.mxu0 %v1120
    %1688 = vmatprep.subr.bf16.mxu0 %v1117
    %1689 = vmatpush2.bf16.msra.mxu0 %v1116
    %1690 = vmatprep.subr.bf16.mxu0 %v1113
    %1691 = vmatpush2.bf16.msra.mxu0 %v1112
    %1692 = vmatprep.subr.bf16.mxu0 %v1109
    %1693 = vmatpush2.bf16.msra.mxu0 %v1108
    %1694 = vmatprep.subr.bf16.mxu0 %v1105
    %1695 = vmatpush2.bf16.msra.mxu0 %v1104
    %1696 = vmatprep.subr.bf16.mxu0 %v1101
    %1697 = vmatpush2.bf16.msra.mxu0 %v1100
    %1698 = vmatprep.subr.bf16.mxu0 %v1097
    %1699 = vmatpush2.bf16.msra.mxu0 %v1096
    %1700 = vmatprep.subr.bf16.mxu0 %v1093
    %1701 = vmatpush2.bf16.msra.mxu0 %v1092
    %1702 = vmatprep.mubr.bf16.mxu0 %v134
    %1703 = vmatmul.mubr.bf16.gmra.mxu0 %v133
    %v1704 = vpop.f32.mrf.mxu0
    %v1705 = vadd.f32 %v377, %v1704
    %v1706 = vpop.f32.mrf.mxu0
    %v1707 = vadd.f32 %v381, %v1706
    %v1708 = vpop.f32.mrf.mxu0
    %v1709 = vpop.f32.mrf.mxu0
    %1710 = vdwg.mxu0
    %1711 = vmatprep.subr.bf16.mxu0 %v1153
    %1712 = vmatpush1.bf16.msra.mxu0 %v1152
    %1713 = vmatprep.subr.bf16.mxu0 %v1149
    %1714 = vmatpush1.bf16.msra.mxu0 %v1148
    %1715 = vmatprep.subr.bf16.mxu0 %v1145
    %1716 = vmatpush1.bf16.msra.mxu0 %v1144
    %1717 = vmatprep.subr.bf16.mxu0 %v1141
    %1718 = vmatpush1.bf16.msra.mxu0 %v1140
    %1719 = vmatprep.subr.bf16.mxu0 %v1137
    %1720 = vmatpush1.bf16.msra.mxu0 %v1136
    %1721 = vmatprep.subr.bf16.mxu0 %v1133
    %1722 = vmatpush1.bf16.msra.mxu0 %v1132
    %1723 = vmatprep.subr.bf16.mxu0 %v1129
    %1724 = vmatpush1.bf16.msra.mxu0 %v1128
    %1725 = vmatprep.subr.bf16.mxu0 %v1125
    %1726 = vmatpush1.bf16.msra.mxu0 %v1124
    %1727 = vmatprep.subr.bf16.mxu0 %v1185
    %1728 = vmatpush2.bf16.msra.mxu0 %v1184
    %1729 = vmatprep.subr.bf16.mxu0 %v1181
    %1730 = vmatpush2.bf16.msra.mxu0 %v1180
    %1731 = vmatprep.subr.bf16.mxu0 %v1177
    %1732 = vmatpush2.bf16.msra.mxu0 %v1176
    %1733 = vmatprep.subr.bf16.mxu0 %v1173
    %1734 = vmatpush2.bf16.msra.mxu0 %v1172
    %1735 = vmatprep.subr.bf16.mxu0 %v1169
    %1736 = vmatpush2.bf16.msra.mxu0 %v1168
    %1737 = vmatprep.subr.bf16.mxu0 %v1165
    %1738 = vmatpush2.bf16.msra.mxu0 %v1164
    %1739 = vmatprep.subr.bf16.mxu0 %v1161
    %1740 = vmatpush2.bf16.msra.mxu0 %v1160
    %1741 = vmatprep.subr.bf16.mxu0 %v1157
    %1742 = vmatpush2.bf16.msra.mxu0 %v1156
    %1743 = vmatprep.mubr.bf16.mxu0 %v136
    %1744 = vmatmul.mubr.bf16.gmra.mxu0 %v135
    %v1745 = vpop.f32.mrf.mxu0
    %v1746 = vadd.f32 %v1705, %v1745
    %v1747 = vpop.f32.mrf.mxu0
    %v1748 = vadd.f32 %v1707, %v1747
    %v1749 = vpop.f32.mrf.mxu0
    %v1750 = vpop.f32.mrf.mxu0
    %1751 = vdwg.mxu0
    %1752 = vmatprep.subr.bf16.mxu0 %v1217
    %1753 = vmatpush1.bf16.msra.mxu0 %v1216
    %1754 = vmatprep.subr.bf16.mxu0 %v1213
    %1755 = vmatpush1.bf16.msra.mxu0 %v1212
    %1756 = vmatprep.subr.bf16.mxu0 %v1209
    %1757 = vmatpush1.bf16.msra.mxu0 %v1208
    %1758 = vmatprep.subr.bf16.mxu0 %v1205
    %1759 = vmatpush1.bf16.msra.mxu0 %v1204
    %1760 = vmatprep.subr.bf16.mxu0 %v1201
    %1761 = vmatpush1.bf16.msra.mxu0 %v1200
    %1762 = vmatprep.subr.bf16.mxu0 %v1197
    %1763 = vmatpush1.bf16.msra.mxu0 %v1196
    %1764 = vmatprep.subr.bf16.mxu0 %v1193
    %1765 = vmatpush1.bf16.msra.mxu0 %v1192
    %1766 = vmatprep.subr.bf16.mxu0 %v1189
    %1767 = vmatpush1.bf16.msra.mxu0 %v1188
    %1768 = vmatprep.subr.bf16.mxu0 %v1249
    %1769 = vmatpush2.bf16.msra.mxu0 %v1248
    %1770 = vmatprep.subr.bf16.mxu0 %v1245
    %1771 = vmatpush2.bf16.msra.mxu0 %v1244
    %1772 = vmatprep.subr.bf16.mxu0 %v1241
    %1773 = vmatpush2.bf16.msra.mxu0 %v1240
    %1774 = vmatprep.subr.bf16.mxu0 %v1237
    %1775 = vmatpush2.bf16.msra.mxu0 %v1236
    %1776 = vmatprep.subr.bf16.mxu0 %v1233
    %1777 = vmatpush2.bf16.msra.mxu0 %v1232
    %1778 = vmatprep.subr.bf16.mxu0 %v1229
    %1779 = vmatpush2.bf16.msra.mxu0 %v1228
    %1780 = vmatprep.subr.bf16.mxu0 %v1225
    %1781 = vmatpush2.bf16.msra.mxu0 %v1224
    %1782 = vmatprep.subr.bf16.mxu0 %v1221
    %1783 = vmatpush2.bf16.msra.mxu0 %v1220
    %1784 = vmatprep.mubr.bf16.mxu0 %v138
    %1785 = vmatmul.mubr.bf16.gmra.mxu0 %v137
    %v1786 = vpop.f32.mrf.mxu0
    %v1787 = vadd.f32 %v1746, %v1786
    %v1788 = vpop.f32.mrf.mxu0
    %v1789 = vadd.f32 %v1748, %v1788
    %v1790 = vpop.f32.mrf.mxu0
    %v1791 = vpop.f32.mrf.mxu0
    %1792 = vdwg.mxu0
    %1793 = vmatprep.subr.bf16.mxu0 %v1281
    %1794 = vmatpush1.bf16.msra.mxu0 %v1280
    %1795 = vmatprep.subr.bf16.mxu0 %v1277
    %1796 = vmatpush1.bf16.msra.mxu0 %v1276
    %1797 = vmatprep.subr.bf16.mxu0 %v1273
    %1798 = vmatpush1.bf16.msra.mxu0 %v1272
    %1799 = vmatprep.subr.bf16.mxu0 %v1269
    %1800 = vmatpush1.bf16.msra.mxu0 %v1268
    %1801 = vmatprep.subr.bf16.mxu0 %v1265
    %1802 = vmatpush1.bf16.msra.mxu0 %v1264
    %1803 = vmatprep.subr.bf16.mxu0 %v1261
    %1804 = vmatpush1.bf16.msra.mxu0 %v1260
    %1805 = vmatprep.subr.bf16.mxu0 %v1257
    %1806 = vmatpush1.bf16.msra.mxu0 %v1256
    %1807 = vmatprep.subr.bf16.mxu0 %v1253
    %1808 = vmatpush1.bf16.msra.mxu0 %v1252
    %1809 = vmatprep.subr.bf16.mxu0 0
    %1810 = vmatpush2.bf16.msra.mxu0 0
    %1811 = vmatprep.subr.bf16.mxu0 0
    %1812 = vmatpush2.bf16.msra.mxu0 0
    %1813 = vmatprep.subr.bf16.mxu0 0
    %1814 = vmatpush2.bf16.msra.mxu0 0
    %1815 = vmatprep.subr.bf16.mxu0 0
    %1816 = vmatpush2.bf16.msra.mxu0 0
    %1817 = vmatprep.subr.bf16.mxu0 0
    %1818 = vmatpush2.bf16.msra.mxu0 0
    %1819 = vmatprep.subr.bf16.mxu0 0
    %1820 = vmatpush2.bf16.msra.mxu0 0
    %1821 = vmatprep.subr.bf16.mxu0 0
    %1822 = vmatpush2.bf16.msra.mxu0 0
    %1823 = vmatprep.subr.bf16.mxu0 0
    %1824 = vmatpush2.bf16.msra.mxu0 0
    %1825 = vmatprep.mubr.bf16.mxu0 0
    %1826 = vmatmul.mubr.bf16.gmra.mxu0 %v139
    %v1827 = vpop.f32.mrf.mxu0
    %v1828 = vadd.f32 %v1787, %v1827
    %v1829 = vpop.f32.mrf.mxu0
    %v1830 = vadd.f32 %v1789, %v1829
    %v1831 = vpop.f32.mrf.mxu0
    %v1832 = vpop.f32.mrf.mxu0
    %1833 = vdwg.mxu0
    %vm1834 = vcmp.ge.f32.partialorder %v1664, 0.0
    %vm1835 = vcmp.ge.f32.partialorder %v1666, 0.0
    %vm1836 = vcmp.ge.f32.partialorder %v1828, 0.0
    %vm1837 = vcmp.ge.f32.partialorder %v1830, 0.0
    %v1838 = vmul.f32 %v1664, 0.01
    %v1839 = vmul.f32 %v1666, 0.01
    %v1840 = vmul.f32 %v1828, 0.01
    %v1841 = vmul.f32 %v1830, 0.01
    %v1842 = vsel %vm1834, %v1664, %v1838
    %v1843 = vsel %vm1835, %v1666, %v1839
    %v1844 = vsel %vm1836, %v1828, %v1840
    %v1845 = vsel %vm1837, %v1830, %v1841
    %v1846 = vpack.c.bf16 %v1842, %v1842
    %v1847 = vpack.c.bf16 %v1843, %v1843
    %v1848 = vpack.c.bf16 %v1844, %v1844
    %v1849 = vpack.c.bf16 %v1845, %v1845
    %v1850 = vld [vmem:[#allocation8] sm:$0xff]
    %v1851 = vld [vmem:[#allocation8 + $0x8] sm:$0xff]
    %v1852 = vld [vmem:[#allocation8 + $0x10] sm:$0xff]
    %v1853 = vld [vmem:[#allocation8 + $0x18] sm:$0xff]
    %v1854 = vld [vmem:[#allocation8 + $0x20] sm:$0xff]
    %v1855 = vld [vmem:[#allocation8 + $0x28] sm:$0xff]
    %v1856 = vld [vmem:[#allocation8 + $0x30] sm:$0xff]
    %v1857 = vld [vmem:[#allocation8 + $0x38] sm:$0xff]
    %v1858 = vld [vmem:[#allocation8 + $0x40] sm:$0xff]
    %v1859 = vld [vmem:[#allocation8 + $0x48] sm:$0xff]
    %v1860 = vld [vmem:[#allocation8 + $0x50] sm:$0xff]
    %v1861 = vld [vmem:[#allocation8 + $0x58] sm:$0xff]
    %v1862 = vld [vmem:[#allocation8 + $0x60] sm:$0xff]
    %v1863 = vld [vmem:[#allocation8 + $0x68] sm:$0xff]
    %v1864 = vld [vmem:[#allocation8 + $0x70] sm:$0xff]
    %v1865 = vld [vmem:[#allocation8 + $0x78] sm:$0xff]
    %v1866 = vld [vmem:[#allocation8 + $0x80] sm:$0xff]
    %v1867 = vld [vmem:[#allocation8 + $0x88] sm:$0xff]
    %v1868 = vld [vmem:[#allocation8 + $0x90] sm:$0xff]
    %v1869 = vld [vmem:[#allocation8 + $0x98] sm:$0xff]
    %v1870 = vld [vmem:[#allocation8 + $0xa0] sm:$0xff]
    %v1871 = vld [vmem:[#allocation8 + $0xa8] sm:$0xff]
    %v1872 = vld [vmem:[#allocation8 + $0xb0] sm:$0xff]
    %v1873 = vld [vmem:[#allocation8 + $0xb8] sm:$0xff]
    %v1874 = vld [vmem:[#allocation8 + $0xc0] sm:$0xff]
    %v1875 = vld [vmem:[#allocation8 + $0xc8] sm:$0xff]
    %v1876 = vld [vmem:[#allocation8 + $0xd0] sm:$0xff]
    %v1877 = vld [vmem:[#allocation8 + $0xd8] sm:$0xff]
    %v1878 = vld [vmem:[#allocation8 + $0xe0] sm:$0xff]
    %v1879 = vld [vmem:[#allocation8 + $0xe8] sm:$0xff]
    %v1880 = vld [vmem:[#allocation8 + $0xf0] sm:$0xff]
    %v1881 = vld [vmem:[#allocation8 + $0xf8] sm:$0xff]
    %v1882 = vld [vmem:[#allocation8 + $0x100] sm:$0xff]
    %v1883 = vld [vmem:[#allocation8 + $0x108] sm:$0xff]
    %v1884 = vld [vmem:[#allocation8 + $0x110] sm:$0xff]
    %v1885 = vld [vmem:[#allocation8 + $0x118] sm:$0xff]
    %v1886 = vld [vmem:[#allocation8 + $0x120] sm:$0xff]
    %v1887 = vld [vmem:[#allocation8 + $0x128] sm:$0xff]
    %v1888 = vld [vmem:[#allocation8 + $0x130] sm:$0xff]
    %v1889 = vld [vmem:[#allocation8 + $0x138] sm:$0xff]
    %v1890 = vld [vmem:[#allocation8 + $0x140] sm:$0xff]
    %v1891 = vld [vmem:[#allocation8 + $0x148] sm:$0xff]
    %v1892 = vld [vmem:[#allocation8 + $0x150] sm:$0xff]
    %v1893 = vld [vmem:[#allocation8 + $0x158] sm:$0xff]
    %v1894 = vld [vmem:[#allocation8 + $0x160] sm:$0xff]
    %v1895 = vld [vmem:[#allocation8 + $0x168] sm:$0xff]
    %v1896 = vld [vmem:[#allocation8 + $0x170] sm:$0xff]
    %v1897 = vld [vmem:[#allocation8 + $0x178] sm:$0xff]
    %v1898 = vld [vmem:[#allocation8 + $0x180] sm:$0xff]
    %v1899 = vld [vmem:[#allocation8 + $0x188] sm:$0xff]
    %v1900 = vld [vmem:[#allocation8 + $0x190] sm:$0xff]
    %v1901 = vld [vmem:[#allocation8 + $0x198] sm:$0xff]
    %v1902 = vld [vmem:[#allocation8 + $0x1a0] sm:$0xff]
    %v1903 = vld [vmem:[#allocation8 + $0x1a8] sm:$0xff]
    %v1904 = vld [vmem:[#allocation8 + $0x1b0] sm:$0xff]
    %v1905 = vld [vmem:[#allocation8 + $0x1b8] sm:$0xff]
    %v1906 = vld [vmem:[#allocation8 + $0x1c0] sm:$0xff]
    %v1907 = vld [vmem:[#allocation8 + $0x1c8] sm:$0xff]
    %v1908 = vld [vmem:[#allocation8 + $0x1d0] sm:$0xff]
    %v1909 = vld [vmem:[#allocation8 + $0x1d8] sm:$0xff]
    %v1910 = vld [vmem:[#allocation8 + $0x1e0] sm:$0xff]
    %v1911 = vld [vmem:[#allocation8 + $0x1e8] sm:$0xff]
    %v1912 = vld [vmem:[#allocation8 + $0x1f0] sm:$0xff]
    %v1913 = vld [vmem:[#allocation8 + $0x1f8] sm:$0xff]
    %v1914 = vld [vmem:[#allocation8 + $0x200] sm:$0xff]
    %v1915 = vld [vmem:[#allocation8 + $0x208] sm:$0xff]
    %v1916 = vld [vmem:[#allocation8 + $0x210] sm:$0xff]
    %v1917 = vld [vmem:[#allocation8 + $0x218] sm:$0xff]
    %v1918 = vld [vmem:[#allocation8 + $0x220] sm:$0xff]
    %v1919 = vld [vmem:[#allocation8 + $0x228] sm:$0xff]
    %v1920 = vld [vmem:[#allocation8 + $0x230] sm:$0xff]
    %v1921 = vld [vmem:[#allocation8 + $0x238] sm:$0xff]
    %v1922 = vld [vmem:[#allocation8 + $0x240] sm:$0xff]
    %v1923 = vld [vmem:[#allocation8 + $0x248] sm:$0xff]
    %v1924 = vld [vmem:[#allocation8 + $0x250] sm:$0xff]
    %v1925 = vld [vmem:[#allocation8 + $0x258] sm:$0xff]
    %v1926 = vld [vmem:[#allocation8 + $0x260] sm:$0xff]
    %v1927 = vld [vmem:[#allocation8 + $0x268] sm:$0xff]
    %v1928 = vld [vmem:[#allocation8 + $0x270] sm:$0xff]
    %v1929 = vld [vmem:[#allocation8 + $0x278] sm:$0xff]
    %v1930 = vld [vmem:[#allocation8 + $0x280] sm:$0xff]
    %v1931 = vld [vmem:[#allocation8 + $0x288] sm:$0xff]
    %v1932 = vld [vmem:[#allocation8 + $0x290] sm:$0xff]
    %v1933 = vld [vmem:[#allocation8 + $0x298] sm:$0xff]
    %v1934 = vld [vmem:[#allocation8 + $0x2a0] sm:$0xff]
    %v1935 = vld [vmem:[#allocation8 + $0x2a8] sm:$0xff]
    %v1936 = vld [vmem:[#allocation8 + $0x2b0] sm:$0xff]
    %v1937 = vld [vmem:[#allocation8 + $0x2b8] sm:$0xff]
    %v1938 = vld [vmem:[#allocation8 + $0x2c0] sm:$0xff]
    %v1939 = vld [vmem:[#allocation8 + $0x2c8] sm:$0xff]
    %v1940 = vld [vmem:[#allocation8 + $0x2d0] sm:$0xff]
    %v1941 = vld [vmem:[#allocation8 + $0x2d8] sm:$0xff]
    %v1942 = vld [vmem:[#allocation8 + $0x2e0] sm:$0xff]
    %v1943 = vld [vmem:[#allocation8 + $0x2e8] sm:$0xff]
    %v1944 = vld [vmem:[#allocation8 + $0x2f0] sm:$0xff]
    %v1945 = vld [vmem:[#allocation8 + $0x2f8] sm:$0xff]
    %v1946 = vld [vmem:[#allocation8 + $0x300] sm:$0xff]
    %v1947 = vld [vmem:[#allocation8 + $0x308] sm:$0xff]
    %v1948 = vld [vmem:[#allocation8 + $0x310] sm:$0xff]
    %v1949 = vld [vmem:[#allocation8 + $0x318] sm:$0xff]
    %v1950 = vld [vmem:[#allocation8 + $0x320] sm:$0xff]
    %v1951 = vld [vmem:[#allocation8 + $0x328] sm:$0xff]
    %v1952 = vld [vmem:[#allocation8 + $0x330] sm:$0xff]
    %v1953 = vld [vmem:[#allocation8 + $0x338] sm:$0xff]
    %v1954 = vld [vmem:[#allocation8 + $0x340] sm:$0xff]
    %v1955 = vld [vmem:[#allocation8 + $0x348] sm:$0xff]
    %v1956 = vld [vmem:[#allocation8 + $0x350] sm:$0xff]
    %v1957 = vld [vmem:[#allocation8 + $0x358] sm:$0xff]
    %v1958 = vld [vmem:[#allocation8 + $0x360] sm:$0xff]
    %v1959 = vld [vmem:[#allocation8 + $0x368] sm:$0xff]
    %v1960 = vld [vmem:[#allocation8 + $0x370] sm:$0xff]
    %v1961 = vld [vmem:[#allocation8 + $0x378] sm:$0xff]
    %v1962 = vld [vmem:[#allocation8 + $0x380] sm:$0xff]
    %v1963 = vld [vmem:[#allocation8 + $0x388] sm:$0xff]
    %v1964 = vld [vmem:[#allocation8 + $0x390] sm:$0xff]
    %v1965 = vld [vmem:[#allocation8 + $0x398] sm:$0xff]
    %v1966 = vld [vmem:[#allocation8 + $0x3a0] sm:$0xff]
    %v1967 = vld [vmem:[#allocation8 + $0x3a8] sm:$0xff]
    %v1968 = vld [vmem:[#allocation8 + $0x3b0] sm:$0xff]
    %v1969 = vld [vmem:[#allocation8 + $0x3b8] sm:$0xff]
    %v1970 = vld [vmem:[#allocation8 + $0x3c0] sm:$0xff]
    %v1971 = vld [vmem:[#allocation8 + $0x3c8] sm:$0xff]
    %v1972 = vld [vmem:[#allocation8 + $0x3d0] sm:$0xff]
    %v1973 = vld [vmem:[#allocation8 + $0x3d8] sm:$0xff]
    %v1974 = vld [vmem:[#allocation8 + $0x3e0] sm:$0xff]
    %v1975 = vld [vmem:[#allocation8 + $0x3e8] sm:$0xff]
    %v1976 = vld [vmem:[#allocation8 + $0x3f0] sm:$0xff]
    %v1977 = vld [vmem:[#allocation8 + $0x3f8] sm:$0xff]
    %v1978 = vld [vmem:[#allocation8 + $0x400] sm:$0xff]
    %v1979 = vld [vmem:[#allocation8 + $0x408] sm:$0xff]
    %v1980 = vld [vmem:[#allocation8 + $0x410] sm:$0xff]
    %v1981 = vld [vmem:[#allocation8 + $0x418] sm:$0xff]
    %v1982 = vld [vmem:[#allocation8 + $0x420] sm:$0xff]
    %v1983 = vld [vmem:[#allocation8 + $0x428] sm:$0xff]
    %v1984 = vld [vmem:[#allocation8 + $0x430] sm:$0xff]
    %v1985 = vld [vmem:[#allocation8 + $0x438] sm:$0xff]
    %v1986 = vld [vmem:[#allocation8 + $0x440] sm:$0xff]
    %v1987 = vld [vmem:[#allocation8 + $0x448] sm:$0xff]
    %v1988 = vld [vmem:[#allocation8 + $0x450] sm:$0xff]
    %v1989 = vld [vmem:[#allocation8 + $0x458] sm:$0xff]
    %v1990 = vld [vmem:[#allocation8 + $0x460] sm:$0xff]
    %v1991 = vld [vmem:[#allocation8 + $0x468] sm:$0xff]
    %v1992 = vld [vmem:[#allocation8 + $0x470] sm:$0xff]
    %v1993 = vld [vmem:[#allocation8 + $0x478] sm:$0xff]
    %v1994 = vld [vmem:[#allocation8 + $0x480] sm:$0xff]
    %v1995 = vld [vmem:[#allocation8 + $0x488] sm:$0xff]
    %v1996 = vld [vmem:[#allocation8 + $0x490] sm:$0xff]
    %v1997 = vld [vmem:[#allocation8 + $0x498] sm:$0xff]
    %v1998 = vld [vmem:[#allocation8 + $0x4a0] sm:$0xff]
    %v1999 = vld [vmem:[#allocation8 + $0x4a8] sm:$0xff]
    %v2000 = vld [vmem:[#allocation8 + $0x4b0] sm:$0xff]
    %v2001 = vld [vmem:[#allocation8 + $0x4b8] sm:$0xff]
    %v2002 = vld [vmem:[#allocation8 + $0x4c0] sm:$0xff]
    %v2003 = vld [vmem:[#allocation8 + $0x4c8] sm:$0xff]
    %v2004 = vld [vmem:[#allocation8 + $0x4d0] sm:$0xff]
    %v2005 = vld [vmem:[#allocation8 + $0x4d8] sm:$0xff]
    %v2006 = vld [vmem:[#allocation8 + $0x4e0] sm:$0xff]
    %v2007 = vld [vmem:[#allocation8 + $0x4e8] sm:$0xff]
    %v2008 = vld [vmem:[#allocation8 + $0x4f0] sm:$0xff]
    %v2009 = vld [vmem:[#allocation8 + $0x4f8] sm:$0xff]
    %v2010 = vld [vmem:[#allocation8 + $0x500] sm:$0xff]
    %v2011 = vld [vmem:[#allocation8 + $0x508] sm:$0xff]
    %v2012 = vld [vmem:[#allocation8 + $0x510] sm:$0xff]
    %v2013 = vld [vmem:[#allocation8 + $0x518] sm:$0xff]
    %v2014 = vld [vmem:[#allocation8 + $0x520] sm:$0xff]
    %v2015 = vld [vmem:[#allocation8 + $0x528] sm:$0xff]
    %v2016 = vld [vmem:[#allocation8 + $0x530] sm:$0xff]
    %v2017 = vld [vmem:[#allocation8 + $0x538] sm:$0xff]
    %v2018 = vld [vmem:[#allocation8 + $0x540] sm:$0xff]
    %v2019 = vld [vmem:[#allocation8 + $0x548] sm:$0xff]
    %v2020 = vld [vmem:[#allocation8 + $0x550] sm:$0xff]
    %v2021 = vld [vmem:[#allocation8 + $0x558] sm:$0xff]
    %v2022 = vld [vmem:[#allocation8 + $0x560] sm:$0xff]
    %v2023 = vld [vmem:[#allocation8 + $0x568] sm:$0xff]
    %v2024 = vld [vmem:[#allocation8 + $0x570] sm:$0xff]
    %v2025 = vld [vmem:[#allocation8 + $0x578] sm:$0xff]
    %v2026 = vld [vmem:[#allocation8 + $0x580] sm:$0xff]
    %v2027 = vld [vmem:[#allocation8 + $0x588] sm:$0xff]
    %v2028 = vld [vmem:[#allocation8 + $0x590] sm:$0xff]
    %v2029 = vld [vmem:[#allocation8 + $0x598] sm:$0xff]
    %v2030 = vld [vmem:[#allocation8 + $0x5a0] sm:$0xff]
    %v2031 = vld [vmem:[#allocation8 + $0x5a8] sm:$0xff]
    %v2032 = vld [vmem:[#allocation8 + $0x5b0] sm:$0xff]
    %v2033 = vld [vmem:[#allocation8 + $0x5b8] sm:$0xff]
    %v2034 = vld [vmem:[#allocation8 + $0x5c0] sm:$0xff]
    %v2035 = vld [vmem:[#allocation8 + $0x5c8] sm:$0xff]
    %v2036 = vld [vmem:[#allocation8 + $0x5d0] sm:$0xff]
    %v2037 = vld [vmem:[#allocation8 + $0x5d8] sm:$0xff]
    %v2038 = vld [vmem:[#allocation8 + $0x5e0] sm:$0xff]
    %v2039 = vld [vmem:[#allocation8 + $0x5e8] sm:$0xff]
    %v2040 = vld [vmem:[#allocation8 + $0x5f0] sm:$0xff]
    %v2041 = vld [vmem:[#allocation8 + $0x5f8] sm:$0xff]
    %v2042 = vld [vmem:[#allocation8 + $0x600] sm:$0xff]
    %v2043 = vld [vmem:[#allocation8 + $0x608] sm:$0xff]
    %v2044 = vld [vmem:[#allocation8 + $0x610] sm:$0xff]
    %v2045 = vld [vmem:[#allocation8 + $0x618] sm:$0xff]
    %v2046 = vld [vmem:[#allocation8 + $0x620] sm:$0xff]
    %v2047 = vld [vmem:[#allocation8 + $0x628] sm:$0xff]
    %v2048 = vld [vmem:[#allocation8 + $0x630] sm:$0xff]
    %v2049 = vld [vmem:[#allocation8 + $0x638] sm:$0xff]
    %v2050 = vld [vmem:[#allocation8 + $0x640] sm:$0xff]
    %v2051 = vld [vmem:[#allocation8 + $0x648] sm:$0xff]
    %v2052 = vld [vmem:[#allocation8 + $0x650] sm:$0xff]
    %v2053 = vld [vmem:[#allocation8 + $0x658] sm:$0xff]
    %v2054 = vld [vmem:[#allocation8 + $0x660] sm:$0xff]
    %v2055 = vld [vmem:[#allocation8 + $0x668] sm:$0xff]
    %v2056 = vld [vmem:[#allocation8 + $0x670] sm:$0xff]
    %v2057 = vld [vmem:[#allocation8 + $0x678] sm:$0xff]
    %v2058 = vld [vmem:[#allocation8 + $0x680] sm:$0xff]
    %v2059 = vld [vmem:[#allocation8 + $0x688] sm:$0xff]
    %v2060 = vld [vmem:[#allocation8 + $0x690] sm:$0xff]
    %v2061 = vld [vmem:[#allocation8 + $0x698] sm:$0xff]
    %v2062 = vld [vmem:[#allocation8 + $0x6a0] sm:$0xff]
    %v2063 = vld [vmem:[#allocation8 + $0x6a8] sm:$0xff]
    %v2064 = vld [vmem:[#allocation8 + $0x6b0] sm:$0xff]
    %v2065 = vld [vmem:[#allocation8 + $0x6b8] sm:$0xff]
    %v2066 = vld [vmem:[#allocation8 + $0x6c0] sm:$0xff]
    %v2067 = vld [vmem:[#allocation8 + $0x6c8] sm:$0xff]
    %v2068 = vld [vmem:[#allocation8 + $0x6d0] sm:$0xff]
    %v2069 = vld [vmem:[#allocation8 + $0x6d8] sm:$0xff]
    %v2070 = vld [vmem:[#allocation8 + $0x6e0] sm:$0xff]
    %v2071 = vld [vmem:[#allocation8 + $0x6e8] sm:$0xff]
    %v2072 = vld [vmem:[#allocation8 + $0x6f0] sm:$0xff]
    %v2073 = vld [vmem:[#allocation8 + $0x6f8] sm:$0xff]
    %v2074 = vld [vmem:[#allocation8 + $0x700] sm:$0xff]
    %v2075 = vld [vmem:[#allocation8 + $0x708] sm:$0xff]
    %v2076 = vld [vmem:[#allocation8 + $0x710] sm:$0xff]
    %v2077 = vld [vmem:[#allocation8 + $0x718] sm:$0xff]
    %v2078 = vld [vmem:[#allocation8 + $0x720] sm:$0xff]
    %v2079 = vld [vmem:[#allocation8 + $0x728] sm:$0xff]
    %v2080 = vld [vmem:[#allocation8 + $0x730] sm:$0xff]
    %v2081 = vld [vmem:[#allocation8 + $0x738] sm:$0xff]
    %v2082 = vld [vmem:[#allocation8 + $0x740] sm:$0xff]
    %v2083 = vld [vmem:[#allocation8 + $0x748] sm:$0xff]
    %v2084 = vld [vmem:[#allocation8 + $0x750] sm:$0xff]
    %v2085 = vld [vmem:[#allocation8 + $0x758] sm:$0xff]
    %v2086 = vld [vmem:[#allocation8 + $0x760] sm:$0xff]
    %v2087 = vld [vmem:[#allocation8 + $0x768] sm:$0xff]
    %v2088 = vld [vmem:[#allocation8 + $0x770] sm:$0xff]
    %v2089 = vld [vmem:[#allocation8 + $0x778] sm:$0xff]
    %v2090 = vld [vmem:[#allocation8 + $0x780] sm:$0xff]
    %v2091 = vld [vmem:[#allocation8 + $0x788] sm:$0xff]
    %v2092 = vld [vmem:[#allocation8 + $0x790] sm:$0xff]
    %v2093 = vld [vmem:[#allocation8 + $0x798] sm:$0xff]
    %v2094 = vld [vmem:[#allocation8 + $0x7a0] sm:$0xff]
    %v2095 = vld [vmem:[#allocation8 + $0x7a8] sm:$0xff]
    %v2096 = vld [vmem:[#allocation8 + $0x7b0] sm:$0xff]
    %v2097 = vld [vmem:[#allocation8 + $0x7b8] sm:$0xff]
    %v2098 = vld [vmem:[#allocation8 + $0x7c0] sm:$0xff]
    %v2099 = vld [vmem:[#allocation8 + $0x7c8] sm:$0xff]
    %v2100 = vld [vmem:[#allocation8 + $0x7d0] sm:$0xff]
    %v2101 = vld [vmem:[#allocation8 + $0x7d8] sm:$0xff]
    %v2102 = vld [vmem:[#allocation8 + $0x7e0] sm:$0xff]
    %v2103 = vld [vmem:[#allocation8 + $0x7e8] sm:$0xff]
    %v2104 = vld [vmem:[#allocation8 + $0x7f0] sm:$0xff]
    %v2105 = vld [vmem:[#allocation8 + $0x7f8] sm:$0xff]
    %v2106 = vld [vmem:[#allocation10] sm:$0xff]
    %v2108 = vlaneseq
    %v2109 = vshrl.u32 %v2108, 7
    %v2110 = vsub.s32 0, %v2109
    %v2111 = vrot.slane %v2106, %v2110
    %v2112 = vlaneseq
    %v2113 = vshrl.u32 %v2112, 7
    %v2114 = vsub.s32 1, %v2113
    %v2115 = vrot.slane %v2106, %v2114
    %v2116 = vlaneseq
    %v2117 = vshrl.u32 %v2116, 7
    %v2118 = vsub.s32 2, %v2117
    %v2119 = vrot.slane %v2106, %v2118
    %v2120 = vlaneseq
    %v2121 = vshrl.u32 %v2120, 7
    %v2122 = vsub.s32 3, %v2121
    %v2123 = vrot.slane %v2106, %v2122
    %v2124 = vlaneseq
    %v2125 = vshrl.u32 %v2124, 7
    %v2126 = vsub.s32 4, %v2125
    %v2127 = vrot.slane %v2106, %v2126
    %v2128 = vlaneseq
    %v2129 = vshrl.u32 %v2128, 7
    %v2130 = vsub.s32 5, %v2129
    %v2131 = vrot.slane %v2106, %v2130
    %v2132 = vlaneseq
    %v2133 = vshrl.u32 %v2132, 7
    %v2134 = vsub.s32 6, %v2133
    %v2135 = vrot.slane %v2106, %v2134
    %v2136 = vlaneseq
    %v2137 = vshrl.u32 %v2136, 7
    %v2138 = vsub.s32 7, %v2137
    %v2139 = vrot.slane %v2106, %v2138
    %v2404 = vunpack.c.l.b16 %v1850
    %v2405 = vunpack.c.h.b16 %v1850
    %v2406 = vunpack.c.l.b16 %v1851
    %v2407 = vunpack.c.h.b16 %v1851
    %v2408 = vunpack.c.l.b16 %v1852
    %v2409 = vunpack.c.h.b16 %v1852
    %v2410 = vunpack.c.l.b16 %v1853
    %v2411 = vunpack.c.h.b16 %v1853
    %v2412 = vunpack.c.l.b16 %v1854
    %v2413 = vunpack.c.h.b16 %v1854
    %v2414 = vunpack.c.l.b16 %v1855
    %v2415 = vunpack.c.h.b16 %v1855
    %v2416 = vunpack.c.l.b16 %v1856
    %v2417 = vunpack.c.h.b16 %v1856
    %v2418 = vunpack.c.l.b16 %v1857
    %v2419 = vunpack.c.h.b16 %v1857
    %v2420 = vunpack.c.l.b16 %v1858
    %v2421 = vunpack.c.h.b16 %v1858
    %v2422 = vunpack.c.l.b16 %v1859
    %v2423 = vunpack.c.h.b16 %v1859
    %v2424 = vunpack.c.l.b16 %v1860
    %v2425 = vunpack.c.h.b16 %v1860
    %v2426 = vunpack.c.l.b16 %v1861
    %v2427 = vunpack.c.h.b16 %v1861
    %v2428 = vunpack.c.l.b16 %v1862
    %v2429 = vunpack.c.h.b16 %v1862
    %v2430 = vunpack.c.l.b16 %v1863
    %v2431 = vunpack.c.h.b16 %v1863
    %v2432 = vunpack.c.l.b16 %v1864
    %v2433 = vunpack.c.h.b16 %v1864
    %v2434 = vunpack.c.l.b16 %v1865
    %v2435 = vunpack.c.h.b16 %v1865
    %v2436 = vunpack.c.l.b16 %v1866
    %v2437 = vunpack.c.h.b16 %v1866
    %v2438 = vunpack.c.l.b16 %v1867
    %v2439 = vunpack.c.h.b16 %v1867
    %v2440 = vunpack.c.l.b16 %v1868
    %v2441 = vunpack.c.h.b16 %v1868
    %v2442 = vunpack.c.l.b16 %v1869
    %v2443 = vunpack.c.h.b16 %v1869
    %v2444 = vunpack.c.l.b16 %v1870
    %v2445 = vunpack.c.h.b16 %v1870
    %v2446 = vunpack.c.l.b16 %v1871
    %v2447 = vunpack.c.h.b16 %v1871
    %v2448 = vunpack.c.l.b16 %v1872
    %v2449 = vunpack.c.h.b16 %v1872
    %v2450 = vunpack.c.l.b16 %v1873
    %v2451 = vunpack.c.h.b16 %v1873
    %v2452 = vunpack.c.l.b16 %v1874
    %v2453 = vunpack.c.h.b16 %v1874
    %v2454 = vunpack.c.l.b16 %v1875
    %v2455 = vunpack.c.h.b16 %v1875
    %v2456 = vunpack.c.l.b16 %v1876
    %v2457 = vunpack.c.h.b16 %v1876
    %v2458 = vunpack.c.l.b16 %v1877
    %v2459 = vunpack.c.h.b16 %v1877
    %v2460 = vunpack.c.l.b16 %v1878
    %v2461 = vunpack.c.h.b16 %v1878
    %v2462 = vunpack.c.l.b16 %v1879
    %v2463 = vunpack.c.h.b16 %v1879
    %v2464 = vunpack.c.l.b16 %v1880
    %v2465 = vunpack.c.h.b16 %v1880
    %v2466 = vunpack.c.l.b16 %v1881
    %v2467 = vunpack.c.h.b16 %v1881
    %v2468 = vunpack.c.l.b16 %v1882
    %v2469 = vunpack.c.h.b16 %v1882
    %v2470 = vunpack.c.l.b16 %v1883
    %v2471 = vunpack.c.h.b16 %v1883
    %v2472 = vunpack.c.l.b16 %v1884
    %v2473 = vunpack.c.h.b16 %v1884
    %v2474 = vunpack.c.l.b16 %v1885
    %v2475 = vunpack.c.h.b16 %v1885
    %v2476 = vunpack.c.l.b16 %v1886
    %v2477 = vunpack.c.h.b16 %v1886
    %v2478 = vunpack.c.l.b16 %v1887
    %v2479 = vunpack.c.h.b16 %v1887
    %v2480 = vunpack.c.l.b16 %v1888
    %v2481 = vunpack.c.h.b16 %v1888
    %v2482 = vunpack.c.l.b16 %v1889
    %v2483 = vunpack.c.h.b16 %v1889
    %v2484 = vunpack.c.l.b16 %v1890
    %v2485 = vunpack.c.h.b16 %v1890
    %v2486 = vunpack.c.l.b16 %v1891
    %v2487 = vunpack.c.h.b16 %v1891
    %v2488 = vunpack.c.l.b16 %v1892
    %v2489 = vunpack.c.h.b16 %v1892
    %v2490 = vunpack.c.l.b16 %v1893
    %v2491 = vunpack.c.h.b16 %v1893
    %v2492 = vunpack.c.l.b16 %v1894
    %v2493 = vunpack.c.h.b16 %v1894
    %v2494 = vunpack.c.l.b16 %v1895
    %v2495 = vunpack.c.h.b16 %v1895
    %v2496 = vunpack.c.l.b16 %v1896
    %v2497 = vunpack.c.h.b16 %v1896
    %v2498 = vunpack.c.l.b16 %v1897
    %v2499 = vunpack.c.h.b16 %v1897
    %v2500 = vunpack.c.l.b16 %v1898
    %v2501 = vunpack.c.h.b16 %v1898
    %v2502 = vunpack.c.l.b16 %v1899
    %v2503 = vunpack.c.h.b16 %v1899
    %v2504 = vunpack.c.l.b16 %v1900
    %v2505 = vunpack.c.h.b16 %v1900
    %v2506 = vunpack.c.l.b16 %v1901
    %v2507 = vunpack.c.h.b16 %v1901
    %v2508 = vunpack.c.l.b16 %v1902
    %v2509 = vunpack.c.h.b16 %v1902
    %v2510 = vunpack.c.l.b16 %v1903
    %v2511 = vunpack.c.h.b16 %v1903
    %v2512 = vunpack.c.l.b16 %v1904
    %v2513 = vunpack.c.h.b16 %v1904
    %v2514 = vunpack.c.l.b16 %v1905
    %v2515 = vunpack.c.h.b16 %v1905
    %v2516 = vunpack.c.l.b16 %v1906
    %v2517 = vunpack.c.h.b16 %v1906
    %v2518 = vunpack.c.l.b16 %v1907
    %v2519 = vunpack.c.h.b16 %v1907
    %v2520 = vunpack.c.l.b16 %v1908
    %v2521 = vunpack.c.h.b16 %v1908
    %v2522 = vunpack.c.l.b16 %v1909
    %v2523 = vunpack.c.h.b16 %v1909
    %v2524 = vunpack.c.l.b16 %v1910
    %v2525 = vunpack.c.h.b16 %v1910
    %v2526 = vunpack.c.l.b16 %v1911
    %v2527 = vunpack.c.h.b16 %v1911
    %v2528 = vunpack.c.l.b16 %v1912
    %v2529 = vunpack.c.h.b16 %v1912
    %v2530 = vunpack.c.l.b16 %v1913
    %v2531 = vunpack.c.h.b16 %v1913
    %v2532 = vunpack.c.l.b16 %v1914
    %v2533 = vunpack.c.h.b16 %v1914
    %v2534 = vunpack.c.l.b16 %v1915
    %v2535 = vunpack.c.h.b16 %v1915
    %v2536 = vunpack.c.l.b16 %v1916
    %v2537 = vunpack.c.h.b16 %v1916
    %v2538 = vunpack.c.l.b16 %v1917
    %v2539 = vunpack.c.h.b16 %v1917
    %v2540 = vunpack.c.l.b16 %v1918
    %v2541 = vunpack.c.h.b16 %v1918
    %v2542 = vunpack.c.l.b16 %v1919
    %v2543 = vunpack.c.h.b16 %v1919
    %v2544 = vunpack.c.l.b16 %v1920
    %v2545 = vunpack.c.h.b16 %v1920
    %v2546 = vunpack.c.l.b16 %v1921
    %v2547 = vunpack.c.h.b16 %v1921
    %v2548 = vunpack.c.l.b16 %v1922
    %v2549 = vunpack.c.h.b16 %v1922
    %v2550 = vunpack.c.l.b16 %v1923
    %v2551 = vunpack.c.h.b16 %v1923
    %v2552 = vunpack.c.l.b16 %v1924
    %v2553 = vunpack.c.h.b16 %v1924
    %v2554 = vunpack.c.l.b16 %v1925
    %v2555 = vunpack.c.h.b16 %v1925
    %v2556 = vunpack.c.l.b16 %v1926
    %v2557 = vunpack.c.h.b16 %v1926
    %v2558 = vunpack.c.l.b16 %v1927
    %v2559 = vunpack.c.h.b16 %v1927
    %v2560 = vunpack.c.l.b16 %v1928
    %v2561 = vunpack.c.h.b16 %v1928
    %v2562 = vunpack.c.l.b16 %v1929
    %v2563 = vunpack.c.h.b16 %v1929
    %v2564 = vunpack.c.l.b16 %v1930
    %v2565 = vunpack.c.h.b16 %v1930
    %v2566 = vunpack.c.l.b16 %v1931
    %v2567 = vunpack.c.h.b16 %v1931
    %v2568 = vunpack.c.l.b16 %v1932
    %v2569 = vunpack.c.h.b16 %v1932
    %v2570 = vunpack.c.l.b16 %v1933
    %v2571 = vunpack.c.h.b16 %v1933
    %v2572 = vunpack.c.l.b16 %v1934
    %v2573 = vunpack.c.h.b16 %v1934
    %v2574 = vunpack.c.l.b16 %v1935
    %v2575 = vunpack.c.h.b16 %v1935
    %v2576 = vunpack.c.l.b16 %v1936
    %v2577 = vunpack.c.h.b16 %v1936
    %v2578 = vunpack.c.l.b16 %v1937
    %v2579 = vunpack.c.h.b16 %v1937
    %v2580 = vunpack.c.l.b16 %v1938
    %v2581 = vunpack.c.h.b16 %v1938
    %v2582 = vunpack.c.l.b16 %v1939
    %v2583 = vunpack.c.h.b16 %v1939
    %v2584 = vunpack.c.l.b16 %v1940
    %v2585 = vunpack.c.h.b16 %v1940
    %v2586 = vunpack.c.l.b16 %v1941
    %v2587 = vunpack.c.h.b16 %v1941
    %v2588 = vunpack.c.l.b16 %v1942
    %v2589 = vunpack.c.h.b16 %v1942
    %v2590 = vunpack.c.l.b16 %v1943
    %v2591 = vunpack.c.h.b16 %v1943
    %v2592 = vunpack.c.l.b16 %v1944
    %v2593 = vunpack.c.h.b16 %v1944
    %v2594 = vunpack.c.l.b16 %v1945
    %v2595 = vunpack.c.h.b16 %v1945
    %v2596 = vunpack.c.l.b16 %v1946
    %v2597 = vunpack.c.h.b16 %v1946
    %v2598 = vunpack.c.l.b16 %v1947
    %v2599 = vunpack.c.h.b16 %v1947
    %v2600 = vunpack.c.l.b16 %v1948
    %v2601 = vunpack.c.h.b16 %v1948
    %v2602 = vunpack.c.l.b16 %v1949
    %v2603 = vunpack.c.h.b16 %v1949
    %v2604 = vunpack.c.l.b16 %v1950
    %v2605 = vunpack.c.h.b16 %v1950
    %v2606 = vunpack.c.l.b16 %v1951
    %v2607 = vunpack.c.h.b16 %v1951
    %v2608 = vunpack.c.l.b16 %v1952
    %v2609 = vunpack.c.h.b16 %v1952
    %v2610 = vunpack.c.l.b16 %v1953
    %v2611 = vunpack.c.h.b16 %v1953
    %v2612 = vunpack.c.l.b16 %v1954
    %v2613 = vunpack.c.h.b16 %v1954
    %v2614 = vunpack.c.l.b16 %v1955
    %v2615 = vunpack.c.h.b16 %v1955
    %v2616 = vunpack.c.l.b16 %v1956
    %v2617 = vunpack.c.h.b16 %v1956
    %v2618 = vunpack.c.l.b16 %v1957
    %v2619 = vunpack.c.h.b16 %v1957
    %v2620 = vunpack.c.l.b16 %v1958
    %v2621 = vunpack.c.h.b16 %v1958
    %v2622 = vunpack.c.l.b16 %v1959
    %v2623 = vunpack.c.h.b16 %v1959
    %v2624 = vunpack.c.l.b16 %v1960
    %v2625 = vunpack.c.h.b16 %v1960
    %v2626 = vunpack.c.l.b16 %v1961
    %v2627 = vunpack.c.h.b16 %v1961
    %v2628 = vunpack.c.l.b16 %v1962
    %v2629 = vunpack.c.h.b16 %v1962
    %v2630 = vunpack.c.l.b16 %v1963
    %v2631 = vunpack.c.h.b16 %v1963
    %v2632 = vunpack.c.l.b16 %v1964
    %v2633 = vunpack.c.h.b16 %v1964
    %v2634 = vunpack.c.l.b16 %v1965
    %v2635 = vunpack.c.h.b16 %v1965
    %v2636 = vunpack.c.l.b16 %v1966
    %v2637 = vunpack.c.h.b16 %v1966
    %v2638 = vunpack.c.l.b16 %v1967
    %v2639 = vunpack.c.h.b16 %v1967
    %v2640 = vunpack.c.l.b16 %v1968
    %v2641 = vunpack.c.h.b16 %v1968
    %v2642 = vunpack.c.l.b16 %v1969
    %v2643 = vunpack.c.h.b16 %v1969
    %v2644 = vunpack.c.l.b16 %v1970
    %v2645 = vunpack.c.h.b16 %v1970
    %v2646 = vunpack.c.l.b16 %v1971
    %v2647 = vunpack.c.h.b16 %v1971
    %v2648 = vunpack.c.l.b16 %v1972
    %v2649 = vunpack.c.h.b16 %v1972
    %v2650 = vunpack.c.l.b16 %v1973
    %v2651 = vunpack.c.h.b16 %v1973
    %v2652 = vunpack.c.l.b16 %v1974
    %v2653 = vunpack.c.h.b16 %v1974
    %v2654 = vunpack.c.l.b16 %v1975
    %v2655 = vunpack.c.h.b16 %v1975
    %v2656 = vunpack.c.l.b16 %v1976
    %v2657 = vunpack.c.h.b16 %v1976
    %v2658 = vunpack.c.l.b16 %v1977
    %v2659 = vunpack.c.h.b16 %v1977
    %v2660 = vunpack.c.l.b16 %v1978
    %v2661 = vunpack.c.h.b16 %v1978
    %v2662 = vunpack.c.l.b16 %v1979
    %v2663 = vunpack.c.h.b16 %v1979
    %v2664 = vunpack.c.l.b16 %v1980
    %v2665 = vunpack.c.h.b16 %v1980
    %v2666 = vunpack.c.l.b16 %v1981
    %v2667 = vunpack.c.h.b16 %v1981
    %v2668 = vunpack.c.l.b16 %v1982
    %v2669 = vunpack.c.h.b16 %v1982
    %v2670 = vunpack.c.l.b16 %v1983
    %v2671 = vunpack.c.h.b16 %v1983
    %v2672 = vunpack.c.l.b16 %v1984
    %v2673 = vunpack.c.h.b16 %v1984
    %v2674 = vunpack.c.l.b16 %v1985
    %v2675 = vunpack.c.h.b16 %v1985
    %v2676 = vunpack.c.l.b16 %v1986
    %v2677 = vunpack.c.h.b16 %v1986
    %v2678 = vunpack.c.l.b16 %v1987
    %v2679 = vunpack.c.h.b16 %v1987
    %v2680 = vunpack.c.l.b16 %v1988
    %v2681 = vunpack.c.h.b16 %v1988
    %v2682 = vunpack.c.l.b16 %v1989
    %v2683 = vunpack.c.h.b16 %v1989
    %v2684 = vunpack.c.l.b16 %v1990
    %v2685 = vunpack.c.h.b16 %v1990
    %v2686 = vunpack.c.l.b16 %v1991
    %v2687 = vunpack.c.h.b16 %v1991
    %v2688 = vunpack.c.l.b16 %v1992
    %v2689 = vunpack.c.h.b16 %v1992
    %v2690 = vunpack.c.l.b16 %v1993
    %v2691 = vunpack.c.h.b16 %v1993
    %v2692 = vunpack.c.l.b16 %v1994
    %v2693 = vunpack.c.h.b16 %v1994
    %v2694 = vunpack.c.l.b16 %v1995
    %v2695 = vunpack.c.h.b16 %v1995
    %v2696 = vunpack.c.l.b16 %v1996
    %v2697 = vunpack.c.h.b16 %v1996
    %v2698 = vunpack.c.l.b16 %v1997
    %v2699 = vunpack.c.h.b16 %v1997
    %v2700 = vunpack.c.l.b16 %v1998
    %v2701 = vunpack.c.h.b16 %v1998
    %v2702 = vunpack.c.l.b16 %v1999
    %v2703 = vunpack.c.h.b16 %v1999
    %v2704 = vunpack.c.l.b16 %v2000
    %v2705 = vunpack.c.h.b16 %v2000
    %v2706 = vunpack.c.l.b16 %v2001
    %v2707 = vunpack.c.h.b16 %v2001
    %v2708 = vunpack.c.l.b16 %v2002
    %v2709 = vunpack.c.h.b16 %v2002
    %v2710 = vunpack.c.l.b16 %v2003
    %v2711 = vunpack.c.h.b16 %v2003
    %v2712 = vunpack.c.l.b16 %v2004
    %v2713 = vunpack.c.h.b16 %v2004
    %v2714 = vunpack.c.l.b16 %v2005
    %v2715 = vunpack.c.h.b16 %v2005
    %v2716 = vunpack.c.l.b16 %v2006
    %v2717 = vunpack.c.h.b16 %v2006
    %v2718 = vunpack.c.l.b16 %v2007
    %v2719 = vunpack.c.h.b16 %v2007
    %v2720 = vunpack.c.l.b16 %v2008
    %v2721 = vunpack.c.h.b16 %v2008
    %v2722 = vunpack.c.l.b16 %v2009
    %v2723 = vunpack.c.h.b16 %v2009
    %v2724 = vunpack.c.l.b16 %v2010
    %v2725 = vunpack.c.h.b16 %v2010
    %v2726 = vunpack.c.l.b16 %v2011
    %v2727 = vunpack.c.h.b16 %v2011
    %v2728 = vunpack.c.l.b16 %v2012
    %v2729 = vunpack.c.h.b16 %v2012
    %v2730 = vunpack.c.l.b16 %v2013
    %v2731 = vunpack.c.h.b16 %v2013
    %v2732 = vunpack.c.l.b16 %v2014
    %v2733 = vunpack.c.h.b16 %v2014
    %v2734 = vunpack.c.l.b16 %v2015
    %v2735 = vunpack.c.h.b16 %v2015
    %v2736 = vunpack.c.l.b16 %v2016
    %v2737 = vunpack.c.h.b16 %v2016
    %v2738 = vunpack.c.l.b16 %v2017
    %v2739 = vunpack.c.h.b16 %v2017
    %v2740 = vunpack.c.l.b16 %v2018
    %v2741 = vunpack.c.h.b16 %v2018
    %v2742 = vunpack.c.l.b16 %v2019
    %v2743 = vunpack.c.h.b16 %v2019
    %v2744 = vunpack.c.l.b16 %v2020
    %v2745 = vunpack.c.h.b16 %v2020
    %v2746 = vunpack.c.l.b16 %v2021
    %v2747 = vunpack.c.h.b16 %v2021
    %v2748 = vunpack.c.l.b16 %v2022
    %v2749 = vunpack.c.h.b16 %v2022
    %v2750 = vunpack.c.l.b16 %v2023
    %v2751 = vunpack.c.h.b16 %v2023
    %v2752 = vunpack.c.l.b16 %v2024
    %v2753 = vunpack.c.h.b16 %v2024
    %v2754 = vunpack.c.l.b16 %v2025
    %v2755 = vunpack.c.h.b16 %v2025
    %v2756 = vunpack.c.l.b16 %v2026
    %v2757 = vunpack.c.h.b16 %v2026
    %v2758 = vunpack.c.l.b16 %v2027
    %v2759 = vunpack.c.h.b16 %v2027
    %v2760 = vunpack.c.l.b16 %v2028
    %v2761 = vunpack.c.h.b16 %v2028
    %v2762 = vunpack.c.l.b16 %v2029
    %v2763 = vunpack.c.h.b16 %v2029
    %v2764 = vunpack.c.l.b16 %v2030
    %v2765 = vunpack.c.h.b16 %v2030
    %v2766 = vunpack.c.l.b16 %v2031
    %v2767 = vunpack.c.h.b16 %v2031
    %v2768 = vunpack.c.l.b16 %v2032
    %v2769 = vunpack.c.h.b16 %v2032
    %v2770 = vunpack.c.l.b16 %v2033
    %v2771 = vunpack.c.h.b16 %v2033
    %v2772 = vunpack.c.l.b16 %v2034
    %v2773 = vunpack.c.h.b16 %v2034
    %v2774 = vunpack.c.l.b16 %v2035
    %v2775 = vunpack.c.h.b16 %v2035
    %v2776 = vunpack.c.l.b16 %v2036
    %v2777 = vunpack.c.h.b16 %v2036
    %v2778 = vunpack.c.l.b16 %v2037
    %v2779 = vunpack.c.h.b16 %v2037
    %v2780 = vunpack.c.l.b16 %v2038
    %v2781 = vunpack.c.h.b16 %v2038
    %v2782 = vunpack.c.l.b16 %v2039
    %v2783 = vunpack.c.h.b16 %v2039
    %v2784 = vunpack.c.l.b16 %v2040
    %v2785 = vunpack.c.h.b16 %v2040
    %v2786 = vunpack.c.l.b16 %v2041
    %v2787 = vunpack.c.h.b16 %v2041
    %v2788 = vunpack.c.l.b16 %v2042
    %v2789 = vunpack.c.h.b16 %v2042
    %v2790 = vunpack.c.l.b16 %v2043
    %v2791 = vunpack.c.h.b16 %v2043
    %v2792 = vunpack.c.l.b16 %v2044
    %v2793 = vunpack.c.h.b16 %v2044
    %v2794 = vunpack.c.l.b16 %v2045
    %v2795 = vunpack.c.h.b16 %v2045
    %v2796 = vunpack.c.l.b16 %v2046
    %v2797 = vunpack.c.h.b16 %v2046
    %v2798 = vunpack.c.l.b16 %v2047
    %v2799 = vunpack.c.h.b16 %v2047
    %v2800 = vunpack.c.l.b16 %v2048
    %v2801 = vunpack.c.h.b16 %v2048
    %v2802 = vunpack.c.l.b16 %v2049
    %v2803 = vunpack.c.h.b16 %v2049
    %v2804 = vunpack.c.l.b16 %v2050
    %v2805 = vunpack.c.h.b16 %v2050
    %v2806 = vunpack.c.l.b16 %v2051
    %v2807 = vunpack.c.h.b16 %v2051
    %v2808 = vunpack.c.l.b16 %v2052
    %v2809 = vunpack.c.h.b16 %v2052
    %v2810 = vunpack.c.l.b16 %v2053
    %v2811 = vunpack.c.h.b16 %v2053
    %v2812 = vunpack.c.l.b16 %v2054
    %v2813 = vunpack.c.h.b16 %v2054
    %v2814 = vunpack.c.l.b16 %v2055
    %v2815 = vunpack.c.h.b16 %v2055
    %v2816 = vunpack.c.l.b16 %v2056
    %v2817 = vunpack.c.h.b16 %v2056
    %v2818 = vunpack.c.l.b16 %v2057
    %v2819 = vunpack.c.h.b16 %v2057
    %v2820 = vunpack.c.l.b16 %v2058
    %v2821 = vunpack.c.h.b16 %v2058
    %v2822 = vunpack.c.l.b16 %v2059
    %v2823 = vunpack.c.h.b16 %v2059
    %v2824 = vunpack.c.l.b16 %v2060
    %v2825 = vunpack.c.h.b16 %v2060
    %v2826 = vunpack.c.l.b16 %v2061
    %v2827 = vunpack.c.h.b16 %v2061
    %v2828 = vunpack.c.l.b16 %v2062
    %v2829 = vunpack.c.h.b16 %v2062
    %v2830 = vunpack.c.l.b16 %v2063
    %v2831 = vunpack.c.h.b16 %v2063
    %v2832 = vunpack.c.l.b16 %v2064
    %v2833 = vunpack.c.h.b16 %v2064
    %v2834 = vunpack.c.l.b16 %v2065
    %v2835 = vunpack.c.h.b16 %v2065
    %v2836 = vunpack.c.l.b16 %v2066
    %v2837 = vunpack.c.h.b16 %v2066
    %v2838 = vunpack.c.l.b16 %v2067
    %v2839 = vunpack.c.h.b16 %v2067
    %v2840 = vunpack.c.l.b16 %v2068
    %v2841 = vunpack.c.h.b16 %v2068
    %v2842 = vunpack.c.l.b16 %v2069
    %v2843 = vunpack.c.h.b16 %v2069
    %v2844 = vunpack.c.l.b16 %v2070
    %v2845 = vunpack.c.h.b16 %v2070
    %v2846 = vunpack.c.l.b16 %v2071
    %v2847 = vunpack.c.h.b16 %v2071
    %v2848 = vunpack.c.l.b16 %v2072
    %v2849 = vunpack.c.h.b16 %v2072
    %v2850 = vunpack.c.l.b16 %v2073
    %v2851 = vunpack.c.h.b16 %v2073
    %v2852 = vunpack.c.l.b16 %v2074
    %v2853 = vunpack.c.h.b16 %v2074
    %v2854 = vunpack.c.l.b16 %v2075
    %v2855 = vunpack.c.h.b16 %v2075
    %v2856 = vunpack.c.l.b16 %v2076
    %v2857 = vunpack.c.h.b16 %v2076
    %v2858 = vunpack.c.l.b16 %v2077
    %v2859 = vunpack.c.h.b16 %v2077
    %v2860 = vunpack.c.l.b16 %v2078
    %v2861 = vunpack.c.h.b16 %v2078
    %v2862 = vunpack.c.l.b16 %v2079
    %v2863 = vunpack.c.h.b16 %v2079
    %v2864 = vunpack.c.l.b16 %v2080
    %v2865 = vunpack.c.h.b16 %v2080
    %v2866 = vunpack.c.l.b16 %v2081
    %v2867 = vunpack.c.h.b16 %v2081
    %v2868 = vunpack.c.l.b16 %v2082
    %v2869 = vunpack.c.h.b16 %v2082
    %v2870 = vunpack.c.l.b16 %v2083
    %v2871 = vunpack.c.h.b16 %v2083
    %v2872 = vunpack.c.l.b16 %v2084
    %v2873 = vunpack.c.h.b16 %v2084
    %v2874 = vunpack.c.l.b16 %v2085
    %v2875 = vunpack.c.h.b16 %v2085
    %v2876 = vunpack.c.l.b16 %v2086
    %v2877 = vunpack.c.h.b16 %v2086
    %v2878 = vunpack.c.l.b16 %v2087
    %v2879 = vunpack.c.h.b16 %v2087
    %v2880 = vunpack.c.l.b16 %v2088
    %v2881 = vunpack.c.h.b16 %v2088
    %v2882 = vunpack.c.l.b16 %v2089
    %v2883 = vunpack.c.h.b16 %v2089
    %v2884 = vunpack.c.l.b16 %v2090
    %v2885 = vunpack.c.h.b16 %v2090
    %v2886 = vunpack.c.l.b16 %v2091
    %v2887 = vunpack.c.h.b16 %v2091
    %v2888 = vunpack.c.l.b16 %v2092
    %v2889 = vunpack.c.h.b16 %v2092
    %v2890 = vunpack.c.l.b16 %v2093
    %v2891 = vunpack.c.h.b16 %v2093
    %v2892 = vunpack.c.l.b16 %v2094
    %v2893 = vunpack.c.h.b16 %v2094
    %v2894 = vunpack.c.l.b16 %v2095
    %v2895 = vunpack.c.h.b16 %v2095
    %v2896 = vunpack.c.l.b16 %v2096
    %v2897 = vunpack.c.h.b16 %v2096
    %v2898 = vunpack.c.l.b16 %v2097
    %v2899 = vunpack.c.h.b16 %v2097
    %v2900 = vunpack.c.l.b16 %v2098
    %v2901 = vunpack.c.h.b16 %v2098
    %v2902 = vunpack.c.l.b16 %v2099
    %v2903 = vunpack.c.h.b16 %v2099
    %v2904 = vunpack.c.l.b16 %v2100
    %v2905 = vunpack.c.h.b16 %v2100
    %v2906 = vunpack.c.l.b16 %v2101
    %v2907 = vunpack.c.h.b16 %v2101
    %v2908 = vunpack.c.l.b16 %v2102
    %v2909 = vunpack.c.h.b16 %v2102
    %v2910 = vunpack.c.l.b16 %v2103
    %v2911 = vunpack.c.h.b16 %v2103
    %v2912 = vunpack.c.l.b16 %v2104
    %v2913 = vunpack.c.h.b16 %v2104
    %v2914 = vunpack.c.l.b16 %v2105
    %v2915 = vunpack.c.h.b16 %v2105
    %v2916 = vpack.c.b16 %v2412, %v2404
    %v2917 = vpack.c.b16 %v2413, %v2405
    %v2918 = vpack.c.b16 %v2414, %v2406
    %v2919 = vpack.c.b16 %v2415, %v2407
    %v2920 = vpack.c.b16 %v2416, %v2408
    %v2921 = vpack.c.b16 %v2417, %v2409
    %v2922 = vpack.c.b16 %v2418, %v2410
    %v2923 = vpack.c.b16 %v2419, %v2411
    %v2924 = vpack.c.b16 %v2428, %v2420
    %v2925 = vpack.c.b16 %v2429, %v2421
    %v2926 = vpack.c.b16 %v2430, %v2422
    %v2927 = vpack.c.b16 %v2431, %v2423
    %v2928 = vpack.c.b16 %v2432, %v2424
    %v2929 = vpack.c.b16 %v2433, %v2425
    %v2930 = vpack.c.b16 %v2434, %v2426
    %v2931 = vpack.c.b16 %v2435, %v2427
    %v2932 = vpack.c.b16 %v2444, %v2436
    %v2933 = vpack.c.b16 %v2445, %v2437
    %v2934 = vpack.c.b16 %v2446, %v2438
    %v2935 = vpack.c.b16 %v2447, %v2439
    %v2936 = vpack.c.b16 %v2448, %v2440
    %v2937 = vpack.c.b16 %v2449, %v2441
    %v2938 = vpack.c.b16 %v2450, %v2442
    %v2939 = vpack.c.b16 %v2451, %v2443
    %v2940 = vpack.c.b16 %v2460, %v2452
    %v2941 = vpack.c.b16 %v2461, %v2453
    %v2942 = vpack.c.b16 %v2462, %v2454
    %v2943 = vpack.c.b16 %v2463, %v2455
    %v2944 = vpack.c.b16 %v2464, %v2456
    %v2945 = vpack.c.b16 %v2465, %v2457
    %v2946 = vpack.c.b16 %v2466, %v2458
    %v2947 = vpack.c.b16 %v2467, %v2459
    %v2948 = vpack.c.b16 %v2476, %v2468
    %v2949 = vpack.c.b16 %v2477, %v2469
    %v2950 = vpack.c.b16 %v2478, %v2470
    %v2951 = vpack.c.b16 %v2479, %v2471
    %v2952 = vpack.c.b16 %v2480, %v2472
    %v2953 = vpack.c.b16 %v2481, %v2473
    %v2954 = vpack.c.b16 %v2482, %v2474
    %v2955 = vpack.c.b16 %v2483, %v2475
    %v2956 = vpack.c.b16 %v2492, %v2484
    %v2957 = vpack.c.b16 %v2493, %v2485
    %v2958 = vpack.c.b16 %v2494, %v2486
    %v2959 = vpack.c.b16 %v2495, %v2487
    %v2960 = vpack.c.b16 %v2496, %v2488
    %v2961 = vpack.c.b16 %v2497, %v2489
    %v2962 = vpack.c.b16 %v2498, %v2490
    %v2963 = vpack.c.b16 %v2499, %v2491
    %v2964 = vpack.c.b16 %v2508, %v2500
    %v2965 = vpack.c.b16 %v2509, %v2501
    %v2966 = vpack.c.b16 %v2510, %v2502
    %v2967 = vpack.c.b16 %v2511, %v2503
    %v2968 = vpack.c.b16 %v2512, %v2504
    %v2969 = vpack.c.b16 %v2513, %v2505
    %v2970 = vpack.c.b16 %v2514, %v2506
    %v2971 = vpack.c.b16 %v2515, %v2507
    %v2972 = vpack.c.b16 %v2524, %v2516
    %v2973 = vpack.c.b16 %v2525, %v2517
    %v2974 = vpack.c.b16 %v2526, %v2518
    %v2975 = vpack.c.b16 %v2527, %v2519
    %v2976 = vpack.c.b16 %v2528, %v2520
    %v2977 = vpack.c.b16 %v2529, %v2521
    %v2978 = vpack.c.b16 %v2530, %v2522
    %v2979 = vpack.c.b16 %v2531, %v2523
    %v2980 = vpack.c.b16 %v2540, %v2532
    %v2981 = vpack.c.b16 %v2541, %v2533
    %v2982 = vpack.c.b16 %v2542, %v2534
    %v2983 = vpack.c.b16 %v2543, %v2535
    %v2984 = vpack.c.b16 %v2544, %v2536
    %v2985 = vpack.c.b16 %v2545, %v2537
    %v2986 = vpack.c.b16 %v2546, %v2538
    %v2987 = vpack.c.b16 %v2547, %v2539
    %v2988 = vpack.c.b16 %v2556, %v2548
    %v2989 = vpack.c.b16 %v2557, %v2549
    %v2990 = vpack.c.b16 %v2558, %v2550
    %v2991 = vpack.c.b16 %v2559, %v2551
    %v2992 = vpack.c.b16 %v2560, %v2552
    %v2993 = vpack.c.b16 %v2561, %v2553
    %v2994 = vpack.c.b16 %v2562, %v2554
    %v2995 = vpack.c.b16 %v2563, %v2555
    %v2996 = vpack.c.b16 %v2572, %v2564
    %v2997 = vpack.c.b16 %v2573, %v2565
    %v2998 = vpack.c.b16 %v2574, %v2566
    %v2999 = vpack.c.b16 %v2575, %v2567
    %v3000 = vpack.c.b16 %v2576, %v2568
    %v3001 = vpack.c.b16 %v2577, %v2569
    %v3002 = vpack.c.b16 %v2578, %v2570
    %v3003 = vpack.c.b16 %v2579, %v2571
    %v3004 = vpack.c.b16 %v2588, %v2580
    %v3005 = vpack.c.b16 %v2589, %v2581
    %v3006 = vpack.c.b16 %v2590, %v2582
    %v3007 = vpack.c.b16 %v2591, %v2583
    %v3008 = vpack.c.b16 %v2592, %v2584
    %v3009 = vpack.c.b16 %v2593, %v2585
    %v3010 = vpack.c.b16 %v2594, %v2586
    %v3011 = vpack.c.b16 %v2595, %v2587
    %v3012 = vpack.c.b16 %v2604, %v2596
    %v3013 = vpack.c.b16 %v2605, %v2597
    %v3014 = vpack.c.b16 %v2606, %v2598
    %v3015 = vpack.c.b16 %v2607, %v2599
    %v3016 = vpack.c.b16 %v2608, %v2600
    %v3017 = vpack.c.b16 %v2609, %v2601
    %v3018 = vpack.c.b16 %v2610, %v2602
    %v3019 = vpack.c.b16 %v2611, %v2603
    %v3020 = vpack.c.b16 %v2620, %v2612
    %v3021 = vpack.c.b16 %v2621, %v2613
    %v3022 = vpack.c.b16 %v2622, %v2614
    %v3023 = vpack.c.b16 %v2623, %v2615
    %v3024 = vpack.c.b16 %v2624, %v2616
    %v3025 = vpack.c.b16 %v2625, %v2617
    %v3026 = vpack.c.b16 %v2626, %v2618
    %v3027 = vpack.c.b16 %v2627, %v2619
    %v3028 = vpack.c.b16 %v2636, %v2628
    %v3029 = vpack.c.b16 %v2637, %v2629
    %v3030 = vpack.c.b16 %v2638, %v2630
    %v3031 = vpack.c.b16 %v2639, %v2631
    %v3032 = vpack.c.b16 %v2640, %v2632
    %v3033 = vpack.c.b16 %v2641, %v2633
    %v3034 = vpack.c.b16 %v2642, %v2634
    %v3035 = vpack.c.b16 %v2643, %v2635
    %v3036 = vpack.c.b16 %v2652, %v2644
    %v3037 = vpack.c.b16 %v2653, %v2645
    %v3038 = vpack.c.b16 %v2654, %v2646
    %v3039 = vpack.c.b16 %v2655, %v2647
    %v3040 = vpack.c.b16 %v2656, %v2648
    %v3041 = vpack.c.b16 %v2657, %v2649
    %v3042 = vpack.c.b16 %v2658, %v2650
    %v3043 = vpack.c.b16 %v2659, %v2651
    %v3044 = vpack.c.b16 %v2668, %v2660
    %v3045 = vpack.c.b16 %v2669, %v2661
    %v3046 = vpack.c.b16 %v2670, %v2662
    %v3047 = vpack.c.b16 %v2671, %v2663
    %v3048 = vpack.c.b16 %v2672, %v2664
    %v3049 = vpack.c.b16 %v2673, %v2665
    %v3050 = vpack.c.b16 %v2674, %v2666
    %v3051 = vpack.c.b16 %v2675, %v2667
    %v3052 = vpack.c.b16 %v2684, %v2676
    %v3053 = vpack.c.b16 %v2685, %v2677
    %v3054 = vpack.c.b16 %v2686, %v2678
    %v3055 = vpack.c.b16 %v2687, %v2679
    %v3056 = vpack.c.b16 %v2688, %v2680
    %v3057 = vpack.c.b16 %v2689, %v2681
    %v3058 = vpack.c.b16 %v2690, %v2682
    %v3059 = vpack.c.b16 %v2691, %v2683
    %v3060 = vpack.c.b16 %v2700, %v2692
    %v3061 = vpack.c.b16 %v2701, %v2693
    %v3062 = vpack.c.b16 %v2702, %v2694
    %v3063 = vpack.c.b16 %v2703, %v2695
    %v3064 = vpack.c.b16 %v2704, %v2696
    %v3065 = vpack.c.b16 %v2705, %v2697
    %v3066 = vpack.c.b16 %v2706, %v2698
    %v3067 = vpack.c.b16 %v2707, %v2699
    %v3068 = vpack.c.b16 %v2716, %v2708
    %v3069 = vpack.c.b16 %v2717, %v2709
    %v3070 = vpack.c.b16 %v2718, %v2710
    %v3071 = vpack.c.b16 %v2719, %v2711
    %v3072 = vpack.c.b16 %v2720, %v2712
    %v3073 = vpack.c.b16 %v2721, %v2713
    %v3074 = vpack.c.b16 %v2722, %v2714
    %v3075 = vpack.c.b16 %v2723, %v2715
    %v3076 = vpack.c.b16 %v2732, %v2724
    %v3077 = vpack.c.b16 %v2733, %v2725
    %v3078 = vpack.c.b16 %v2734, %v2726
    %v3079 = vpack.c.b16 %v2735, %v2727
    %v3080 = vpack.c.b16 %v2736, %v2728
    %v3081 = vpack.c.b16 %v2737, %v2729
    %v3082 = vpack.c.b16 %v2738, %v2730
    %v3083 = vpack.c.b16 %v2739, %v2731
    %v3084 = vpack.c.b16 %v2748, %v2740
    %v3085 = vpack.c.b16 %v2749, %v2741
    %v3086 = vpack.c.b16 %v2750, %v2742
    %v3087 = vpack.c.b16 %v2751, %v2743
    %v3088 = vpack.c.b16 %v2752, %v2744
    %v3089 = vpack.c.b16 %v2753, %v2745
    %v3090 = vpack.c.b16 %v2754, %v2746
    %v3091 = vpack.c.b16 %v2755, %v2747
    %v3092 = vpack.c.b16 %v2764, %v2756
    %v3093 = vpack.c.b16 %v2765, %v2757
    %v3094 = vpack.c.b16 %v2766, %v2758
    %v3095 = vpack.c.b16 %v2767, %v2759
    %v3096 = vpack.c.b16 %v2768, %v2760
    %v3097 = vpack.c.b16 %v2769, %v2761
    %v3098 = vpack.c.b16 %v2770, %v2762
    %v3099 = vpack.c.b16 %v2771, %v2763
    %v3100 = vpack.c.b16 %v2780, %v2772
    %v3101 = vpack.c.b16 %v2781, %v2773
    %v3102 = vpack.c.b16 %v2782, %v2774
    %v3103 = vpack.c.b16 %v2783, %v2775
    %v3104 = vpack.c.b16 %v2784, %v2776
    %v3105 = vpack.c.b16 %v2785, %v2777
    %v3106 = vpack.c.b16 %v2786, %v2778
    %v3107 = vpack.c.b16 %v2787, %v2779
    %v3108 = vpack.c.b16 %v2796, %v2788
    %v3109 = vpack.c.b16 %v2797, %v2789
    %v3110 = vpack.c.b16 %v2798, %v2790
    %v3111 = vpack.c.b16 %v2799, %v2791
    %v3112 = vpack.c.b16 %v2800, %v2792
    %v3113 = vpack.c.b16 %v2801, %v2793
    %v3114 = vpack.c.b16 %v2802, %v2794
    %v3115 = vpack.c.b16 %v2803, %v2795
    %v3116 = vpack.c.b16 %v2812, %v2804
    %v3117 = vpack.c.b16 %v2813, %v2805
    %v3118 = vpack.c.b16 %v2814, %v2806
    %v3119 = vpack.c.b16 %v2815, %v2807
    %v3120 = vpack.c.b16 %v2816, %v2808
    %v3121 = vpack.c.b16 %v2817, %v2809
    %v3122 = vpack.c.b16 %v2818, %v2810
    %v3123 = vpack.c.b16 %v2819, %v2811
    %v3124 = vpack.c.b16 %v2828, %v2820
    %v3125 = vpack.c.b16 %v2829, %v2821
    %v3126 = vpack.c.b16 %v2830, %v2822
    %v3127 = vpack.c.b16 %v2831, %v2823
    %v3128 = vpack.c.b16 %v2832, %v2824
    %v3129 = vpack.c.b16 %v2833, %v2825
    %v3130 = vpack.c.b16 %v2834, %v2826
    %v3131 = vpack.c.b16 %v2835, %v2827
    %v3132 = vpack.c.b16 %v2844, %v2836
    %v3133 = vpack.c.b16 %v2845, %v2837
    %v3134 = vpack.c.b16 %v2846, %v2838
    %v3135 = vpack.c.b16 %v2847, %v2839
    %v3136 = vpack.c.b16 %v2848, %v2840
    %v3137 = vpack.c.b16 %v2849, %v2841
    %v3138 = vpack.c.b16 %v2850, %v2842
    %v3139 = vpack.c.b16 %v2851, %v2843
    %v3140 = vpack.c.b16 %v2860, %v2852
    %v3141 = vpack.c.b16 %v2861, %v2853
    %v3142 = vpack.c.b16 %v2862, %v2854
    %v3143 = vpack.c.b16 %v2863, %v2855
    %v3144 = vpack.c.b16 %v2864, %v2856
    %v3145 = vpack.c.b16 %v2865, %v2857
    %v3146 = vpack.c.b16 %v2866, %v2858
    %v3147 = vpack.c.b16 %v2867, %v2859
    %v3148 = vpack.c.b16 %v2876, %v2868
    %v3149 = vpack.c.b16 %v2877, %v2869
    %v3150 = vpack.c.b16 %v2878, %v2870
    %v3151 = vpack.c.b16 %v2879, %v2871
    %v3152 = vpack.c.b16 %v2880, %v2872
    %v3153 = vpack.c.b16 %v2881, %v2873
    %v3154 = vpack.c.b16 %v2882, %v2874
    %v3155 = vpack.c.b16 %v2883, %v2875
    %v3156 = vpack.c.b16 %v2892, %v2884
    %v3157 = vpack.c.b16 %v2893, %v2885
    %v3158 = vpack.c.b16 %v2894, %v2886
    %v3159 = vpack.c.b16 %v2895, %v2887
    %v3160 = vpack.c.b16 %v2896, %v2888
    %v3161 = vpack.c.b16 %v2897, %v2889
    %v3162 = vpack.c.b16 %v2898, %v2890
    %v3163 = vpack.c.b16 %v2899, %v2891
    %v3164 = vpack.c.b16 %v2908, %v2900
    %v3165 = vpack.c.b16 %v2909, %v2901
    %v3166 = vpack.c.b16 %v2910, %v2902
    %v3167 = vpack.c.b16 %v2911, %v2903
    %v3168 = vpack.c.b16 %v2912, %v2904
    %v3169 = vpack.c.b16 %v2913, %v2905
    %v3170 = vpack.c.b16 %v2914, %v2906
    %v3171 = vpack.c.b16 %v2915, %v2907
    %3428 = vmatprep.subr.bf16.mxu0 %v2973
    %3429 = vmatpush1.bf16.msra.mxu0 %v2972
    %3430 = vmatprep.subr.bf16.mxu0 %v2965
    %3431 = vmatpush1.bf16.msra.mxu0 %v2964
    %3432 = vmatprep.subr.bf16.mxu0 %v2957
    %3433 = vmatpush1.bf16.msra.mxu0 %v2956
    %3434 = vmatprep.subr.bf16.mxu0 %v2949
    %3435 = vmatpush1.bf16.msra.mxu0 %v2948
    %3436 = vmatprep.subr.bf16.mxu0 %v2941
    %3437 = vmatpush1.bf16.msra.mxu0 %v2940
    %3438 = vmatprep.subr.bf16.mxu0 %v2933
    %3439 = vmatpush1.bf16.msra.mxu0 %v2932
    %3440 = vmatprep.subr.bf16.mxu0 %v2925
    %3441 = vmatpush1.bf16.msra.mxu0 %v2924
    %3442 = vmatprep.subr.bf16.mxu0 %v2917
    %3443 = vmatpush1.bf16.msra.mxu0 %v2916
    %3444 = vmatprep.subr.bf16.mxu0 %v3037
    %3445 = vmatpush2.bf16.msra.mxu0 %v3036
    %3446 = vmatprep.subr.bf16.mxu0 %v3029
    %3447 = vmatpush2.bf16.msra.mxu0 %v3028
    %3448 = vmatprep.subr.bf16.mxu0 %v3021
    %3449 = vmatpush2.bf16.msra.mxu0 %v3020
    %3450 = vmatprep.subr.bf16.mxu0 %v3013
    %3451 = vmatpush2.bf16.msra.mxu0 %v3012
    %3452 = vmatprep.subr.bf16.mxu0 %v3005
    %3453 = vmatpush2.bf16.msra.mxu0 %v3004
    %3454 = vmatprep.subr.bf16.mxu0 %v2997
    %3455 = vmatpush2.bf16.msra.mxu0 %v2996
    %3456 = vmatprep.subr.bf16.mxu0 %v2989
    %3457 = vmatpush2.bf16.msra.mxu0 %v2988
    %3458 = vmatprep.subr.bf16.mxu0 %v2981
    %3459 = vmatpush2.bf16.msra.mxu0 %v2980
    %3460 = vmatprep.mubr.bf16.mxu0 %v1847
    %3461 = vmatmul.mubr.bf16.gmra.mxu0 %v1846
    %v3462 = vpop.f32.mrf.mxu0
    %v3463 = vadd.f32 %v2111, %v3462
    %v3464 = vpop.f32.mrf.mxu0
    %v3465 = vadd.f32 %v2115, %v3464
    %v3466 = vpop.f32.mrf.mxu0
    %v3467 = vpop.f32.mrf.mxu0
    %3468 = vdwg.mxu0
    %3469 = vmatprep.subr.bf16.mxu0 %v3101
    %3470 = vmatpush1.bf16.msra.mxu0 %v3100
    %3471 = vmatprep.subr.bf16.mxu0 %v3093
    %3472 = vmatpush1.bf16.msra.mxu0 %v3092
    %3473 = vmatprep.subr.bf16.mxu0 %v3085
    %3474 = vmatpush1.bf16.msra.mxu0 %v3084
    %3475 = vmatprep.subr.bf16.mxu0 %v3077
    %3476 = vmatpush1.bf16.msra.mxu0 %v3076
    %3477 = vmatprep.subr.bf16.mxu0 %v3069
    %3478 = vmatpush1.bf16.msra.mxu0 %v3068
    %3479 = vmatprep.subr.bf16.mxu0 %v3061
    %3480 = vmatpush1.bf16.msra.mxu0 %v3060
    %3481 = vmatprep.subr.bf16.mxu0 %v3053
    %3482 = vmatpush1.bf16.msra.mxu0 %v3052
    %3483 = vmatprep.subr.bf16.mxu0 %v3045
    %3484 = vmatpush1.bf16.msra.mxu0 %v3044
    %3485 = vmatprep.subr.bf16.mxu0 %v3165
    %3486 = vmatpush2.bf16.msra.mxu0 %v3164
    %3487 = vmatprep.subr.bf16.mxu0 %v3157
    %3488 = vmatpush2.bf16.msra.mxu0 %v3156
    %3489 = vmatprep.subr.bf16.mxu0 %v3149
    %3490 = vmatpush2.bf16.msra.mxu0 %v3148
    %3491 = vmatprep.subr.bf16.mxu0 %v3141
    %3492 = vmatpush2.bf16.msra.mxu0 %v3140
    %3493 = vmatprep.subr.bf16.mxu0 %v3133
    %3494 = vmatpush2.bf16.msra.mxu0 %v3132
    %3495 = vmatprep.subr.bf16.mxu0 %v3125
    %3496 = vmatpush2.bf16.msra.mxu0 %v3124
    %3497 = vmatprep.subr.bf16.mxu0 %v3117
    %3498 = vmatpush2.bf16.msra.mxu0 %v3116
    %3499 = vmatprep.subr.bf16.mxu0 %v3109
    %3500 = vmatpush2.bf16.msra.mxu0 %v3108
    %3501 = vmatprep.mubr.bf16.mxu0 %v1849
    %3502 = vmatmul.mubr.bf16.gmra.mxu0 %v1848
    %v3503 = vpop.f32.mrf.mxu0
    %v3504 = vadd.f32 %v3463, %v3503
    %v3505 = vpop.f32.mrf.mxu0
    %v3506 = vadd.f32 %v3465, %v3505
    %v3507 = vpop.f32.mrf.mxu0
    %v3508 = vpop.f32.mrf.mxu0
    %3509 = vdwg.mxu0
    %3510 = vmatprep.subr.bf16.mxu0 %v2975
    %3511 = vmatpush1.bf16.msra.mxu0 %v2974
    %3512 = vmatprep.subr.bf16.mxu0 %v2967
    %3513 = vmatpush1.bf16.msra.mxu0 %v2966
    %3514 = vmatprep.subr.bf16.mxu0 %v2959
    %3515 = vmatpush1.bf16.msra.mxu0 %v2958
    %3516 = vmatprep.subr.bf16.mxu0 %v2951
    %3517 = vmatpush1.bf16.msra.mxu0 %v2950
    %3518 = vmatprep.subr.bf16.mxu0 %v2943
    %3519 = vmatpush1.bf16.msra.mxu0 %v2942
    %3520 = vmatprep.subr.bf16.mxu0 %v2935
    %3521 = vmatpush1.bf16.msra.mxu0 %v2934
    %3522 = vmatprep.subr.bf16.mxu0 %v2927
    %3523 = vmatpush1.bf16.msra.mxu0 %v2926
    %3524 = vmatprep.subr.bf16.mxu0 %v2919
    %3525 = vmatpush1.bf16.msra.mxu0 %v2918
    %3526 = vmatprep.subr.bf16.mxu0 %v3039
    %3527 = vmatpush2.bf16.msra.mxu0 %v3038
    %3528 = vmatprep.subr.bf16.mxu0 %v3031
    %3529 = vmatpush2.bf16.msra.mxu0 %v3030
    %3530 = vmatprep.subr.bf16.mxu0 %v3023
    %3531 = vmatpush2.bf16.msra.mxu0 %v3022
    %3532 = vmatprep.subr.bf16.mxu0 %v3015
    %3533 = vmatpush2.bf16.msra.mxu0 %v3014
    %3534 = vmatprep.subr.bf16.mxu0 %v3007
    %3535 = vmatpush2.bf16.msra.mxu0 %v3006
    %3536 = vmatprep.subr.bf16.mxu0 %v2999
    %3537 = vmatpush2.bf16.msra.mxu0 %v2998
    %3538 = vmatprep.subr.bf16.mxu0 %v2991
    %3539 = vmatpush2.bf16.msra.mxu0 %v2990
    %3540 = vmatprep.subr.bf16.mxu0 %v2983
    %3541 = vmatpush2.bf16.msra.mxu0 %v2982
    %3542 = vmatprep.mubr.bf16.mxu0 %v1847
    %3543 = vmatmul.mubr.bf16.gmra.mxu0 %v1846
    %v3544 = vpop.f32.mrf.mxu0
    %v3545 = vadd.f32 %v2119, %v3544
    %v3546 = vpop.f32.mrf.mxu0
    %v3547 = vadd.f32 %v2123, %v3546
    %v3548 = vpop.f32.mrf.mxu0
    %v3549 = vpop.f32.mrf.mxu0
    %3550 = vdwg.mxu0
    %3551 = vmatprep.subr.bf16.mxu0 %v3103
    %3552 = vmatpush1.bf16.msra.mxu0 %v3102
    %3553 = vmatprep.subr.bf16.mxu0 %v3095
    %3554 = vmatpush1.bf16.msra.mxu0 %v3094
    %3555 = vmatprep.subr.bf16.mxu0 %v3087
    %3556 = vmatpush1.bf16.msra.mxu0 %v3086
    %3557 = vmatprep.subr.bf16.mxu0 %v3079
    %3558 = vmatpush1.bf16.msra.mxu0 %v3078
    %3559 = vmatprep.subr.bf16.mxu0 %v3071
    %3560 = vmatpush1.bf16.msra.mxu0 %v3070
    %3561 = vmatprep.subr.bf16.mxu0 %v3063
    %3562 = vmatpush1.bf16.msra.mxu0 %v3062
    %3563 = vmatprep.subr.bf16.mxu0 %v3055
    %3564 = vmatpush1.bf16.msra.mxu0 %v3054
    %3565 = vmatprep.subr.bf16.mxu0 %v3047
    %3566 = vmatpush1.bf16.msra.mxu0 %v3046
    %3567 = vmatprep.subr.bf16.mxu0 %v3167
    %3568 = vmatpush2.bf16.msra.mxu0 %v3166
    %3569 = vmatprep.subr.bf16.mxu0 %v3159
    %3570 = vmatpush2.bf16.msra.mxu0 %v3158
    %3571 = vmatprep.subr.bf16.mxu0 %v3151
    %3572 = vmatpush2.bf16.msra.mxu0 %v3150
    %3573 = vmatprep.subr.bf16.mxu0 %v3143
    %3574 = vmatpush2.bf16.msra.mxu0 %v3142
    %3575 = vmatprep.subr.bf16.mxu0 %v3135
    %3576 = vmatpush2.bf16.msra.mxu0 %v3134
    %3577 = vmatprep.subr.bf16.mxu0 %v3127
    %3578 = vmatpush2.bf16.msra.mxu0 %v3126
    %3579 = vmatprep.subr.bf16.mxu0 %v3119
    %3580 = vmatpush2.bf16.msra.mxu0 %v3118
    %3581 = vmatprep.subr.bf16.mxu0 %v3111
    %3582 = vmatpush2.bf16.msra.mxu0 %v3110
    %3583 = vmatprep.mubr.bf16.mxu0 %v1849
    %3584 = vmatmul.mubr.bf16.gmra.mxu0 %v1848
    %v3585 = vpop.f32.mrf.mxu0
    %v3586 = vadd.f32 %v3545, %v3585
    %v3587 = vpop.f32.mrf.mxu0
    %v3588 = vadd.f32 %v3547, %v3587
    %v3589 = vpop.f32.mrf.mxu0
    %v3590 = vpop.f32.mrf.mxu0
    %3591 = vdwg.mxu0
    %3592 = vmatprep.subr.bf16.mxu0 %v2977
    %3593 = vmatpush1.bf16.msra.mxu0 %v2976
    %3594 = vmatprep.subr.bf16.mxu0 %v2969
    %3595 = vmatpush1.bf16.msra.mxu0 %v2968
    %3596 = vmatprep.subr.bf16.mxu0 %v2961
    %3597 = vmatpush1.bf16.msra.mxu0 %v2960
    %3598 = vmatprep.subr.bf16.mxu0 %v2953
    %3599 = vmatpush1.bf16.msra.mxu0 %v2952
    %3600 = vmatprep.subr.bf16.mxu0 %v2945
    %3601 = vmatpush1.bf16.msra.mxu0 %v2944
    %3602 = vmatprep.subr.bf16.mxu0 %v2937
    %3603 = vmatpush1.bf16.msra.mxu0 %v2936
    %3604 = vmatprep.subr.bf16.mxu0 %v2929
    %3605 = vmatpush1.bf16.msra.mxu0 %v2928
    %3606 = vmatprep.subr.bf16.mxu0 %v2921
    %3607 = vmatpush1.bf16.msra.mxu0 %v2920
    %3608 = vmatprep.subr.bf16.mxu0 %v3041
    %3609 = vmatpush2.bf16.msra.mxu0 %v3040
    %3610 = vmatprep.subr.bf16.mxu0 %v3033
    %3611 = vmatpush2.bf16.msra.mxu0 %v3032
    %3612 = vmatprep.subr.bf16.mxu0 %v3025
    %3613 = vmatpush2.bf16.msra.mxu0 %v3024
    %3614 = vmatprep.subr.bf16.mxu0 %v3017
    %3615 = vmatpush2.bf16.msra.mxu0 %v3016
    %3616 = vmatprep.subr.bf16.mxu0 %v3009
    %3617 = vmatpush2.bf16.msra.mxu0 %v3008
    %3618 = vmatprep.subr.bf16.mxu0 %v3001
    %3619 = vmatpush2.bf16.msra.mxu0 %v3000
    %3620 = vmatprep.subr.bf16.mxu0 %v2993
    %3621 = vmatpush2.bf16.msra.mxu0 %v2992
    %3622 = vmatprep.subr.bf16.mxu0 %v2985
    %3623 = vmatpush2.bf16.msra.mxu0 %v2984
    %3624 = vmatprep.mubr.bf16.mxu0 %v1847
    %3625 = vmatmul.mubr.bf16.gmra.mxu0 %v1846
    %v3626 = vpop.f32.mrf.mxu0
    %v3627 = vadd.f32 %v2127, %v3626
    %v3628 = vpop.f32.mrf.mxu0
    %v3629 = vadd.f32 %v2131, %v3628
    %v3630 = vpop.f32.mrf.mxu0
    %v3631 = vpop.f32.mrf.mxu0
    %3632 = vdwg.mxu0
    %3633 = vmatprep.subr.bf16.mxu0 %v3105
    %3634 = vmatpush1.bf16.msra.mxu0 %v3104
    %3635 = vmatprep.subr.bf16.mxu0 %v3097
    %3636 = vmatpush1.bf16.msra.mxu0 %v3096
    %3637 = vmatprep.subr.bf16.mxu0 %v3089
    %3638 = vmatpush1.bf16.msra.mxu0 %v3088
    %3639 = vmatprep.subr.bf16.mxu0 %v3081
    %3640 = vmatpush1.bf16.msra.mxu0 %v3080
    %3641 = vmatprep.subr.bf16.mxu0 %v3073
    %3642 = vmatpush1.bf16.msra.mxu0 %v3072
    %3643 = vmatprep.subr.bf16.mxu0 %v3065
    %3644 = vmatpush1.bf16.msra.mxu0 %v3064
    %3645 = vmatprep.subr.bf16.mxu0 %v3057
    %3646 = vmatpush1.bf16.msra.mxu0 %v3056
    %3647 = vmatprep.subr.bf16.mxu0 %v3049
    %3648 = vmatpush1.bf16.msra.mxu0 %v3048
    %3649 = vmatprep.subr.bf16.mxu0 %v3169
    %3650 = vmatpush2.bf16.msra.mxu0 %v3168
    %3651 = vmatprep.subr.bf16.mxu0 %v3161
    %3652 = vmatpush2.bf16.msra.mxu0 %v3160
    %3653 = vmatprep.subr.bf16.mxu0 %v3153
    %3654 = vmatpush2.bf16.msra.mxu0 %v3152
    %3655 = vmatprep.subr.bf16.mxu0 %v3145
    %3656 = vmatpush2.bf16.msra.mxu0 %v3144
    %3657 = vmatprep.subr.bf16.mxu0 %v3137
    %3658 = vmatpush2.bf16.msra.mxu0 %v3136
    %3659 = vmatprep.subr.bf16.mxu0 %v3129
    %3660 = vmatpush2.bf16.msra.mxu0 %v3128
    %3661 = vmatprep.subr.bf16.mxu0 %v3121
    %3662 = vmatpush2.bf16.msra.mxu0 %v3120
    %3663 = vmatprep.subr.bf16.mxu0 %v3113
    %3664 = vmatpush2.bf16.msra.mxu0 %v3112
    %3665 = vmatprep.mubr.bf16.mxu0 %v1849
    %3666 = vmatmul.mubr.bf16.gmra.mxu0 %v1848
    %v3667 = vpop.f32.mrf.mxu0
    %v3668 = vadd.f32 %v3627, %v3667
    %v3669 = vpop.f32.mrf.mxu0
    %v3670 = vadd.f32 %v3629, %v3669
    %v3671 = vpop.f32.mrf.mxu0
    %v3672 = vpop.f32.mrf.mxu0
    %3673 = vdwg.mxu0
    %3674 = vmatprep.subr.bf16.mxu0 %v2979
    %3675 = vmatpush1.bf16.msra.mxu0 %v2978
    %3676 = vmatprep.subr.bf16.mxu0 %v2971
    %3677 = vmatpush1.bf16.msra.mxu0 %v2970
    %3678 = vmatprep.subr.bf16.mxu0 %v2963
    %3679 = vmatpush1.bf16.msra.mxu0 %v2962
    %3680 = vmatprep.subr.bf16.mxu0 %v2955
    %3681 = vmatpush1.bf16.msra.mxu0 %v2954
    %3682 = vmatprep.subr.bf16.mxu0 %v2947
    %3683 = vmatpush1.bf16.msra.mxu0 %v2946
    %3684 = vmatprep.subr.bf16.mxu0 %v2939
    %3685 = vmatpush1.bf16.msra.mxu0 %v2938
    %3686 = vmatprep.subr.bf16.mxu0 %v2931
    %3687 = vmatpush1.bf16.msra.mxu0 %v2930
    %3688 = vmatprep.subr.bf16.mxu0 %v2923
    %3689 = vmatpush1.bf16.msra.mxu0 %v2922
    %3690 = vmatprep.subr.bf16.mxu0 %v3043
    %3691 = vmatpush2.bf16.msra.mxu0 %v3042
    %3692 = vmatprep.subr.bf16.mxu0 %v3035
    %3693 = vmatpush2.bf16.msra.mxu0 %v3034
    %3694 = vmatprep.subr.bf16.mxu0 %v3027
    %3695 = vmatpush2.bf16.msra.mxu0 %v3026
    %3696 = vmatprep.subr.bf16.mxu0 %v3019
    %3697 = vmatpush2.bf16.msra.mxu0 %v3018
    %3698 = vmatprep.subr.bf16.mxu0 %v3011
    %3699 = vmatpush2.bf16.msra.mxu0 %v3010
    %3700 = vmatprep.subr.bf16.mxu0 %v3003
    %3701 = vmatpush2.bf16.msra.mxu0 %v3002
    %3702 = vmatprep.subr.bf16.mxu0 %v2995
    %3703 = vmatpush2.bf16.msra.mxu0 %v2994
    %3704 = vmatprep.subr.bf16.mxu0 %v2987
    %3705 = vmatpush2.bf16.msra.mxu0 %v2986
    %3706 = vmatprep.mubr.bf16.mxu0 %v1847
    %3707 = vmatmul.mubr.bf16.gmra.mxu0 %v1846
    %v3708 = vpop.f32.mrf.mxu0
    %v3709 = vadd.f32 %v2135, %v3708
    %v3710 = vpop.f32.mrf.mxu0
    %v3711 = vadd.f32 %v2139, %v3710
    %v3712 = vpop.f32.mrf.mxu0
    %v3713 = vpop.f32.mrf.mxu0
    %3714 = vdwg.mxu0
    %3715 = vmatprep.subr.bf16.mxu0 %v3107
    %3716 = vmatpush1.bf16.msra.mxu0 %v3106
    %3717 = vmatprep.subr.bf16.mxu0 %v3099
    %3718 = vmatpush1.bf16.msra.mxu0 %v3098
    %3719 = vmatprep.subr.bf16.mxu0 %v3091
    %3720 = vmatpush1.bf16.msra.mxu0 %v3090
    %3721 = vmatprep.subr.bf16.mxu0 %v3083
    %3722 = vmatpush1.bf16.msra.mxu0 %v3082
    %3723 = vmatprep.subr.bf16.mxu0 %v3075
    %3724 = vmatpush1.bf16.msra.mxu0 %v3074
    %3725 = vmatprep.subr.bf16.mxu0 %v3067
    %3726 = vmatpush1.bf16.msra.mxu0 %v3066
    %3727 = vmatprep.subr.bf16.mxu0 %v3059
    %3728 = vmatpush1.bf16.msra.mxu0 %v3058
    %3729 = vmatprep.subr.bf16.mxu0 %v3051
    %3730 = vmatpush1.bf16.msra.mxu0 %v3050
    %3731 = vmatprep.subr.bf16.mxu0 %v3171
    %3732 = vmatpush2.bf16.msra.mxu0 %v3170
    %3733 = vmatprep.subr.bf16.mxu0 %v3163
    %3734 = vmatpush2.bf16.msra.mxu0 %v3162
    %3735 = vmatprep.subr.bf16.mxu0 %v3155
    %3736 = vmatpush2.bf16.msra.mxu0 %v3154
    %3737 = vmatprep.subr.bf16.mxu0 %v3147
    %3738 = vmatpush2.bf16.msra.mxu0 %v3146
    %3739 = vmatprep.subr.bf16.mxu0 %v3139
    %3740 = vmatpush2.bf16.msra.mxu0 %v3138
    %3741 = vmatprep.subr.bf16.mxu0 %v3131
    %3742 = vmatpush2.bf16.msra.mxu0 %v3130
    %3743 = vmatprep.subr.bf16.mxu0 %v3123
    %3744 = vmatpush2.bf16.msra.mxu0 %v3122
    %3745 = vmatprep.subr.bf16.mxu0 %v3115
    %3746 = vmatpush2.bf16.msra.mxu0 %v3114
    %3747 = vmatprep.mubr.bf16.mxu0 %v1849
    %3748 = vmatmul.mubr.bf16.gmra.mxu0 %v1848
    %v3749 = vpop.f32.mrf.mxu0
    %v3750 = vadd.f32 %v3709, %v3749
    %v3751 = vpop.f32.mrf.mxu0
    %v3752 = vadd.f32 %v3711, %v3751
    %v3753 = vpop.f32.mrf.mxu0
    %v3754 = vpop.f32.mrf.mxu0
    %3755 = vdwg.mxu0
    %vm3756 = vcmp.ge.f32.partialorder %v3504, 0.0
    %vm3757 = vcmp.ge.f32.partialorder %v3506, 0.0
    %vm3758 = vcmp.ge.f32.partialorder %v3586, 0.0
    %vm3759 = vcmp.ge.f32.partialorder %v3588, 0.0
    %vm3760 = vcmp.ge.f32.partialorder %v3668, 0.0
    %vm3761 = vcmp.ge.f32.partialorder %v3670, 0.0
    %vm3762 = vcmp.ge.f32.partialorder %v3750, 0.0
    %vm3763 = vcmp.ge.f32.partialorder %v3752, 0.0
    %v3764 = vmul.f32 %v3504, 0.01
    %v3765 = vmul.f32 %v3506, 0.01
    %v3766 = vmul.f32 %v3586, 0.01
    %v3767 = vmul.f32 %v3588, 0.01
    %v3768 = vmul.f32 %v3668, 0.01
    %v3769 = vmul.f32 %v3670, 0.01
    %v3770 = vmul.f32 %v3750, 0.01
    %v3771 = vmul.f32 %v3752, 0.01
    %v3772 = vsel %vm3756, %v3504, %v3764
    %v3773 = vsel %vm3757, %v3506, %v3765
    %v3774 = vsel %vm3758, %v3586, %v3766
    %v3775 = vsel %vm3759, %v3588, %v3767
    %v3776 = vsel %vm3760, %v3668, %v3768
    %v3777 = vsel %vm3761, %v3670, %v3769
    %v3778 = vsel %vm3762, %v3750, %v3770
    %v3779 = vsel %vm3763, %v3752, %v3771
    %v3780 = vpack.c.bf16 %v3772, %v3772
    %v3781 = vpack.c.bf16 %v3773, %v3773
    %v3782 = vpack.c.bf16 %v3774, %v3774
    %v3783 = vpack.c.bf16 %v3775, %v3775
    %v3784 = vpack.c.bf16 %v3776, %v3776
    %v3785 = vpack.c.bf16 %v3777, %v3777
    %v3786 = vpack.c.bf16 %v3778, %v3778
    %v3787 = vpack.c.bf16 %v3779, %v3779
    %v3788 = vld [vmem:[#allocation11] sm:$0xff]
    %v3789 = vld [vmem:[#allocation11 + $0x8] sm:$0xff]
    %v3790 = vld [vmem:[#allocation11 + $0x10] sm:$0xff]
    %v3791 = vld [vmem:[#allocation11 + $0x18] sm:$0xff]
    %v3792 = vld [vmem:[#allocation11 + $0x20] sm:$0xff]
    %v3793 = vld [vmem:[#allocation11 + $0x28] sm:$0xff]
    %v3794 = vld [vmem:[#allocation11 + $0x30] sm:$0xff]
    %v3795 = vld [vmem:[#allocation11 + $0x38] sm:$0xff]
    %v3796 = vld [vmem:[#allocation11 + $0x40] sm:$0xff]
    %v3797 = vld [vmem:[#allocation11 + $0x48] sm:$0xff]
    %v3798 = vld [vmem:[#allocation11 + $0x50] sm:$0xff]
    %v3799 = vld [vmem:[#allocation11 + $0x58] sm:$0xff]
    %v3800 = vld [vmem:[#allocation11 + $0x60] sm:$0xff]
    %v3801 = vld [vmem:[#allocation11 + $0x68] sm:$0xff]
    %v3802 = vld [vmem:[#allocation11 + $0x70] sm:$0xff]
    %v3803 = vld [vmem:[#allocation11 + $0x78] sm:$0xff]
    %v3804 = vld [vmem:[#allocation11 + $0x80] sm:$0xff]
    %v3805 = vld [vmem:[#allocation11 + $0x88] sm:$0xff]
    %v3806 = vld [vmem:[#allocation11 + $0x90] sm:$0xff]
    %v3807 = vld [vmem:[#allocation11 + $0x98] sm:$0xff]
    %v3808 = vld [vmem:[#allocation11 + $0xa0] sm:$0xff]
    %v3809 = vld [vmem:[#allocation11 + $0xa8] sm:$0xff]
    %v3810 = vld [vmem:[#allocation11 + $0xb0] sm:$0xff]
    %v3811 = vld [vmem:[#allocation11 + $0xb8] sm:$0xff]
    %v3812 = vld [vmem:[#allocation11 + $0xc0] sm:$0xff]
    %v3813 = vld [vmem:[#allocation11 + $0xc8] sm:$0xff]
    %v3814 = vld [vmem:[#allocation11 + $0xd0] sm:$0xff]
    %v3815 = vld [vmem:[#allocation11 + $0xd8] sm:$0xff]
    %v3816 = vld [vmem:[#allocation11 + $0xe0] sm:$0xff]
    %v3817 = vld [vmem:[#allocation11 + $0xe8] sm:$0xff]
    %v3818 = vld [vmem:[#allocation11 + $0xf0] sm:$0xff]
    %v3819 = vld [vmem:[#allocation11 + $0xf8] sm:$0xff]
    %v3820 = vld [vmem:[#allocation11 + $0x100] sm:$0xff]
    %v3821 = vld [vmem:[#allocation11 + $0x108] sm:$0xff]
    %v3822 = vld [vmem:[#allocation11 + $0x110] sm:$0xff]
    %v3823 = vld [vmem:[#allocation11 + $0x118] sm:$0xff]
    %v3824 = vld [vmem:[#allocation11 + $0x120] sm:$0xff]
    %v3825 = vld [vmem:[#allocation11 + $0x128] sm:$0xff]
    %v3826 = vld [vmem:[#allocation11 + $0x130] sm:$0xff]
    %v3827 = vld [vmem:[#allocation11 + $0x138] sm:$0xff]
    %v3828 = vld [vmem:[#allocation11 + $0x140] sm:$0xff]
    %v3829 = vld [vmem:[#allocation11 + $0x148] sm:$0xff]
    %v3830 = vld [vmem:[#allocation11 + $0x150] sm:$0xff]
    %v3831 = vld [vmem:[#allocation11 + $0x158] sm:$0xff]
    %v3832 = vld [vmem:[#allocation11 + $0x160] sm:$0xff]
    %v3833 = vld [vmem:[#allocation11 + $0x168] sm:$0xff]
    %v3834 = vld [vmem:[#allocation11 + $0x170] sm:$0xff]
    %v3835 = vld [vmem:[#allocation11 + $0x178] sm:$0xff]
    %v3836 = vld [vmem:[#allocation11 + $0x180] sm:$0xff]
    %v3837 = vld [vmem:[#allocation11 + $0x188] sm:$0xff]
    %v3838 = vld [vmem:[#allocation11 + $0x190] sm:$0xff]
    %v3839 = vld [vmem:[#allocation11 + $0x198] sm:$0xff]
    %v3840 = vld [vmem:[#allocation11 + $0x1a0] sm:$0xff]
    %v3841 = vld [vmem:[#allocation11 + $0x1a8] sm:$0xff]
    %v3842 = vld [vmem:[#allocation11 + $0x1b0] sm:$0xff]
    %v3843 = vld [vmem:[#allocation11 + $0x1b8] sm:$0xff]
    %v3844 = vld [vmem:[#allocation11 + $0x1c0] sm:$0xff]
    %v3845 = vld [vmem:[#allocation11 + $0x1c8] sm:$0xff]
    %v3846 = vld [vmem:[#allocation11 + $0x1d0] sm:$0xff]
    %v3847 = vld [vmem:[#allocation11 + $0x1d8] sm:$0xff]
    %v3848 = vld [vmem:[#allocation11 + $0x1e0] sm:$0xff]
    %v3849 = vld [vmem:[#allocation11 + $0x1e8] sm:$0xff]
    %v3850 = vld [vmem:[#allocation11 + $0x1f0] sm:$0xff]
    %v3851 = vld [vmem:[#allocation11 + $0x1f8] sm:$0xff]
    %v3852 = vld [vmem:[#allocation11 + $0x200] sm:$0xff]
    %v3853 = vld [vmem:[#allocation11 + $0x208] sm:$0xff]
    %v3854 = vld [vmem:[#allocation11 + $0x210] sm:$0xff]
    %v3855 = vld [vmem:[#allocation11 + $0x218] sm:$0xff]
    %v3856 = vld [vmem:[#allocation11 + $0x220] sm:$0xff]
    %v3857 = vld [vmem:[#allocation11 + $0x228] sm:$0xff]
    %v3858 = vld [vmem:[#allocation11 + $0x230] sm:$0xff]
    %v3859 = vld [vmem:[#allocation11 + $0x238] sm:$0xff]
    %v3860 = vld [vmem:[#allocation11 + $0x240] sm:$0xff]
    %v3861 = vld [vmem:[#allocation11 + $0x248] sm:$0xff]
    %v3862 = vld [vmem:[#allocation11 + $0x250] sm:$0xff]
    %v3863 = vld [vmem:[#allocation11 + $0x258] sm:$0xff]
    %v3864 = vld [vmem:[#allocation11 + $0x260] sm:$0xff]
    %v3865 = vld [vmem:[#allocation11 + $0x268] sm:$0xff]
    %v3866 = vld [vmem:[#allocation11 + $0x270] sm:$0xff]
    %v3867 = vld [vmem:[#allocation11 + $0x278] sm:$0xff]
    %v3868 = vld [vmem:[#allocation11 + $0x280] sm:$0xff]
    %v3869 = vld [vmem:[#allocation11 + $0x288] sm:$0xff]
    %v3870 = vld [vmem:[#allocation11 + $0x290] sm:$0xff]
    %v3871 = vld [vmem:[#allocation11 + $0x298] sm:$0xff]
    %v3872 = vld [vmem:[#allocation11 + $0x2a0] sm:$0xff]
    %v3873 = vld [vmem:[#allocation11 + $0x2a8] sm:$0xff]
    %v3874 = vld [vmem:[#allocation11 + $0x2b0] sm:$0xff]
    %v3875 = vld [vmem:[#allocation11 + $0x2b8] sm:$0xff]
    %v3876 = vld [vmem:[#allocation11 + $0x2c0] sm:$0xff]
    %v3877 = vld [vmem:[#allocation11 + $0x2c8] sm:$0xff]
    %v3878 = vld [vmem:[#allocation11 + $0x2d0] sm:$0xff]
    %v3879 = vld [vmem:[#allocation11 + $0x2d8] sm:$0xff]
    %v3880 = vld [vmem:[#allocation11 + $0x2e0] sm:$0xff]
    %v3881 = vld [vmem:[#allocation11 + $0x2e8] sm:$0xff]
    %v3882 = vld [vmem:[#allocation11 + $0x2f0] sm:$0xff]
    %v3883 = vld [vmem:[#allocation11 + $0x2f8] sm:$0xff]
    %v3884 = vld [vmem:[#allocation11 + $0x300] sm:$0xff]
    %v3885 = vld [vmem:[#allocation11 + $0x308] sm:$0xff]
    %v3886 = vld [vmem:[#allocation11 + $0x310] sm:$0xff]
    %v3887 = vld [vmem:[#allocation11 + $0x318] sm:$0xff]
    %v3888 = vld [vmem:[#allocation11 + $0x320] sm:$0xff]
    %v3889 = vld [vmem:[#allocation11 + $0x328] sm:$0xff]
    %v3890 = vld [vmem:[#allocation11 + $0x330] sm:$0xff]
    %v3891 = vld [vmem:[#allocation11 + $0x338] sm:$0xff]
    %v3892 = vld [vmem:[#allocation11 + $0x340] sm:$0xff]
    %v3893 = vld [vmem:[#allocation11 + $0x348] sm:$0xff]
    %v3894 = vld [vmem:[#allocation11 + $0x350] sm:$0xff]
    %v3895 = vld [vmem:[#allocation11 + $0x358] sm:$0xff]
    %v3896 = vld [vmem:[#allocation11 + $0x360] sm:$0xff]
    %v3897 = vld [vmem:[#allocation11 + $0x368] sm:$0xff]
    %v3898 = vld [vmem:[#allocation11 + $0x370] sm:$0xff]
    %v3899 = vld [vmem:[#allocation11 + $0x378] sm:$0xff]
    %v3900 = vld [vmem:[#allocation11 + $0x380] sm:$0xff]
    %v3901 = vld [vmem:[#allocation11 + $0x388] sm:$0xff]
    %v3902 = vld [vmem:[#allocation11 + $0x390] sm:$0xff]
    %v3903 = vld [vmem:[#allocation11 + $0x398] sm:$0xff]
    %v3904 = vld [vmem:[#allocation11 + $0x3a0] sm:$0xff]
    %v3905 = vld [vmem:[#allocation11 + $0x3a8] sm:$0xff]
    %v3906 = vld [vmem:[#allocation11 + $0x3b0] sm:$0xff]
    %v3907 = vld [vmem:[#allocation11 + $0x3b8] sm:$0xff]
    %v3908 = vld [vmem:[#allocation11 + $0x3c0] sm:$0xff]
    %v3909 = vld [vmem:[#allocation11 + $0x3c8] sm:$0xff]
    %v3910 = vld [vmem:[#allocation11 + $0x3d0] sm:$0xff]
    %v3911 = vld [vmem:[#allocation11 + $0x3d8] sm:$0xff]
    %v3912 = vld [vmem:[#allocation11 + $0x3e0] sm:$0xff]
    %v3913 = vld [vmem:[#allocation11 + $0x3e8] sm:$0xff]
    %v3914 = vld [vmem:[#allocation11 + $0x3f0] sm:$0xff]
    %v3915 = vld [vmem:[#allocation11 + $0x3f8] sm:$0xff]
    %v3916 = vld [vmem:[%s6] sm:$0x3]
    %v3918 = vlaneseq
    %v3919 = vshrl.u32 %v3918, 7
    %v3920 = vsub.s32 0, %v3919
    %v3921 = vrot.slane %v3916, %v3920
    %v3922 = vlaneseq
    %v3923 = vshrl.u32 %v3922, 7
    %v3924 = vsub.s32 1, %v3923
    %v3925 = vrot.slane %v3916, %v3924
    %v4056 = vunpack.c.l.b16 %v3788
    %v4057 = vunpack.c.h.b16 %v3788
    %v4058 = vunpack.c.l.b16 %v3789
    %v4059 = vunpack.c.h.b16 %v3789
    %v4060 = vunpack.c.l.b16 %v3790
    %v4061 = vunpack.c.h.b16 %v3790
    %v4062 = vunpack.c.l.b16 %v3791
    %v4063 = vunpack.c.h.b16 %v3791
    %v4064 = vunpack.c.l.b16 %v3792
    %v4065 = vunpack.c.h.b16 %v3792
    %v4066 = vunpack.c.l.b16 %v3793
    %v4067 = vunpack.c.h.b16 %v3793
    %v4068 = vunpack.c.l.b16 %v3794
    %v4069 = vunpack.c.h.b16 %v3794
    %v4070 = vunpack.c.l.b16 %v3795
    %v4071 = vunpack.c.h.b16 %v3795
    %v4072 = vunpack.c.l.b16 %v3796
    %v4073 = vunpack.c.h.b16 %v3796
    %v4074 = vunpack.c.l.b16 %v3797
    %v4075 = vunpack.c.h.b16 %v3797
    %v4076 = vunpack.c.l.b16 %v3798
    %v4077 = vunpack.c.h.b16 %v3798
    %v4078 = vunpack.c.l.b16 %v3799
    %v4079 = vunpack.c.h.b16 %v3799
    %v4080 = vunpack.c.l.b16 %v3800
    %v4081 = vunpack.c.h.b16 %v3800
    %v4082 = vunpack.c.l.b16 %v3801
    %v4083 = vunpack.c.h.b16 %v3801
    %v4084 = vunpack.c.l.b16 %v3802
    %v4085 = vunpack.c.h.b16 %v3802
    %v4086 = vunpack.c.l.b16 %v3803
    %v4087 = vunpack.c.h.b16 %v3803
    %v4088 = vunpack.c.l.b16 %v3804
    %v4089 = vunpack.c.h.b16 %v3804
    %v4090 = vunpack.c.l.b16 %v3805
    %v4091 = vunpack.c.h.b16 %v3805
    %v4092 = vunpack.c.l.b16 %v3806
    %v4093 = vunpack.c.h.b16 %v3806
    %v4094 = vunpack.c.l.b16 %v3807
    %v4095 = vunpack.c.h.b16 %v3807
    %v4096 = vunpack.c.l.b16 %v3808
    %v4097 = vunpack.c.h.b16 %v3808
    %v4098 = vunpack.c.l.b16 %v3809
    %v4099 = vunpack.c.h.b16 %v3809
    %v4100 = vunpack.c.l.b16 %v3810
    %v4101 = vunpack.c.h.b16 %v3810
    %v4102 = vunpack.c.l.b16 %v3811
    %v4103 = vunpack.c.h.b16 %v3811
    %v4104 = vunpack.c.l.b16 %v3812
    %v4105 = vunpack.c.h.b16 %v3812
    %v4106 = vunpack.c.l.b16 %v3813
    %v4107 = vunpack.c.h.b16 %v3813
    %v4108 = vunpack.c.l.b16 %v3814
    %v4109 = vunpack.c.h.b16 %v3814
    %v4110 = vunpack.c.l.b16 %v3815
    %v4111 = vunpack.c.h.b16 %v3815
    %v4112 = vunpack.c.l.b16 %v3816
    %v4113 = vunpack.c.h.b16 %v3816
    %v4114 = vunpack.c.l.b16 %v3817
    %v4115 = vunpack.c.h.b16 %v3817
    %v4116 = vunpack.c.l.b16 %v3818
    %v4117 = vunpack.c.h.b16 %v3818
    %v4118 = vunpack.c.l.b16 %v3819
    %v4119 = vunpack.c.h.b16 %v3819
    %v4120 = vunpack.c.l.b16 %v3820
    %v4121 = vunpack.c.h.b16 %v3820
    %v4122 = vunpack.c.l.b16 %v3821
    %v4123 = vunpack.c.h.b16 %v3821
    %v4124 = vunpack.c.l.b16 %v3822
    %v4125 = vunpack.c.h.b16 %v3822
    %v4126 = vunpack.c.l.b16 %v3823
    %v4127 = vunpack.c.h.b16 %v3823
    %v4128 = vunpack.c.l.b16 %v3824
    %v4129 = vunpack.c.h.b16 %v3824
    %v4130 = vunpack.c.l.b16 %v3825
    %v4131 = vunpack.c.h.b16 %v3825
    %v4132 = vunpack.c.l.b16 %v3826
    %v4133 = vunpack.c.h.b16 %v3826
    %v4134 = vunpack.c.l.b16 %v3827
    %v4135 = vunpack.c.h.b16 %v3827
    %v4136 = vunpack.c.l.b16 %v3828
    %v4137 = vunpack.c.h.b16 %v3828
    %v4138 = vunpack.c.l.b16 %v3829
    %v4139 = vunpack.c.h.b16 %v3829
    %v4140 = vunpack.c.l.b16 %v3830
    %v4141 = vunpack.c.h.b16 %v3830
    %v4142 = vunpack.c.l.b16 %v3831
    %v4143 = vunpack.c.h.b16 %v3831
    %v4144 = vunpack.c.l.b16 %v3832
    %v4145 = vunpack.c.h.b16 %v3832
    %v4146 = vunpack.c.l.b16 %v3833
    %v4147 = vunpack.c.h.b16 %v3833
    %v4148 = vunpack.c.l.b16 %v3834
    %v4149 = vunpack.c.h.b16 %v3834
    %v4150 = vunpack.c.l.b16 %v3835
    %v4151 = vunpack.c.h.b16 %v3835
    %v4152 = vunpack.c.l.b16 %v3836
    %v4153 = vunpack.c.h.b16 %v3836
    %v4154 = vunpack.c.l.b16 %v3837
    %v4155 = vunpack.c.h.b16 %v3837
    %v4156 = vunpack.c.l.b16 %v3838
    %v4157 = vunpack.c.h.b16 %v3838
    %v4158 = vunpack.c.l.b16 %v3839
    %v4159 = vunpack.c.h.b16 %v3839
    %v4160 = vunpack.c.l.b16 %v3840
    %v4161 = vunpack.c.h.b16 %v3840
    %v4162 = vunpack.c.l.b16 %v3841
    %v4163 = vunpack.c.h.b16 %v3841
    %v4164 = vunpack.c.l.b16 %v3842
    %v4165 = vunpack.c.h.b16 %v3842
    %v4166 = vunpack.c.l.b16 %v3843
    %v4167 = vunpack.c.h.b16 %v3843
    %v4168 = vunpack.c.l.b16 %v3844
    %v4169 = vunpack.c.h.b16 %v3844
    %v4170 = vunpack.c.l.b16 %v3845
    %v4171 = vunpack.c.h.b16 %v3845
    %v4172 = vunpack.c.l.b16 %v3846
    %v4173 = vunpack.c.h.b16 %v3846
    %v4174 = vunpack.c.l.b16 %v3847
    %v4175 = vunpack.c.h.b16 %v3847
    %v4176 = vunpack.c.l.b16 %v3848
    %v4177 = vunpack.c.h.b16 %v3848
    %v4178 = vunpack.c.l.b16 %v3849
    %v4179 = vunpack.c.h.b16 %v3849
    %v4180 = vunpack.c.l.b16 %v3850
    %v4181 = vunpack.c.h.b16 %v3850
    %v4182 = vunpack.c.l.b16 %v3851
    %v4183 = vunpack.c.h.b16 %v3851
    %v4184 = vunpack.c.l.b16 %v3852
    %v4185 = vunpack.c.h.b16 %v3852
    %v4186 = vunpack.c.l.b16 %v3853
    %v4187 = vunpack.c.h.b16 %v3853
    %v4188 = vunpack.c.l.b16 %v3854
    %v4189 = vunpack.c.h.b16 %v3854
    %v4190 = vunpack.c.l.b16 %v3855
    %v4191 = vunpack.c.h.b16 %v3855
    %v4192 = vunpack.c.l.b16 %v3856
    %v4193 = vunpack.c.h.b16 %v3856
    %v4194 = vunpack.c.l.b16 %v3857
    %v4195 = vunpack.c.h.b16 %v3857
    %v4196 = vunpack.c.l.b16 %v3858
    %v4197 = vunpack.c.h.b16 %v3858
    %v4198 = vunpack.c.l.b16 %v3859
    %v4199 = vunpack.c.h.b16 %v3859
    %v4200 = vunpack.c.l.b16 %v3860
    %v4201 = vunpack.c.h.b16 %v3860
    %v4202 = vunpack.c.l.b16 %v3861
    %v4203 = vunpack.c.h.b16 %v3861
    %v4204 = vunpack.c.l.b16 %v3862
    %v4205 = vunpack.c.h.b16 %v3862
    %v4206 = vunpack.c.l.b16 %v3863
    %v4207 = vunpack.c.h.b16 %v3863
    %v4208 = vunpack.c.l.b16 %v3864
    %v4209 = vunpack.c.h.b16 %v3864
    %v4210 = vunpack.c.l.b16 %v3865
    %v4211 = vunpack.c.h.b16 %v3865
    %v4212 = vunpack.c.l.b16 %v3866
    %v4213 = vunpack.c.h.b16 %v3866
    %v4214 = vunpack.c.l.b16 %v3867
    %v4215 = vunpack.c.h.b16 %v3867
    %v4216 = vunpack.c.l.b16 %v3868
    %v4217 = vunpack.c.h.b16 %v3868
    %v4218 = vunpack.c.l.b16 %v3869
    %v4219 = vunpack.c.h.b16 %v3869
    %v4220 = vunpack.c.l.b16 %v3870
    %v4221 = vunpack.c.h.b16 %v3870
    %v4222 = vunpack.c.l.b16 %v3871
    %v4223 = vunpack.c.h.b16 %v3871
    %v4224 = vunpack.c.l.b16 %v3872
    %v4225 = vunpack.c.h.b16 %v3872
    %v4226 = vunpack.c.l.b16 %v3873
    %v4227 = vunpack.c.h.b16 %v3873
    %v4228 = vunpack.c.l.b16 %v3874
    %v4229 = vunpack.c.h.b16 %v3874
    %v4230 = vunpack.c.l.b16 %v3875
    %v4231 = vunpack.c.h.b16 %v3875
    %v4232 = vunpack.c.l.b16 %v3876
    %v4233 = vunpack.c.h.b16 %v3876
    %v4234 = vunpack.c.l.b16 %v3877
    %v4235 = vunpack.c.h.b16 %v3877
    %v4236 = vunpack.c.l.b16 %v3878
    %v4237 = vunpack.c.h.b16 %v3878
    %v4238 = vunpack.c.l.b16 %v3879
    %v4239 = vunpack.c.h.b16 %v3879
    %v4240 = vunpack.c.l.b16 %v3880
    %v4241 = vunpack.c.h.b16 %v3880
    %v4242 = vunpack.c.l.b16 %v3881
    %v4243 = vunpack.c.h.b16 %v3881
    %v4244 = vunpack.c.l.b16 %v3882
    %v4245 = vunpack.c.h.b16 %v3882
    %v4246 = vunpack.c.l.b16 %v3883
    %v4247 = vunpack.c.h.b16 %v3883
    %v4248 = vunpack.c.l.b16 %v3884
    %v4249 = vunpack.c.h.b16 %v3884
    %v4250 = vunpack.c.l.b16 %v3885
    %v4251 = vunpack.c.h.b16 %v3885
    %v4252 = vunpack.c.l.b16 %v3886
    %v4253 = vunpack.c.h.b16 %v3886
    %v4254 = vunpack.c.l.b16 %v3887
    %v4255 = vunpack.c.h.b16 %v3887
    %v4256 = vunpack.c.l.b16 %v3888
    %v4257 = vunpack.c.h.b16 %v3888
    %v4258 = vunpack.c.l.b16 %v3889
    %v4259 = vunpack.c.h.b16 %v3889
    %v4260 = vunpack.c.l.b16 %v3890
    %v4261 = vunpack.c.h.b16 %v3890
    %v4262 = vunpack.c.l.b16 %v3891
    %v4263 = vunpack.c.h.b16 %v3891
    %v4264 = vunpack.c.l.b16 %v3892
    %v4265 = vunpack.c.h.b16 %v3892
    %v4266 = vunpack.c.l.b16 %v3893
    %v4267 = vunpack.c.h.b16 %v3893
    %v4268 = vunpack.c.l.b16 %v3894
    %v4269 = vunpack.c.h.b16 %v3894
    %v4270 = vunpack.c.l.b16 %v3895
    %v4271 = vunpack.c.h.b16 %v3895
    %v4272 = vunpack.c.l.b16 %v3896
    %v4273 = vunpack.c.h.b16 %v3896
    %v4274 = vunpack.c.l.b16 %v3897
    %v4275 = vunpack.c.h.b16 %v3897
    %v4276 = vunpack.c.l.b16 %v3898
    %v4277 = vunpack.c.h.b16 %v3898
    %v4278 = vunpack.c.l.b16 %v3899
    %v4279 = vunpack.c.h.b16 %v3899
    %v4280 = vunpack.c.l.b16 %v3900
    %v4281 = vunpack.c.h.b16 %v3900
    %v4282 = vunpack.c.l.b16 %v3901
    %v4283 = vunpack.c.h.b16 %v3901
    %v4284 = vunpack.c.l.b16 %v3902
    %v4285 = vunpack.c.h.b16 %v3902
    %v4286 = vunpack.c.l.b16 %v3903
    %v4287 = vunpack.c.h.b16 %v3903
    %v4288 = vunpack.c.l.b16 %v3904
    %v4289 = vunpack.c.h.b16 %v3904
    %v4290 = vunpack.c.l.b16 %v3905
    %v4291 = vunpack.c.h.b16 %v3905
    %v4292 = vunpack.c.l.b16 %v3906
    %v4293 = vunpack.c.h.b16 %v3906
    %v4294 = vunpack.c.l.b16 %v3907
    %v4295 = vunpack.c.h.b16 %v3907
    %v4296 = vunpack.c.l.b16 %v3908
    %v4297 = vunpack.c.h.b16 %v3908
    %v4298 = vunpack.c.l.b16 %v3909
    %v4299 = vunpack.c.h.b16 %v3909
    %v4300 = vunpack.c.l.b16 %v3910
    %v4301 = vunpack.c.h.b16 %v3910
    %v4302 = vunpack.c.l.b16 %v3911
    %v4303 = vunpack.c.h.b16 %v3911
    %v4304 = vunpack.c.l.b16 %v3912
    %v4305 = vunpack.c.h.b16 %v3912
    %v4306 = vunpack.c.l.b16 %v3913
    %v4307 = vunpack.c.h.b16 %v3913
    %v4308 = vunpack.c.l.b16 %v3914
    %v4309 = vunpack.c.h.b16 %v3914
    %v4310 = vunpack.c.l.b16 %v3915
    %v4311 = vunpack.c.h.b16 %v3915
    %v4312 = vpack.c.b16 %v4058, %v4056
    %v4313 = vpack.c.b16 %v4059, %v4057
    %v4314 = vpack.c.b16 %v4062, %v4060
    %v4315 = vpack.c.b16 %v4063, %v4061
    %v4316 = vpack.c.b16 %v4066, %v4064
    %v4317 = vpack.c.b16 %v4067, %v4065
    %v4318 = vpack.c.b16 %v4070, %v4068
    %v4319 = vpack.c.b16 %v4071, %v4069
    %v4320 = vpack.c.b16 %v4074, %v4072
    %v4321 = vpack.c.b16 %v4075, %v4073
    %v4322 = vpack.c.b16 %v4078, %v4076
    %v4323 = vpack.c.b16 %v4079, %v4077
    %v4324 = vpack.c.b16 %v4082, %v4080
    %v4325 = vpack.c.b16 %v4083, %v4081
    %v4326 = vpack.c.b16 %v4086, %v4084
    %v4327 = vpack.c.b16 %v4087, %v4085
    %v4328 = vpack.c.b16 %v4090, %v4088
    %v4329 = vpack.c.b16 %v4091, %v4089
    %v4330 = vpack.c.b16 %v4094, %v4092
    %v4331 = vpack.c.b16 %v4095, %v4093
    %v4332 = vpack.c.b16 %v4098, %v4096
    %v4333 = vpack.c.b16 %v4099, %v4097
    %v4334 = vpack.c.b16 %v4102, %v4100
    %v4335 = vpack.c.b16 %v4103, %v4101
    %v4336 = vpack.c.b16 %v4106, %v4104
    %v4337 = vpack.c.b16 %v4107, %v4105
    %v4338 = vpack.c.b16 %v4110, %v4108
    %v4339 = vpack.c.b16 %v4111, %v4109
    %v4340 = vpack.c.b16 %v4114, %v4112
    %v4341 = vpack.c.b16 %v4115, %v4113
    %v4342 = vpack.c.b16 %v4118, %v4116
    %v4343 = vpack.c.b16 %v4119, %v4117
    %v4344 = vpack.c.b16 %v4122, %v4120
    %v4345 = vpack.c.b16 %v4123, %v4121
    %v4346 = vpack.c.b16 %v4126, %v4124
    %v4347 = vpack.c.b16 %v4127, %v4125
    %v4348 = vpack.c.b16 %v4130, %v4128
    %v4349 = vpack.c.b16 %v4131, %v4129
    %v4350 = vpack.c.b16 %v4134, %v4132
    %v4351 = vpack.c.b16 %v4135, %v4133
    %v4352 = vpack.c.b16 %v4138, %v4136
    %v4353 = vpack.c.b16 %v4139, %v4137
    %v4354 = vpack.c.b16 %v4142, %v4140
    %v4355 = vpack.c.b16 %v4143, %v4141
    %v4356 = vpack.c.b16 %v4146, %v4144
    %v4357 = vpack.c.b16 %v4147, %v4145
    %v4358 = vpack.c.b16 %v4150, %v4148
    %v4359 = vpack.c.b16 %v4151, %v4149
    %v4360 = vpack.c.b16 %v4154, %v4152
    %v4361 = vpack.c.b16 %v4155, %v4153
    %v4362 = vpack.c.b16 %v4158, %v4156
    %v4363 = vpack.c.b16 %v4159, %v4157
    %v4364 = vpack.c.b16 %v4162, %v4160
    %v4365 = vpack.c.b16 %v4163, %v4161
    %v4366 = vpack.c.b16 %v4166, %v4164
    %v4367 = vpack.c.b16 %v4167, %v4165
    %v4368 = vpack.c.b16 %v4170, %v4168
    %v4369 = vpack.c.b16 %v4171, %v4169
    %v4370 = vpack.c.b16 %v4174, %v4172
    %v4371 = vpack.c.b16 %v4175, %v4173
    %v4372 = vpack.c.b16 %v4178, %v4176
    %v4373 = vpack.c.b16 %v4179, %v4177
    %v4374 = vpack.c.b16 %v4182, %v4180
    %v4375 = vpack.c.b16 %v4183, %v4181
    %v4376 = vpack.c.b16 %v4186, %v4184
    %v4377 = vpack.c.b16 %v4187, %v4185
    %v4378 = vpack.c.b16 %v4190, %v4188
    %v4379 = vpack.c.b16 %v4191, %v4189
    %v4380 = vpack.c.b16 %v4194, %v4192
    %v4381 = vpack.c.b16 %v4195, %v4193
    %v4382 = vpack.c.b16 %v4198, %v4196
    %v4383 = vpack.c.b16 %v4199, %v4197
    %v4384 = vpack.c.b16 %v4202, %v4200
    %v4385 = vpack.c.b16 %v4203, %v4201
    %v4386 = vpack.c.b16 %v4206, %v4204
    %v4387 = vpack.c.b16 %v4207, %v4205
    %v4388 = vpack.c.b16 %v4210, %v4208
    %v4389 = vpack.c.b16 %v4211, %v4209
    %v4390 = vpack.c.b16 %v4214, %v4212
    %v4391 = vpack.c.b16 %v4215, %v4213
    %v4392 = vpack.c.b16 %v4218, %v4216
    %v4393 = vpack.c.b16 %v4219, %v4217
    %v4394 = vpack.c.b16 %v4222, %v4220
    %v4395 = vpack.c.b16 %v4223, %v4221
    %v4396 = vpack.c.b16 %v4226, %v4224
    %v4397 = vpack.c.b16 %v4227, %v4225
    %v4398 = vpack.c.b16 %v4230, %v4228
    %v4399 = vpack.c.b16 %v4231, %v4229
    %v4400 = vpack.c.b16 %v4234, %v4232
    %v4401 = vpack.c.b16 %v4235, %v4233
    %v4402 = vpack.c.b16 %v4238, %v4236
    %v4403 = vpack.c.b16 %v4239, %v4237
    %v4404 = vpack.c.b16 %v4242, %v4240
    %v4405 = vpack.c.b16 %v4243, %v4241
    %v4406 = vpack.c.b16 %v4246, %v4244
    %v4407 = vpack.c.b16 %v4247, %v4245
    %v4408 = vpack.c.b16 %v4250, %v4248
    %v4409 = vpack.c.b16 %v4251, %v4249
    %v4410 = vpack.c.b16 %v4254, %v4252
    %v4411 = vpack.c.b16 %v4255, %v4253
    %v4412 = vpack.c.b16 %v4258, %v4256
    %v4413 = vpack.c.b16 %v4259, %v4257
    %v4414 = vpack.c.b16 %v4262, %v4260
    %v4415 = vpack.c.b16 %v4263, %v4261
    %v4416 = vpack.c.b16 %v4266, %v4264
    %v4417 = vpack.c.b16 %v4267, %v4265
    %v4418 = vpack.c.b16 %v4270, %v4268
    %v4419 = vpack.c.b16 %v4271, %v4269
    %v4420 = vpack.c.b16 %v4274, %v4272
    %v4421 = vpack.c.b16 %v4275, %v4273
    %v4422 = vpack.c.b16 %v4278, %v4276
    %v4423 = vpack.c.b16 %v4279, %v4277
    %v4424 = vpack.c.b16 %v4282, %v4280
    %v4425 = vpack.c.b16 %v4283, %v4281
    %v4426 = vpack.c.b16 %v4286, %v4284
    %v4427 = vpack.c.b16 %v4287, %v4285
    %v4428 = vpack.c.b16 %v4290, %v4288
    %v4429 = vpack.c.b16 %v4291, %v4289
    %v4430 = vpack.c.b16 %v4294, %v4292
    %v4431 = vpack.c.b16 %v4295, %v4293
    %v4432 = vpack.c.b16 %v4298, %v4296
    %v4433 = vpack.c.b16 %v4299, %v4297
    %v4434 = vpack.c.b16 %v4302, %v4300
    %v4435 = vpack.c.b16 %v4303, %v4301
    %v4436 = vpack.c.b16 %v4306, %v4304
    %v4437 = vpack.c.b16 %v4307, %v4305
    %v4438 = vpack.c.b16 %v4310, %v4308
    %v4439 = vpack.c.b16 %v4311, %v4309
    %4568 = vmatprep.subr.bf16.mxu0 %v4327
    %4569 = vmatpush1.bf16.msra.mxu0 %v4326
    %4570 = vmatprep.subr.bf16.mxu0 %v4325
    %4571 = vmatpush1.bf16.msra.mxu0 %v4324
    %4572 = vmatprep.subr.bf16.mxu0 %v4323
    %4573 = vmatpush1.bf16.msra.mxu0 %v4322
    %4574 = vmatprep.subr.bf16.mxu0 %v4321
    %4575 = vmatpush1.bf16.msra.mxu0 %v4320
    %4576 = vmatprep.subr.bf16.mxu0 %v4319
    %4577 = vmatpush1.bf16.msra.mxu0 %v4318
    %4578 = vmatprep.subr.bf16.mxu0 %v4317
    %4579 = vmatpush1.bf16.msra.mxu0 %v4316
    %4580 = vmatprep.subr.bf16.mxu0 %v4315
    %4581 = vmatpush1.bf16.msra.mxu0 %v4314
    %4582 = vmatprep.subr.bf16.mxu0 %v4313
    %4583 = vmatpush1.bf16.msra.mxu0 %v4312
    %4584 = vmatprep.subr.bf16.mxu0 %v4343
    %4585 = vmatpush2.bf16.msra.mxu0 %v4342
    %4586 = vmatprep.subr.bf16.mxu0 %v4341
    %4587 = vmatpush2.bf16.msra.mxu0 %v4340
    %4588 = vmatprep.subr.bf16.mxu0 %v4339
    %4589 = vmatpush2.bf16.msra.mxu0 %v4338
    %4590 = vmatprep.subr.bf16.mxu0 %v4337
    %4591 = vmatpush2.bf16.msra.mxu0 %v4336
    %4592 = vmatprep.subr.bf16.mxu0 %v4335
    %4593 = vmatpush2.bf16.msra.mxu0 %v4334
    %4594 = vmatprep.subr.bf16.mxu0 %v4333
    %4595 = vmatpush2.bf16.msra.mxu0 %v4332
    %4596 = vmatprep.subr.bf16.mxu0 %v4331
    %4597 = vmatpush2.bf16.msra.mxu0 %v4330
    %4598 = vmatprep.subr.bf16.mxu0 %v4329
    %4599 = vmatpush2.bf16.msra.mxu0 %v4328
    %4600 = vmatprep.mubr.bf16.mxu0 %v3781
    %4601 = vmatmul.mubr.bf16.gmra.mxu0 %v3780
    %v4602 = vpop.f32.mrf.mxu0
    %v4603 = vadd.f32 %v3921, %v4602
    %v4604 = vpop.f32.mrf.mxu0
    %v4605 = vadd.f32 %v3925, %v4604
    %v4606 = vpop.f32.mrf.mxu0
    %v4607 = vpop.f32.mrf.mxu0
    %4608 = vdwg.mxu0
    %4609 = vmatprep.subr.bf16.mxu0 %v4359
    %4610 = vmatpush1.bf16.msra.mxu0 %v4358
    %4611 = vmatprep.subr.bf16.mxu0 %v4357
    %4612 = vmatpush1.bf16.msra.mxu0 %v4356
    %4613 = vmatprep.subr.bf16.mxu0 %v4355
    %4614 = vmatpush1.bf16.msra.mxu0 %v4354
    %4615 = vmatprep.subr.bf16.mxu0 %v4353
    %4616 = vmatpush1.bf16.msra.mxu0 %v4352
    %4617 = vmatprep.subr.bf16.mxu0 %v4351
    %4618 = vmatpush1.bf16.msra.mxu0 %v4350
    %4619 = vmatprep.subr.bf16.mxu0 %v4349
    %4620 = vmatpush1.bf16.msra.mxu0 %v4348
    %4621 = vmatprep.subr.bf16.mxu0 %v4347
    %4622 = vmatpush1.bf16.msra.mxu0 %v4346
    %4623 = vmatprep.subr.bf16.mxu0 %v4345
    %4624 = vmatpush1.bf16.msra.mxu0 %v4344
    %4625 = vmatprep.subr.bf16.mxu0 %v4375
    %4626 = vmatpush2.bf16.msra.mxu0 %v4374
    %4627 = vmatprep.subr.bf16.mxu0 %v4373
    %4628 = vmatpush2.bf16.msra.mxu0 %v4372
    %4629 = vmatprep.subr.bf16.mxu0 %v4371
    %4630 = vmatpush2.bf16.msra.mxu0 %v4370
    %4631 = vmatprep.subr.bf16.mxu0 %v4369
    %4632 = vmatpush2.bf16.msra.mxu0 %v4368
    %4633 = vmatprep.subr.bf16.mxu0 %v4367
    %4634 = vmatpush2.bf16.msra.mxu0 %v4366
    %4635 = vmatprep.subr.bf16.mxu0 %v4365
    %4636 = vmatpush2.bf16.msra.mxu0 %v4364
    %4637 = vmatprep.subr.bf16.mxu0 %v4363
    %4638 = vmatpush2.bf16.msra.mxu0 %v4362
    %4639 = vmatprep.subr.bf16.mxu0 %v4361
    %4640 = vmatpush2.bf16.msra.mxu0 %v4360
    %4641 = vmatprep.mubr.bf16.mxu0 %v3783
    %4642 = vmatmul.mubr.bf16.gmra.mxu0 %v3782
    %v4643 = vpop.f32.mrf.mxu0
    %v4644 = vadd.f32 %v4603, %v4643
    %v4645 = vpop.f32.mrf.mxu0
    %v4646 = vadd.f32 %v4605, %v4645
    %v4647 = vpop.f32.mrf.mxu0
    %v4648 = vpop.f32.mrf.mxu0
    %4649 = vdwg.mxu0
    %4650 = vmatprep.subr.bf16.mxu0 %v4391
    %4651 = vmatpush1.bf16.msra.mxu0 %v4390
    %4652 = vmatprep.subr.bf16.mxu0 %v4389
    %4653 = vmatpush1.bf16.msra.mxu0 %v4388
    %4654 = vmatprep.subr.bf16.mxu0 %v4387
    %4655 = vmatpush1.bf16.msra.mxu0 %v4386
    %4656 = vmatprep.subr.bf16.mxu0 %v4385
    %4657 = vmatpush1.bf16.msra.mxu0 %v4384
    %4658 = vmatprep.subr.bf16.mxu0 %v4383
    %4659 = vmatpush1.bf16.msra.mxu0 %v4382
    %4660 = vmatprep.subr.bf16.mxu0 %v4381
    %4661 = vmatpush1.bf16.msra.mxu0 %v4380
    %4662 = vmatprep.subr.bf16.mxu0 %v4379
    %4663 = vmatpush1.bf16.msra.mxu0 %v4378
    %4664 = vmatprep.subr.bf16.mxu0 %v4377
    %4665 = vmatpush1.bf16.msra.mxu0 %v4376
    %4666 = vmatprep.subr.bf16.mxu0 %v4407
    %4667 = vmatpush2.bf16.msra.mxu0 %v4406
    %4668 = vmatprep.subr.bf16.mxu0 %v4405
    %4669 = vmatpush2.bf16.msra.mxu0 %v4404
    %4670 = vmatprep.subr.bf16.mxu0 %v4403
    %4671 = vmatpush2.bf16.msra.mxu0 %v4402
    %4672 = vmatprep.subr.bf16.mxu0 %v4401
    %4673 = vmatpush2.bf16.msra.mxu0 %v4400
    %4674 = vmatprep.subr.bf16.mxu0 %v4399
    %4675 = vmatpush2.bf16.msra.mxu0 %v4398
    %4676 = vmatprep.subr.bf16.mxu0 %v4397
    %4677 = vmatpush2.bf16.msra.mxu0 %v4396
    %4678 = vmatprep.subr.bf16.mxu0 %v4395
    %4679 = vmatpush2.bf16.msra.mxu0 %v4394
    %4680 = vmatprep.subr.bf16.mxu0 %v4393
    %4681 = vmatpush2.bf16.msra.mxu0 %v4392
    %4682 = vmatprep.mubr.bf16.mxu0 %v3785
    %4683 = vmatmul.mubr.bf16.gmra.mxu0 %v3784
    %v4684 = vpop.f32.mrf.mxu0
    %v4685 = vadd.f32 %v4644, %v4684
    %v4686 = vpop.f32.mrf.mxu0
    %v4687 = vadd.f32 %v4646, %v4686
    %v4688 = vpop.f32.mrf.mxu0
    %v4689 = vpop.f32.mrf.mxu0
    %4690 = vdwg.mxu0
    %4691 = vmatprep.subr.bf16.mxu0 %v4423
    %4692 = vmatpush1.bf16.msra.mxu0 %v4422
    %4693 = vmatprep.subr.bf16.mxu0 %v4421
    %4694 = vmatpush1.bf16.msra.mxu0 %v4420
    %4695 = vmatprep.subr.bf16.mxu0 %v4419
    %4696 = vmatpush1.bf16.msra.mxu0 %v4418
    %4697 = vmatprep.subr.bf16.mxu0 %v4417
    %4698 = vmatpush1.bf16.msra.mxu0 %v4416
    %4699 = vmatprep.subr.bf16.mxu0 %v4415
    %4700 = vmatpush1.bf16.msra.mxu0 %v4414
    %4701 = vmatprep.subr.bf16.mxu0 %v4413
    %4702 = vmatpush1.bf16.msra.mxu0 %v4412
    %4703 = vmatprep.subr.bf16.mxu0 %v4411
    %4704 = vmatpush1.bf16.msra.mxu0 %v4410
    %4705 = vmatprep.subr.bf16.mxu0 %v4409
    %4706 = vmatpush1.bf16.msra.mxu0 %v4408
    %4707 = vmatprep.subr.bf16.mxu0 %v4439
    %4708 = vmatpush2.bf16.msra.mxu0 %v4438
    %4709 = vmatprep.subr.bf16.mxu0 %v4437
    %4710 = vmatpush2.bf16.msra.mxu0 %v4436
    %4711 = vmatprep.subr.bf16.mxu0 %v4435
    %4712 = vmatpush2.bf16.msra.mxu0 %v4434
    %4713 = vmatprep.subr.bf16.mxu0 %v4433
    %4714 = vmatpush2.bf16.msra.mxu0 %v4432
    %4715 = vmatprep.subr.bf16.mxu0 %v4431
    %4716 = vmatpush2.bf16.msra.mxu0 %v4430
    %4717 = vmatprep.subr.bf16.mxu0 %v4429
    %4718 = vmatpush2.bf16.msra.mxu0 %v4428
    %4719 = vmatprep.subr.bf16.mxu0 %v4427
    %4720 = vmatpush2.bf16.msra.mxu0 %v4426
    %4721 = vmatprep.subr.bf16.mxu0 %v4425
    %4722 = vmatpush2.bf16.msra.mxu0 %v4424
    %4723 = vmatprep.mubr.bf16.mxu0 %v3787
    %4724 = vmatmul.mubr.bf16.gmra.mxu0 %v3786
    %v4725 = vpop.f32.mrf.mxu0
    %v4726 = vadd.f32 %v4685, %v4725
    %v4727 = vpop.f32.mrf.mxu0
    %v4728 = vadd.f32 %v4687, %v4727
    %v4729 = vpop.f32.mrf.mxu0
    %v4730 = vpop.f32.mrf.mxu0
    %4731 = vdwg.mxu0
    %vm4732 = vcmp.ge.f32.partialorder %v4726, 0.0
    %vm4733 = vcmp.ge.f32.partialorder %v4728, 0.0
    %v4734 = vmul.f32 %v4726, 0.01
    %v4735 = vmul.f32 %v4728, 0.01
    %v4736 = vsel %vm4732, %v4726, %v4734
    %v4737 = vsel %vm4733, %v4728, %v4735
    %v4738 = vpack.c.bf16 %v4736, %v4736
    %v4739 = vpack.c.bf16 %v4737, %v4737
    %v4740 = vld [vmem:[#allocation13] sm:$0xf]
    %v4741 = vld [vmem:[#allocation13 + $0x4] sm:$0xf]
    %v4742 = vld [vmem:[#allocation13 + $0x8] sm:$0xf]
    %v4743 = vld [vmem:[#allocation13 + $0xc] sm:$0xf]
    %v4744 = vld [vmem:[#allocation13 + $0x10] sm:$0xf]
    %v4745 = vld [vmem:[#allocation13 + $0x14] sm:$0xf]
    %v4746 = vld [vmem:[#allocation13 + $0x18] sm:$0xf]
    %v4747 = vld [vmem:[#allocation13 + $0x1c] sm:$0xf]
    %v4748 = vld [vmem:[#allocation13 + $0x20] sm:$0xf]
    %v4749 = vld [vmem:[#allocation13 + $0x24] sm:$0xf]
    %v4750 = vld [vmem:[#allocation13 + $0x28] sm:$0xf]
    %v4751 = vld [vmem:[#allocation13 + $0x2c] sm:$0xf]
    %v4752 = vld [vmem:[#allocation13 + $0x30] sm:$0xf]
    %v4753 = vld [vmem:[#allocation13 + $0x34] sm:$0xf]
    %v4754 = vld [vmem:[#allocation13 + $0x38] sm:$0xf]
    %v4755 = vld [vmem:[#allocation13 + $0x3c] sm:$0xf]
    %v4756 = vld [vmem:[#allocation13 + $0x40] sm:$0xf]
    %v4757 = vld [vmem:[#allocation13 + $0x44] sm:$0xf]
    %v4758 = vld [vmem:[#allocation13 + $0x48] sm:$0xf]
    %v4759 = vld [vmem:[#allocation13 + $0x4c] sm:$0xf]
    %v4760 = vld [vmem:[#allocation13 + $0x50] sm:$0xf]
    %v4761 = vld [vmem:[#allocation13 + $0x54] sm:$0xf]
    %v4762 = vld [vmem:[#allocation13 + $0x58] sm:$0xf]
    %v4763 = vld [vmem:[#allocation13 + $0x5c] sm:$0xf]
    %v4764 = vld [vmem:[#allocation13 + $0x60] sm:$0xf]
    %v4765 = vld [vmem:[#allocation13 + $0x64] sm:$0xf]
    %v4766 = vld [vmem:[#allocation13 + $0x68] sm:$0xf]
    %v4767 = vld [vmem:[#allocation13 + $0x6c] sm:$0xf]
    %v4768 = vld [vmem:[#allocation13 + $0x70] sm:$0xf]
    %v4769 = vld [vmem:[#allocation13 + $0x74] sm:$0xf]
    %v4770 = vld [vmem:[#allocation13 + $0x78] sm:$0xf]
    %v4771 = vld [vmem:[#allocation13 + $0x7c] sm:$0xf]
    %v4772 = vld [vmem:[%s8] sm:$0x1]
    %v4774 = vlaneseq
    %v4775 = vshrl.u32 %v4774, 7
    %v4776 = vsub.s32 0, %v4775
    %v4777 = vrot.slane %v4772, %v4776
    %v4811 = vunpack.c.l.b16 %v4740
    %v4812 = vunpack.c.l.b16 %v4741
    %v4813 = vunpack.c.l.b16 %v4742
    %v4814 = vunpack.c.l.b16 %v4743
    %v4815 = vunpack.c.l.b16 %v4744
    %v4816 = vunpack.c.l.b16 %v4745
    %v4817 = vunpack.c.l.b16 %v4746
    %v4818 = vunpack.c.l.b16 %v4747
    %v4819 = vunpack.c.l.b16 %v4748
    %v4820 = vunpack.c.l.b16 %v4749
    %v4821 = vunpack.c.l.b16 %v4750
    %v4822 = vunpack.c.l.b16 %v4751
    %v4823 = vunpack.c.l.b16 %v4752
    %v4824 = vunpack.c.l.b16 %v4753
    %v4825 = vunpack.c.l.b16 %v4754
    %v4826 = vunpack.c.l.b16 %v4755
    %v4827 = vunpack.c.l.b16 %v4756
    %v4828 = vunpack.c.l.b16 %v4757
    %v4829 = vunpack.c.l.b16 %v4758
    %v4830 = vunpack.c.l.b16 %v4759
    %v4831 = vunpack.c.l.b16 %v4760
    %v4832 = vunpack.c.l.b16 %v4761
    %v4833 = vunpack.c.l.b16 %v4762
    %v4834 = vunpack.c.l.b16 %v4763
    %v4835 = vunpack.c.l.b16 %v4764
    %v4836 = vunpack.c.l.b16 %v4765
    %v4837 = vunpack.c.l.b16 %v4766
    %v4838 = vunpack.c.l.b16 %v4767
    %v4839 = vunpack.c.l.b16 %v4768
    %v4840 = vunpack.c.l.b16 %v4769
    %v4841 = vunpack.c.l.b16 %v4770
    %v4842 = vunpack.c.l.b16 %v4771
    %v4843 = vpack.c.b16 %v4812, %v4811
    %v4844 = vpack.c.b16 %v4814, %v4813
    %v4845 = vpack.c.b16 %v4816, %v4815
    %v4846 = vpack.c.b16 %v4818, %v4817
    %v4847 = vpack.c.b16 %v4820, %v4819
    %v4848 = vpack.c.b16 %v4822, %v4821
    %v4849 = vpack.c.b16 %v4824, %v4823
    %v4850 = vpack.c.b16 %v4826, %v4825
    %v4851 = vpack.c.b16 %v4828, %v4827
    %v4852 = vpack.c.b16 %v4830, %v4829
    %v4853 = vpack.c.b16 %v4832, %v4831
    %v4854 = vpack.c.b16 %v4834, %v4833
    %v4855 = vpack.c.b16 %v4836, %v4835
    %v4856 = vpack.c.b16 %v4838, %v4837
    %v4857 = vpack.c.b16 %v4840, %v4839
    %v4858 = vpack.c.b16 %v4842, %v4841
    %4875 = vmatprep.subr.bf16.mxu0 0
    %4876 = vmatpush1.bf16.msra.mxu0 %v4850
    %4877 = vmatprep.subr.bf16.mxu0 0
    %4878 = vmatpush1.bf16.msra.mxu0 %v4849
    %4879 = vmatprep.subr.bf16.mxu0 0
    %4880 = vmatpush1.bf16.msra.mxu0 %v4848
    %4881 = vmatprep.subr.bf16.mxu0 0
    %4882 = vmatpush1.bf16.msra.mxu0 %v4847
    %4883 = vmatprep.subr.bf16.mxu0 0
    %4884 = vmatpush1.bf16.msra.mxu0 %v4846
    %4885 = vmatprep.subr.bf16.mxu0 0
    %4886 = vmatpush1.bf16.msra.mxu0 %v4845
    %4887 = vmatprep.subr.bf16.mxu0 0
    %4888 = vmatpush1.bf16.msra.mxu0 %v4844
    %4889 = vmatprep.subr.bf16.mxu0 0
    %4890 = vmatpush1.bf16.msra.mxu0 %v4843
    %4891 = vmatprep.subr.bf16.mxu0 0
    %4892 = vmatpush2.bf16.msra.mxu0 %v4858
    %4893 = vmatprep.subr.bf16.mxu0 0
    %4894 = vmatpush2.bf16.msra.mxu0 %v4857
    %4895 = vmatprep.subr.bf16.mxu0 0
    %4896 = vmatpush2.bf16.msra.mxu0 %v4856
    %4897 = vmatprep.subr.bf16.mxu0 0
    %4898 = vmatpush2.bf16.msra.mxu0 %v4855
    %4899 = vmatprep.subr.bf16.mxu0 0
    %4900 = vmatpush2.bf16.msra.mxu0 %v4854
    %4901 = vmatprep.subr.bf16.mxu0 0
    %4902 = vmatpush2.bf16.msra.mxu0 %v4853
    %4903 = vmatprep.subr.bf16.mxu0 0
    %4904 = vmatpush2.bf16.msra.mxu0 %v4852
    %4905 = vmatprep.subr.bf16.mxu0 0
    %4906 = vmatpush2.bf16.msra.mxu0 %v4851
    %4907 = vmatprep.mubr.bf16.mxu0 %v4739
    %4908 = vmatmul.mubr.bf16.gmra.mxu0 %v4738
    %v4909 = vpop.f32.mrf.mxu0
    %v4910 = vadd.f32 %v4777, %v4909
    %v4911 = vpop.f32.mrf.mxu0
    %v4912 = vpop.f32.mrf.mxu0
    %v4913 = vpop.f32.mrf.mxu0
    %4914 = vdwg.mxu0
    %vm4915 = vcmp.ge.f32.partialorder %v4910, 0.0
    %v4916 = vmul.f32 %v4910, 0.01
    %v4917 = vsel %vm4915, %v4910, %v4916
    %v4918 = vld [vmem:[%s9] sm:$0x1]
    %v4920 = vlaneseq
    %v4921 = vshrl.u32 %v4920, 7
    %v4922 = vsub.s32 0, %v4921
    %v4923 = vrot.slane %v4918, %v4922
    %v4925 = vmul.f32 %v4917, %v4923
    %4926 = vst [vmem:[#allocation14] sm:$0xff] %v4925
    // Predicated region
    $region70: #{tpu_custom_call.1} parent=1 // pred_check
      _
    $region71: #{tpu_custom_call.1} parent=1 // pred_check_branch
      %4928 = sbr.rel (0) target = $region73
    $region72: #{tpu_custom_call.1} parent=1 // pred_region
      %s4930 = ssub.s32 128, 128
      %4931 = vsyncadd [#allocation4], %s4930
      %s4933 = sshll.u32 [#allocation14], 4
      %s4934 = int_to_ptr.vmem [resolvable:$true] %s4933
      %4936 = dma.vmem_to_hbm [thread:$0]  %s4934, 128, %s10, [#allocation4]
    $region73: #{tpu_custom_call.1} parent=1 // pred_fallthru
      _
    // Predicated region
    $region74: #{tpu_custom_call.1} parent=1 // pred_check
      _
    $region75: #{tpu_custom_call.1} parent=1 // pred_check_branch
      %4938 = sbr.rel (0) target = $region77
    $region76: #{tpu_custom_call.1} parent=1 // pred_region
      %4939 = dma.done [#allocation4], 128
    $region77: #{tpu_custom_call.1} parent=1 // pred_fallthru
      _
    %4940 = vsyncpa [#allocation3], 1
    %4941 = vsyncpa [#allocation6], 1
    %4942 = vsyncpa [#allocation9], 1
    %4943 = vsyncpa [#allocation12], 1
    %4944 = vsyncpa [#allocation4], 1

</llo_original>
